<compile_context>
chip_gen: v5e
topology: v5e:2x2
jax: 0.10.0
libtpu: 0.0.40
codegen_flags: <defaults>
</compile_context>

<pallas_src>
import numpy as np
import jax
import jax.numpy as jnp
from jax import lax
from jax.experimental import pallas as pl
from jax.experimental.pallas import tpu as pltpu

_BN_EPS = 1e-5


def _bn_relu(acc, gamma, beta, n_rows):
    """Training-mode BatchNorm (batch stats, biased variance) + ReLU, one pass.

    Single-pass variance (E[x^2]-E[x]^2) is fine at the tested scale; switch to
    a two-pass form if weight/input scales ever grow (mean >> std).
    """
    inv_n = 1.0 / float(n_rows)
    s = jnp.sum(acc, axis=0, keepdims=True)
    ss = jnp.sum(acc * acc, axis=0, keepdims=True)
    mean = s * inv_n
    var = ss * inv_n - mean * mean
    scale = gamma * lax.rsqrt(var + _BN_EPS)
    return jnp.maximum((acc - mean) * scale + beta, 0.0)


def fused_cnn_kernel(p1_ref, w1_ref, w2_ref, fw1_ref, fw2_ref, pvec_ref,
                     o_ref, pad2_ref):
    """Whole forward pass in one kernel.

    p1_ref  : (N*H*W, 9*Cin) bf16  pre-built im2col patches for conv1
    w1_ref  : (9*Cin, C1)    bf16  conv1 weights (im2col layout)
    w2_ref  : (9, C1, C2)    bf16  conv2 weights, one slab per (dy, dx)
    fw1_ref : (C2, FC1)      bf16  fc1 weights
    fw2_ref : (FC1, NC)      bf16  fc2 weights
    pvec_ref: (6, 64)        f32   packed [g1, be1, g2, be2, fb1, fb2]
    o_ref   : (N, NC)        f32   logits
    pad2_ref: VMEM scratch (N, Ho+2, Wo+2, C1) — padded pooled activations.
    """
    N, Hp2, Wp2, C1 = pad2_ref.shape
    Ho, Wo = Hp2 - 2, Wp2 - 2
    H, W = 2 * Ho, 2 * Wo
    C2 = w2_ref.shape[-1]
    FC1 = fw1_ref.shape[-1]
    NC = fw2_ref.shape[-1]

    # ---- unpack the small per-channel parameters (one DMA'd buffer) ----
    pv = pvec_ref[...]
    g1, be1 = pv[0:1, :C1], pv[1:2, :C1]
    g2, be2 = pv[2:3, :C2], pv[3:4, :C2]
    fb1, fb2 = pv[4:5, :FC1], pv[5:6, :NC]

    # ---- conv1: ONE im2col matmul, bf16 operands / f32 accumulation ----
    acc1 = jnp.dot(p1_ref[...], w1_ref[...],
                   preferred_element_type=jnp.float32)          # (N*H*W, C1)
    # conv1 bias omitted: cancelled exactly by the BN mean subtraction below.
    y1 = _bn_relu(acc1, g1, be1, N * H * W)

    # ---- AvgPool2d(2,2), fully vectorized ----
    y4 = y1.reshape(N, Ho, 2, W, C1)
    a = y4[:, :, 0] + y4[:, :, 1]                               # (N, Ho, W, C1)
    a = a.reshape(N, Ho, Wo, 2, C1)
    b = 0.25 * (a[:, :, :, 0] + a[:, :, :, 1])                  # (N, Ho, Wo, C1)

    # ---- zero-pad pooled activations into VMEM scratch (borders only) ----
    zrow = jnp.zeros((N, 1, Wo + 2, C1), jnp.float32)
    zcol = jnp.zeros((N, Ho, 1, C1), jnp.float32)
    pad2_ref[:, 0:1, :, :] = zrow
    pad2_ref[:, Ho + 1:Ho + 2, :, :] = zrow
    pad2_ref[:, 1:Ho + 1, 0:1, :] = zcol
    pad2_ref[:, 1:Ho + 1, Wo + 1:Wo + 2, :] = zcol
    pad2_ref[:, 1:Ho + 1, 1:Wo + 1, :] = b                      # one wide store

    # ---- conv2: 9 accumulating matmuls, no lane-offset concat ----
    xp2 = pad2_ref[...]
    w2all = w2_ref[...]                                         # (9, C1, C2)
    acc2 = jnp.zeros((N * Ho * Wo, C2), jnp.float32)
    k = 0
    for dy in range(3):                                         # static unroll
        for dx in range(3):
            patch = xp2[:, dy:dy + Ho, dx:dx + Wo, :].reshape(
                N * Ho * Wo, C1).astype(jnp.bfloat16)
            acc2 = acc2 + jnp.dot(patch, w2all[k],
                                  preferred_element_type=jnp.float32)
            k += 1
    # conv2 bias omitted: cancelled by training-mode BN.
    y2 = _bn_relu(acc2, g2, be2, N * Ho * Wo)

    # ---- AdaptiveMaxPool2d((1,1)) -> (N, C2) ----
    feat = jnp.max(y2.reshape(N, Ho * Wo, C2), axis=1)

    # ---- MLP head: fc1 + ReLU + fc2 (bf16 operands / f32 acc) ----
    h = jnp.dot(feat.astype(jnp.bfloat16), fw1_ref[...],
                preferred_element_type=jnp.float32) + fb1
    h = jnp.maximum(h, 0.0)
    o_ref[...] = jnp.dot(h.astype(jnp.bfloat16), fw2_ref[...],
                         preferred_element_type=jnp.float32) + fb2


# --------------------------------------------------------------- wrapper ----

def forward(x_nchw, params):
    (w1, b1, g1, be1, w2, b2, g2, be2, fw1, fb1, fw2, fb2) = params
    del b1, b2  # conv biases cancel under training-mode BatchNorm (see kernel)

    x = jnp.transpose(x_nchw, (0, 2, 3, 1)).astype(jnp.float32)  # NHWC
    N, H, W, Cin = x.shape
    Ho, Wo = H // 2, W // 2
    C1, C2 = w1.shape[-1], w2.shape[-1]
    FC1 = fw1.shape[-1]
    NC = fw2.shape[-1]

    # Layout plumbing in XLA (fuses with the transpose/pad):
    #   conv1 im2col patches, im2col conv1 weights, per-(dy,dx) conv2 weights,
    #   bf16 fc weights, packed small params.
    xp = jnp.pad(x, ((0, 0), (1, 1), (1, 1), (0, 0)))
    cols = [xp[:, dy:dy + H, dx:dx + W, :]
            for dy in range(3) for dx in range(3)]
    patches1 = jnp.concatenate(cols, axis=-1).reshape(N * H * W, 9 * Cin)
    patches1 = patches1.astype(jnp.bfloat16)

    w1f = w1.reshape(9 * Cin, C1).astype(jnp.bfloat16)
    w2r = w2.reshape(9, C1, C2).astype(jnp.bfloat16)
    fw1b = fw1.astype(jnp.bfloat16)
    fw2b = fw2.astype(jnp.bfloat16)

    pw = max(C1, C2, FC1, NC)

    def _row(v):
        v = v.reshape(-1).astype(jnp.float32)
        return jnp.pad(v, (0, pw - v.shape[0]))

    pvec = jnp.stack([_row(g1), _row(be1), _row(g2), _row(be2),
                      _row(fb1), _row(fb2)], axis=0)             # (6, pw)

    inputs = [patches1, w1f, w2r, fw1b, fw2b, pvec]
    in_specs = [pl.BlockSpec(t.shape, lambda i, _n=t.ndim: (0,) * _n)
                for t in inputs]

    return pl.pallas_call(
        fused_cnn_kernel,
        out_shape=jax.ShapeDtypeStruct((N, NC), jnp.float32),
        grid=(1,),
        in_specs=in_specs,
        out_specs=pl.BlockSpec((N, NC), lambda i: (0, 0)),
        scratch_shapes=[pltpu.VMEM((N, Ho + 2, Wo + 2, C1), jnp.float32)],
        compiler_params=pltpu.CompilerParams(
            dimension_semantics=("arbitrary",)),
    )(*inputs)


# -------------------------------------------------------------- reference ---

def reference(x_nchw, params):
    (w1, b1, g1, be1, w2, b2, g2, be2, fw1, fb1, fw2, fb2) = params
    x = jnp.transpose(x_nchw, (0, 2, 3, 1)).astype(jnp.float32)
    dn = ("NHWC", "HWIO", "NHWC")

    def conv_bn_relu(x, w, b, g, be):
        y = lax.conv_general_dilated(x, w, (1, 1), "SAME",
                                     dimension_numbers=dn)
        y = y + b.reshape(1, 1, 1, -1)
        mean = y.mean(axis=(0, 1, 2))
        var = y.var(axis=(0, 1, 2))
        y = (y - mean) * lax.rsqrt(var + _BN_EPS)
        y = y * g.reshape(1, 1, 1, -1) + be.reshape(1, 1, 1, -1)
        return jnp.maximum(y, 0.0)

    y = conv_bn_relu(x, w1, b1, g1, be1)
    N, H, W, C = y.shape
    y = y.reshape(N, H // 2, 2, W // 2, 2, C).mean(axis=(2, 4))
    y = conv_bn_relu(y, w2, b2, g2, be2)
    feat = y.max(axis=(1, 2))
    h = jnp.maximum(feat @ fw1 + fb1, 0.0)
    return h @ fw2 + fb2


# ------------------------------------------------------------------- main ---

if __name__ == "__main__":
    key = jax.random.PRNGKey(0)
    kx, k0, k1, k2, k3, k4, k5, k6, k7 = jax.random.split(key, 9)

    channels, num_classes = 3, 3
    N, H, W = 2, 16, 16

    # Deterministic parameter init (shapes from the module __init__).
    w1 = jax.random.normal(k0, (3, 3, channels, 32), jnp.float32) * 0.1
    b1 = jax.random.normal(k1, (1, 32), jnp.float32) * 0.1
    g1, be1 = jnp.ones((1, 32), jnp.float32), jnp.zeros((1, 32), jnp.float32)

    w2 = jax.random.normal(k2, (3, 3, 32, 64), jnp.float32) * 0.1
    b2 = jax.random.normal(k3, (1, 64), jnp.float32) * 0.1
    g2, be2 = jnp.ones((1, 64), jnp.float32), jnp.zeros((1, 64), jnp.float32)

    fw1 = jax.random.normal(k4, (64, 32), jnp.float32) * 0.1
    fb1 = jax.random.normal(k5, (1, 32), jnp.float32) * 0.1
    fw2 = jax.random.normal(k6, (32, num_classes), jnp.float32) * 0.1
    fb2 = jax.random.normal(k7, (1, num_classes), jnp.float32) * 0.1

    params = (w1, b1, g1, be1, w2, b2, g2, be2, fw1, fb1, fw2, fb2)

    x = jax.random.normal(kx, (N, channels, H, W), jnp.float32)  # NCHW

    out = jax.block_until_ready(forward(x, params))
    ref = jax.block_until_ready(reference(x, params))

    assert out.shape == (N, num_classes), out.shape
    np.testing.assert_allclose(np.asarray(out), np.asarray(ref),
                               rtol=2e-2, atol=2e-2)
    print("KERNEL_OK")
</pallas_src>

<mosaic_0001>
module attributes {stable_mosaic.version = 11 : i64} {
  func.func @fused_cnn_kernel(%arg0: i32, %arg1: memref<512x27xbf16, #tpu.memory_space<vmem>>, %arg2: memref<27x32xbf16, #tpu.memory_space<vmem>>, %arg3: memref<9x32x64xbf16, #tpu.memory_space<vmem>>, %arg4: memref<64x32xbf16, #tpu.memory_space<vmem>>, %arg5: memref<32x3xbf16, #tpu.memory_space<vmem>>, %arg6: memref<6x64xf32, #tpu.memory_space<vmem>>, %arg7: memref<2x3xf32, #tpu.memory_space<vmem>>, %arg8: memref<2x10x10x32xf32, #tpu.memory_space<vmem>>) attributes {dimension_semantics = [#tpu.dimension_semantics<arbitrary>], iteration_bounds = array<i64: 1>, scalar_prefetch = 0 : i64, scratch_operands = 1 : i64, tpu.core_type = #tpu.core_type<tc>, window_params = [{pipeline_mode = #tpu.pipeline_mode<synchronous>, transform_indices = @transform_0, window_bounds = array<i64: 512, 27>}, {pipeline_mode = #tpu.pipeline_mode<synchronous>, transform_indices = @transform_1, window_bounds = array<i64: 27, 32>}, {pipeline_mode = #tpu.pipeline_mode<synchronous>, transform_indices = @transform_2, window_bounds = array<i64: 9, 32, 64>}, {pipeline_mode = #tpu.pipeline_mode<synchronous>, transform_indices = @transform_3, window_bounds = array<i64: 64, 32>}, {pipeline_mode = #tpu.pipeline_mode<synchronous>, transform_indices = @transform_4, window_bounds = array<i64: 32, 3>}, {pipeline_mode = #tpu.pipeline_mode<synchronous>, transform_indices = @transform_5, window_bounds = array<i64: 6, 64>}, {pipeline_mode = #tpu.pipeline_mode<synchronous>, transform_indices = @transform_6, window_bounds = array<i64: 2, 3>}]} {
    %c0 = arith.constant 0 : index
    %c0_0 = arith.constant 0 : index
    %0 = vector.load %arg6[%c0, %c0_0] : memref<6x64xf32, #tpu.memory_space<vmem>>, vector<6x64xf32>
    %1 = vector.extract_strided_slice %0 {offsets = [0, 0], sizes = [1, 32], strides = [1, 1]} : vector<6x64xf32> to vector<1x32xf32>
    %2 = vector.extract_strided_slice %0 {offsets = [1, 0], sizes = [1, 32], strides = [1, 1]} : vector<6x64xf32> to vector<1x32xf32>
    %3 = vector.extract_strided_slice %0 {offsets = [2, 0], sizes = [1, 64], strides = [1, 1]} : vector<6x64xf32> to vector<1x64xf32>
    %4 = vector.extract_strided_slice %0 {offsets = [3, 0], sizes = [1, 64], strides = [1, 1]} : vector<6x64xf32> to vector<1x64xf32>
    %5 = vector.extract_strided_slice %0 {offsets = [4, 0], sizes = [1, 32], strides = [1, 1]} : vector<6x64xf32> to vector<1x32xf32>
    %6 = vector.extract_strided_slice %0 {offsets = [5, 0], sizes = [1, 3], strides = [1, 1]} : vector<6x64xf32> to vector<1x3xf32>
    %c0_1 = arith.constant 0 : index
    %c0_2 = arith.constant 0 : index
    %7 = vector.load %arg1[%c0_1, %c0_2] : memref<512x27xbf16, #tpu.memory_space<vmem>>, vector<512x27xbf16>
    %c0_3 = arith.constant 0 : index
    %c0_4 = arith.constant 0 : index
    %8 = vector.load %arg2[%c0_3, %c0_4] : memref<27x32xbf16, #tpu.memory_space<vmem>>, vector<27x32xbf16>
    %cst = arith.constant dense<0.000000e+00> : vector<512x32xf32>
    %9 = tpu.matmul %7, %8, %cst {dimension_numbers = #tpu.dot_dimension_numbers<[1], [0], [0], [1], [0, 0, 1, 1], [], []>} : vector<512x27xbf16>, vector<27x32xbf16>, vector<512x32xf32> -> vector<512x32xf32>
    %cst_5 = arith.constant dense<0.000000e+00> : vector<32xf32>
    %10 = vector.multi_reduction <add>, %9, %cst_5 [0] : vector<512x32xf32> to vector<32xf32>
    %11 = vector.shape_cast %10 : vector<32xf32> to vector<1x32xf32>
    %12 = arith.mulf %9, %9 : vector<512x32xf32>
    %cst_6 = arith.constant dense<0.000000e+00> : vector<32xf32>
    %13 = vector.multi_reduction <add>, %12, %cst_6 [0] : vector<512x32xf32> to vector<32xf32>
    %14 = vector.shape_cast %13 : vector<32xf32> to vector<1x32xf32>
    %cst_7 = arith.constant 0.001953125 : f32
    %15 = vector.broadcast %cst_7 : f32 to vector<1x32xf32>
    %16 = arith.mulf %11, %15 : vector<1x32xf32>
    %cst_8 = arith.constant 0.001953125 : f32
    %17 = vector.broadcast %cst_8 : f32 to vector<1x32xf32>
    %18 = arith.mulf %14, %17 : vector<1x32xf32>
    %19 = arith.mulf %16, %16 : vector<1x32xf32>
    %20 = arith.subf %18, %19 : vector<1x32xf32>
    %cst_9 = arith.constant 9.99999974E-6 : f32
    %21 = vector.broadcast %cst_9 : f32 to vector<1x32xf32>
    %22 = arith.addf %20, %21 : vector<1x32xf32>
    %23 = math.rsqrt %22 : vector<1x32xf32>
    %24 = arith.mulf %1, %23 : vector<1x32xf32>
    %25 = vector.broadcast %16 : vector<1x32xf32> to vector<512x32xf32>
    %26 = arith.subf %9, %25 : vector<512x32xf32>
    %27 = vector.broadcast %24 : vector<1x32xf32> to vector<512x32xf32>
    %28 = arith.mulf %26, %27 : vector<512x32xf32>
    %29 = vector.broadcast %2 : vector<1x32xf32> to vector<512x32xf32>
    %30 = arith.addf %28, %29 : vector<512x32xf32>
    %cst_10 = arith.constant 0.000000e+00 : f32
    %31 = vector.broadcast %cst_10 : f32 to vector<512x32xf32>
    %32 = arith.maximumf %30, %31 : vector<512x32xf32>
    %33 = vector.shape_cast %32 : vector<512x32xf32> to vector<2x8x2x16x32xf32>
    %34 = vector.extract_strided_slice %33 {offsets = [0, 0, 0, 0, 0], sizes = [2, 8, 1, 16, 32], strides = [1, 1, 1, 1, 1]} : vector<2x8x2x16x32xf32> to vector<2x8x1x16x32xf32>
    %35 = vector.shape_cast %34 : vector<2x8x1x16x32xf32> to vector<2x8x16x32xf32>
    %36 = vector.extract_strided_slice %33 {offsets = [0, 0, 1, 0, 0], sizes = [2, 8, 1, 16, 32], strides = [1, 1, 1, 1, 1]} : vector<2x8x2x16x32xf32> to vector<2x8x1x16x32xf32>
    %37 = vector.shape_cast %36 : vector<2x8x1x16x32xf32> to vector<2x8x16x32xf32>
    %38 = arith.addf %35, %37 : vector<2x8x16x32xf32>
    %39 = vector.shape_cast %38 : vector<2x8x16x32xf32> to vector<2x8x8x2x32xf32>
    %40 = vector.extract_strided_slice %39 {offsets = [0, 0, 0, 0, 0], sizes = [2, 8, 8, 1, 32], strides = [1, 1, 1, 1, 1]} : vector<2x8x8x2x32xf32> to vector<2x8x8x1x32xf32>
    %41 = vector.shape_cast %40 : vector<2x8x8x1x32xf32> to vector<2x8x8x32xf32>
    %42 = vector.extract_strided_slice %39 {offsets = [0, 0, 0, 1, 0], sizes = [2, 8, 8, 1, 32], strides = [1, 1, 1, 1, 1]} : vector<2x8x8x2x32xf32> to vector<2x8x8x1x32xf32>
    %43 = vector.shape_cast %42 : vector<2x8x8x1x32xf32> to vector<2x8x8x32xf32>
    %44 = arith.addf %41, %43 : vector<2x8x8x32xf32>
    %cst_11 = arith.constant 2.500000e-01 : f32
    %45 = vector.broadcast %cst_11 : f32 to vector<2x8x8x32xf32>
    %46 = arith.mulf %45, %44 : vector<2x8x8x32xf32>
    %cst_12 = arith.constant 0.000000e+00 : f32
    %47 = vector.broadcast %cst_12 : f32 to vector<2x1x10x32xf32>
    %cst_13 = arith.constant 0.000000e+00 : f32
    %48 = vector.broadcast %cst_13 : f32 to vector<2x8x1x32xf32>
    %c0_14 = arith.constant 0 : index
    %c0_15 = arith.constant 0 : index
    %c0_16 = arith.constant 0 : index
    %c0_17 = arith.constant 0 : index
    %49 = vector.load %arg8[%c0_14, %c0_15, %c0_16, %c0_17] : memref<2x10x10x32xf32, #tpu.memory_space<vmem>>, vector<2x1x10x32xf32>
    tpu.vector_store %arg8[%c0_14, %c0_15, %c0_16, %c0_17], %47 {strides = array<i32>} : memref<2x10x10x32xf32, #tpu.memory_space<vmem>>, vector<2x1x10x32xf32>,
    %c0_18 = arith.constant 0 : index
    %c9 = arith.constant 9 : index
    %c0_19 = arith.constant 0 : index
    %c0_20 = arith.constant 0 : index
    %50 = vector.load %arg8[%c0_18, %c9, %c0_19, %c0_20] : memref<2x10x10x32xf32, #tpu.memory_space<vmem>>, vector<2x1x10x32xf32>
    tpu.vector_store %arg8[%c0_18, %c9, %c0_19, %c0_20], %47 {strides = array<i32>} : memref<2x10x10x32xf32, #tpu.memory_space<vmem>>, vector<2x1x10x32xf32>,
    %c0_21 = arith.constant 0 : index
    %c1 = arith.constant 1 : index
    %c0_22 = arith.constant 0 : index
    %c0_23 = arith.constant 0 : index
    %51 = vector.load %arg8[%c0_21, %c1, %c0_22, %c0_23] : memref<2x10x10x32xf32, #tpu.memory_space<vmem>>, vector<2x8x1x32xf32>
    tpu.vector_store %arg8[%c0_21, %c1, %c0_22, %c0_23], %48 {strides = array<i32>} : memref<2x10x10x32xf32, #tpu.memory_space<vmem>>, vector<2x8x1x32xf32>,
    %c0_24 = arith.constant 0 : index
    %c1_25 = arith.constant 1 : index
    %c9_26 = arith.constant 9 : index
    %c0_27 = arith.constant 0 : index
    %52 = vector.load %arg8[%c0_24, %c1_25, %c9_26, %c0_27] : memref<2x10x10x32xf32, #tpu.memory_space<vmem>>, vector<2x8x1x32xf32>
    tpu.vector_store %arg8[%c0_24, %c1_25, %c9_26, %c0_27], %48 {strides = array<i32>} : memref<2x10x10x32xf32, #tpu.memory_space<vmem>>, vector<2x8x1x32xf32>,
    %c0_28 = arith.constant 0 : index
    %c1_29 = arith.constant 1 : index
    %c1_30 = arith.constant 1 : index
    %c0_31 = arith.constant 0 : index
    %53 = vector.load %arg8[%c0_28, %c1_29, %c1_30, %c0_31] : memref<2x10x10x32xf32, #tpu.memory_space<vmem>>, vector<2x8x8x32xf32>
    tpu.vector_store %arg8[%c0_28, %c1_29, %c1_30, %c0_31], %46 {strides = array<i32>} : memref<2x10x10x32xf32, #tpu.memory_space<vmem>>, vector<2x8x8x32xf32>,
    %c0_32 = arith.constant 0 : index
    %c0_33 = arith.constant 0 : index
    %c0_34 = arith.constant 0 : index
    %c0_35 = arith.constant 0 : index
    %54 = vector.load %arg8[%c0_32, %c0_33, %c0_34, %c0_35] : memref<2x10x10x32xf32, #tpu.memory_space<vmem>>, vector<2x10x10x32xf32>
    %c0_36 = arith.constant 0 : index
    %c0_37 = arith.constant 0 : index
    %c0_38 = arith.constant 0 : index
    %55 = vector.load %arg3[%c0_36, %c0_37, %c0_38] : memref<9x32x64xbf16, #tpu.memory_space<vmem>>, vector<9x32x64xbf16>
    %cst_39 = arith.constant 0.000000e+00 : f32
    %56 = vector.broadcast %cst_39 : f32 to vector<128x64xf32>
    %57 = vector.extract_strided_slice %54 {offsets = [0, 0, 0, 0], sizes = [2, 8, 8, 32], strides = [1, 1, 1, 1]} : vector<2x10x10x32xf32> to vector<2x8x8x32xf32>
    %58 = vector.shape_cast %57 : vector<2x8x8x32xf32> to vector<128x32xf32>
    %59 = arith.truncf %58 : vector<128x32xf32> to vector<128x32xbf16>
    %60 = vector.extract_strided_slice %55 {offsets = [0, 0, 0], sizes = [1, 32, 64], strides = [1, 1, 1]} : vector<9x32x64xbf16> to vector<1x32x64xbf16>
    %61 = vector.shape_cast %60 : vector<1x32x64xbf16> to vector<32x64xbf16>
    %cst_40 = arith.constant dense<0.000000e+00> : vector<128x64xf32>
    %62 = tpu.matmul %59, %61, %cst_40 {dimension_numbers = #tpu.dot_dimension_numbers<[1], [0], [0], [1], [0, 0, 1, 1], [], []>} : vector<128x32xbf16>, vector<32x64xbf16>, vector<128x64xf32> -> vector<128x64xf32>
    %63 = arith.addf %56, %62 : vector<128x64xf32>
    %64 = vector.extract_strided_slice %54 {offsets = [0, 0, 1, 0], sizes = [2, 8, 8, 32], strides = [1, 1, 1, 1]} : vector<2x10x10x32xf32> to vector<2x8x8x32xf32>
    %65 = vector.shape_cast %64 : vector<2x8x8x32xf32> to vector<128x32xf32>
    %66 = arith.truncf %65 : vector<128x32xf32> to vector<128x32xbf16>
    %67 = vector.extract_strided_slice %55 {offsets = [1, 0, 0], sizes = [1, 32, 64], strides = [1, 1, 1]} : vector<9x32x64xbf16> to vector<1x32x64xbf16>
    %68 = vector.shape_cast %67 : vector<1x32x64xbf16> to vector<32x64xbf16>
    %cst_41 = arith.constant dense<0.000000e+00> : vector<128x64xf32>
    %69 = tpu.matmul %66, %68, %cst_41 {dimension_numbers = #tpu.dot_dimension_numbers<[1], [0], [0], [1], [0, 0, 1, 1], [], []>} : vector<128x32xbf16>, vector<32x64xbf16>, vector<128x64xf32> -> vector<128x64xf32>
    %70 = arith.addf %63, %69 : vector<128x64xf32>
    %71 = vector.extract_strided_slice %54 {offsets = [0, 0, 2, 0], sizes = [2, 8, 8, 32], strides = [1, 1, 1, 1]} : vector<2x10x10x32xf32> to vector<2x8x8x32xf32>
    %72 = vector.shape_cast %71 : vector<2x8x8x32xf32> to vector<128x32xf32>
    %73 = arith.truncf %72 : vector<128x32xf32> to vector<128x32xbf16>
    %74 = vector.extract_strided_slice %55 {offsets = [2, 0, 0], sizes = [1, 32, 64], strides = [1, 1, 1]} : vector<9x32x64xbf16> to vector<1x32x64xbf16>
    %75 = vector.shape_cast %74 : vector<1x32x64xbf16> to vector<32x64xbf16>
    %cst_42 = arith.constant dense<0.000000e+00> : vector<128x64xf32>
    %76 = tpu.matmul %73, %75, %cst_42 {dimension_numbers = #tpu.dot_dimension_numbers<[1], [0], [0], [1], [0, 0, 1, 1], [], []>} : vector<128x32xbf16>, vector<32x64xbf16>, vector<128x64xf32> -> vector<128x64xf32>
    %77 = arith.addf %70, %76 : vector<128x64xf32>
    %78 = vector.extract_strided_slice %54 {offsets = [0, 1, 0, 0], sizes = [2, 8, 8, 32], strides = [1, 1, 1, 1]} : vector<2x10x10x32xf32> to vector<2x8x8x32xf32>
    %79 = vector.shape_cast %78 : vector<2x8x8x32xf32> to vector<128x32xf32>
    %80 = arith.truncf %79 : vector<128x32xf32> to vector<128x32xbf16>
    %81 = vector.extract_strided_slice %55 {offsets = [3, 0, 0], sizes = [1, 32, 64], strides = [1, 1, 1]} : vector<9x32x64xbf16> to vector<1x32x64xbf16>
    %82 = vector.shape_cast %81 : vector<1x32x64xbf16> to vector<32x64xbf16>
    %cst_43 = arith.constant dense<0.000000e+00> : vector<128x64xf32>
    %83 = tpu.matmul %80, %82, %cst_43 {dimension_numbers = #tpu.dot_dimension_numbers<[1], [0], [0], [1], [0, 0, 1, 1], [], []>} : vector<128x32xbf16>, vector<32x64xbf16>, vector<128x64xf32> -> vector<128x64xf32>
    %84 = arith.addf %77, %83 : vector<128x64xf32>
    %85 = vector.extract_strided_slice %54 {offsets = [0, 1, 1, 0], sizes = [2, 8, 8, 32], strides = [1, 1, 1, 1]} : vector<2x10x10x32xf32> to vector<2x8x8x32xf32>
    %86 = vector.shape_cast %85 : vector<2x8x8x32xf32> to vector<128x32xf32>
    %87 = arith.truncf %86 : vector<128x32xf32> to vector<128x32xbf16>
    %88 = vector.extract_strided_slice %55 {offsets = [4, 0, 0], sizes = [1, 32, 64], strides = [1, 1, 1]} : vector<9x32x64xbf16> to vector<1x32x64xbf16>
    %89 = vector.shape_cast %88 : vector<1x32x64xbf16> to vector<32x64xbf16>
    %cst_44 = arith.constant dense<0.000000e+00> : vector<128x64xf32>
    %90 = tpu.matmul %87, %89, %cst_44 {dimension_numbers = #tpu.dot_dimension_numbers<[1], [0], [0], [1], [0, 0, 1, 1], [], []>} : vector<128x32xbf16>, vector<32x64xbf16>, vector<128x64xf32> -> vector<128x64xf32>
    %91 = arith.addf %84, %90 : vector<128x64xf32>
    %92 = vector.extract_strided_slice %54 {offsets = [0, 1, 2, 0], sizes = [2, 8, 8, 32], strides = [1, 1, 1, 1]} : vector<2x10x10x32xf32> to vector<2x8x8x32xf32>
    %93 = vector.shape_cast %92 : vector<2x8x8x32xf32> to vector<128x32xf32>
    %94 = arith.truncf %93 : vector<128x32xf32> to vector<128x32xbf16>
    %95 = vector.extract_strided_slice %55 {offsets = [5, 0, 0], sizes = [1, 32, 64], strides = [1, 1, 1]} : vector<9x32x64xbf16> to vector<1x32x64xbf16>
    %96 = vector.shape_cast %95 : vector<1x32x64xbf16> to vector<32x64xbf16>
    %cst_45 = arith.constant dense<0.000000e+00> : vector<128x64xf32>
    %97 = tpu.matmul %94, %96, %cst_45 {dimension_numbers = #tpu.dot_dimension_numbers<[1], [0], [0], [1], [0, 0, 1, 1], [], []>} : vector<128x32xbf16>, vector<32x64xbf16>, vector<128x64xf32> -> vector<128x64xf32>
    %98 = arith.addf %91, %97 : vector<128x64xf32>
    %99 = vector.extract_strided_slice %54 {offsets = [0, 2, 0, 0], sizes = [2, 8, 8, 32], strides = [1, 1, 1, 1]} : vector<2x10x10x32xf32> to vector<2x8x8x32xf32>
    %100 = vector.shape_cast %99 : vector<2x8x8x32xf32> to vector<128x32xf32>
    %101 = arith.truncf %100 : vector<128x32xf32> to vector<128x32xbf16>
    %102 = vector.extract_strided_slice %55 {offsets = [6, 0, 0], sizes = [1, 32, 64], strides = [1, 1, 1]} : vector<9x32x64xbf16> to vector<1x32x64xbf16>
    %103 = vector.shape_cast %102 : vector<1x32x64xbf16> to vector<32x64xbf16>
    %cst_46 = arith.constant dense<0.000000e+00> : vector<128x64xf32>
    %104 = tpu.matmul %101, %103, %cst_46 {dimension_numbers = #tpu.dot_dimension_numbers<[1], [0], [0], [1], [0, 0, 1, 1], [], []>} : vector<128x32xbf16>, vector<32x64xbf16>, vector<128x64xf32> -> vector<128x64xf32>
    %105 = arith.addf %98, %104 : vector<128x64xf32>
    %106 = vector.extract_strided_slice %54 {offsets = [0, 2, 1, 0], sizes = [2, 8, 8, 32], strides = [1, 1, 1, 1]} : vector<2x10x10x32xf32> to vector<2x8x8x32xf32>
    %107 = vector.shape_cast %106 : vector<2x8x8x32xf32> to vector<128x32xf32>
    %108 = arith.truncf %107 : vector<128x32xf32> to vector<128x32xbf16>
    %109 = vector.extract_strided_slice %55 {offsets = [7, 0, 0], sizes = [1, 32, 64], strides = [1, 1, 1]} : vector<9x32x64xbf16> to vector<1x32x64xbf16>
    %110 = vector.shape_cast %109 : vector<1x32x64xbf16> to vector<32x64xbf16>
    %cst_47 = arith.constant dense<0.000000e+00> : vector<128x64xf32>
    %111 = tpu.matmul %108, %110, %cst_47 {dimension_numbers = #tpu.dot_dimension_numbers<[1], [0], [0], [1], [0, 0, 1, 1], [], []>} : vector<128x32xbf16>, vector<32x64xbf16>, vector<128x64xf32> -> vector<128x64xf32>
    %112 = arith.addf %105, %111 : vector<128x64xf32>
    %113 = vector.extract_strided_slice %54 {offsets = [0, 2, 2, 0], sizes = [2, 8, 8, 32], strides = [1, 1, 1, 1]} : vector<2x10x10x32xf32> to vector<2x8x8x32xf32>
    %114 = vector.shape_cast %113 : vector<2x8x8x32xf32> to vector<128x32xf32>
    %115 = arith.truncf %114 : vector<128x32xf32> to vector<128x32xbf16>
    %116 = vector.extract_strided_slice %55 {offsets = [8, 0, 0], sizes = [1, 32, 64], strides = [1, 1, 1]} : vector<9x32x64xbf16> to vector<1x32x64xbf16>
    %117 = vector.shape_cast %116 : vector<1x32x64xbf16> to vector<32x64xbf16>
    %cst_48 = arith.constant dense<0.000000e+00> : vector<128x64xf32>
    %118 = tpu.matmul %115, %117, %cst_48 {dimension_numbers = #tpu.dot_dimension_numbers<[1], [0], [0], [1], [0, 0, 1, 1], [], []>} : vector<128x32xbf16>, vector<32x64xbf16>, vector<128x64xf32> -> vector<128x64xf32>
    %119 = arith.addf %112, %118 : vector<128x64xf32>
    %cst_49 = arith.constant dense<0.000000e+00> : vector<64xf32>
    %120 = vector.multi_reduction <add>, %119, %cst_49 [0] : vector<128x64xf32> to vector<64xf32>
    %121 = vector.shape_cast %120 : vector<64xf32> to vector<1x64xf32>
    %122 = arith.mulf %119, %119 : vector<128x64xf32>
    %cst_50 = arith.constant dense<0.000000e+00> : vector<64xf32>
    %123 = vector.multi_reduction <add>, %122, %cst_50 [0] : vector<128x64xf32> to vector<64xf32>
    %124 = vector.shape_cast %123 : vector<64xf32> to vector<1x64xf32>
    %cst_51 = arith.constant 7.812500e-03 : f32
    %125 = vector.broadcast %cst_51 : f32 to vector<1x64xf32>
    %126 = arith.mulf %121, %125 : vector<1x64xf32>
    %cst_52 = arith.constant 7.812500e-03 : f32
    %127 = vector.broadcast %cst_52 : f32 to vector<1x64xf32>
    %128 = arith.mulf %124, %127 : vector<1x64xf32>
    %129 = arith.mulf %126, %126 : vector<1x64xf32>
    %130 = arith.subf %128, %129 : vector<1x64xf32>
    %cst_53 = arith.constant 9.99999974E-6 : f32
    %131 = vector.broadcast %cst_53 : f32 to vector<1x64xf32>
    %132 = arith.addf %130, %131 : vector<1x64xf32>
    %133 = math.rsqrt %132 : vector<1x64xf32>
    %134 = arith.mulf %3, %133 : vector<1x64xf32>
    %135 = vector.broadcast %126 : vector<1x64xf32> to vector<128x64xf32>
    %136 = arith.subf %119, %135 : vector<128x64xf32>
    %137 = vector.broadcast %134 : vector<1x64xf32> to vector<128x64xf32>
    %138 = arith.mulf %136, %137 : vector<128x64xf32>
    %139 = vector.broadcast %4 : vector<1x64xf32> to vector<128x64xf32>
    %140 = arith.addf %138, %139 : vector<128x64xf32>
    %cst_54 = arith.constant 0.000000e+00 : f32
    %141 = vector.broadcast %cst_54 : f32 to vector<128x64xf32>
    %142 = arith.maximumf %140, %141 : vector<128x64xf32>
    %143 = vector.shape_cast %142 : vector<128x64xf32> to vector<2x64x64xf32>
    %cst_55 = arith.constant dense<0xFF800000> : vector<2x64xf32>
    %144 = vector.multi_reduction <maximumf>, %143, %cst_55 [1] : vector<2x64x64xf32> to vector<2x64xf32>
    %145 = arith.truncf %144 : vector<2x64xf32> to vector<2x64xbf16>
    %c0_56 = arith.constant 0 : index
    %c0_57 = arith.constant 0 : index
    %146 = vector.load %arg4[%c0_56, %c0_57] : memref<64x32xbf16, #tpu.memory_space<vmem>>, vector<64x32xbf16>
    %cst_58 = arith.constant dense<0.000000e+00> : vector<2x32xf32>
    %147 = tpu.matmul %145, %146, %cst_58 {dimension_numbers = #tpu.dot_dimension_numbers<[1], [0], [0], [1], [0, 0, 1, 1], [], []>} : vector<2x64xbf16>, vector<64x32xbf16>, vector<2x32xf32> -> vector<2x32xf32>
    %148 = vector.broadcast %5 : vector<1x32xf32> to vector<2x32xf32>
    %149 = arith.addf %147, %148 : vector<2x32xf32>
    %cst_59 = arith.constant 0.000000e+00 : f32
    %150 = vector.broadcast %cst_59 : f32 to vector<2x32xf32>
    %151 = arith.maximumf %149, %150 : vector<2x32xf32>
    %152 = arith.truncf %151 : vector<2x32xf32> to vector<2x32xbf16>
    %c0_60 = arith.constant 0 : index
    %c0_61 = arith.constant 0 : index
    %153 = vector.load %arg5[%c0_60, %c0_61] : memref<32x3xbf16, #tpu.memory_space<vmem>>, vector<32x3xbf16>
    %cst_62 = arith.constant dense<0.000000e+00> : vector<2x3xf32>
    %154 = tpu.matmul %152, %153, %cst_62 {dimension_numbers = #tpu.dot_dimension_numbers<[1], [0], [0], [1], [0, 0, 1, 1], [], []>} : vector<2x32xbf16>, vector<32x3xbf16>, vector<2x3xf32> -> vector<2x3xf32>
    %155 = vector.broadcast %6 : vector<1x3xf32> to vector<2x3xf32>
    %156 = arith.addf %154, %155 : vector<2x3xf32>
    %c0_63 = arith.constant 0 : index
    %c0_64 = arith.constant 0 : index
    %157 = vector.load %arg7[%c0_63, %c0_64] : memref<2x3xf32, #tpu.memory_space<vmem>>, vector<2x3xf32>
    tpu.vector_store %arg7[%c0_63, %c0_64], %156 {strides = array<i32>} : memref<2x3xf32, #tpu.memory_space<vmem>>, vector<2x3xf32>,
    return
  }
  func.func @transform_0(%arg0: i32) -> (i32, i32) {
    %c0_i32 = arith.constant 0 : i32
    %c0_i32_0 = arith.constant 0 : i32
    %c0_i32_1 = arith.constant 0 : i32
    return %c0_i32, %c0_i32_0 : i32, i32
  }
  func.func @transform_1(%arg0: i32) -> (i32, i32) {
    %c0_i32 = arith.constant 0 : i32
    %c0_i32_0 = arith.constant 0 : i32
    %c0_i32_1 = arith.constant 0 : i32
    return %c0_i32, %c0_i32_0 : i32, i32
  }
  func.func @transform_2(%arg0: i32) -> (i32, i32, i32) {
    %c0_i32 = arith.constant 0 : i32
    %c0_i32_0 = arith.constant 0 : i32
    %c0_i32_1 = arith.constant 0 : i32
    %c0_i32_2 = arith.constant 0 : i32
    return %c0_i32, %c0_i32_0, %c0_i32_1 : i32, i32, i32
  }
  func.func @transform_3(%arg0: i32) -> (i32, i32) {
    %c0_i32 = arith.constant 0 : i32
    %c0_i32_0 = arith.constant 0 : i32
    %c0_i32_1 = arith.constant 0 : i32
    return %c0_i32, %c0_i32_0 : i32, i32
  }
  func.func @transform_4(%arg0: i32) -> (i32, i32) {
    %c0_i32 = arith.constant 0 : i32
    %c0_i32_0 = arith.constant 0 : i32
    %c0_i32_1 = arith.constant 0 : i32
    return %c0_i32, %c0_i32_0 : i32, i32
  }
  func.func @transform_5(%arg0: i32) -> (i32, i32) {
    %c0_i32 = arith.constant 0 : i32
    %c0_i32_0 = arith.constant 0 : i32
    %c0_i32_1 = arith.constant 0 : i32
    return %c0_i32, %c0_i32_0 : i32, i32
  }
  func.func @transform_6(%arg0: i32) -> (i32, i32) {
    %c0_i32 = arith.constant 0 : i32
    %c0_i32_0 = arith.constant 0 : i32
    %c0_i32_1 = arith.constant 0 : i32
    return %c0_i32, %c0_i32_0 : i32, i32
  }
}

</mosaic_0001>

<llo_original>
// kernel: tpu_custom_call.1
$region0: #{tpu_custom_call.1}
  #allocation0 [shape = 'u32[]', space=smem, size = 0x4, offset = 0x4, fixed_abs, tag = 'smem constant byte address 0x4 - core index']
  #allocation1 [shape = 'u32[72,128]{1,0:T(1,128)}', space=vmem, size = 0x9000, scoped, tag = 'internal scratch']
  #allocation2 [shape = 'f32[2,10,10,32]{3,2,1,0:T(8,128)}', space=vmem, size = 0x28000, scoped, tag = 'scratch operand']
  %s0 = inlined_call_operand.vmem [shape: bf16[512,27], index: 0, kind: input, shape index: {}]
  %s1 = inlined_call_operand.vmem [shape: bf16[27,32], index: 1, kind: input, shape index: {}]
  %s2 = inlined_call_operand.vmem [shape: bf16[9,32,64], index: 2, kind: input, shape index: {}]
  %s3 = inlined_call_operand.vmem [shape: bf16[64,32], index: 3, kind: input, shape index: {}]
  %s4 = inlined_call_operand.vmem [shape: bf16[32,3], index: 4, kind: input, shape index: {}]
  %s5 = inlined_call_operand.vmem [shape: f32[6,64], index: 5, kind: input, shape index: {}]
  %s6 = inlined_call_operand.hbm [shape: f32[2,3], index: 6, kind: output, shape index: {}]
  %s7 = sld [smem:[#allocation0]]
  $region34: #{tpu_custom_call.1} parent=0
    _
  %s9 = ssub.s32 1, %s7
  %s10 = scalar_select 0, %s9, %s7
  $region1: #{tpu_custom_call.1} parent=0
    #allocation3 [shape = 'u8[1024]{0}', space=vmem, size = 0x400, scoped, tag = 'output window, operand 0, single buffered']
    #allocation4 [shape = 's32[1]{0}', space=sflag, size = 0x4, scoped, tag = 'scoped memory for tpu_custom_call.1']
    %11 = vsyncpa [#allocation4], 0
    // Predicated region
    $region2: #{tpu_custom_call.1} parent=1 // pred_check
      _
    $region3: #{tpu_custom_call.1} parent=1 // pred_check_branch
      %13 = sbr.rel (0) target = $region5
    $region4: #{tpu_custom_call.1} parent=1 // pred_region
      _
    $region5: #{tpu_custom_call.1} parent=1 // pred_fallthru
      _
    // Predicated region
    $region6: #{tpu_custom_call.1} parent=1 // pred_check
      _
    $region7: #{tpu_custom_call.1} parent=1 // pred_check_branch
      %15 = sbr.rel (0) target = $region9
    $region8: #{tpu_custom_call.1} parent=1 // pred_region
      _
    $region9: #{tpu_custom_call.1} parent=1 // pred_fallthru
      _
    // Predicated region
    $region10: #{tpu_custom_call.1} parent=1 // pred_check
      _
    $region11: #{tpu_custom_call.1} parent=1 // pred_check_branch
      %17 = sbr.rel (0) target = $region13
    $region12: #{tpu_custom_call.1} parent=1 // pred_region
      _
    $region13: #{tpu_custom_call.1} parent=1 // pred_fallthru
      _
    // Predicated region
    $region14: #{tpu_custom_call.1} parent=1 // pred_check
      _
    $region15: #{tpu_custom_call.1} parent=1 // pred_check_branch
      %19 = sbr.rel (0) target = $region17
    $region16: #{tpu_custom_call.1} parent=1 // pred_region
      _
    $region17: #{tpu_custom_call.1} parent=1 // pred_fallthru
      _
    // Predicated region
    $region18: #{tpu_custom_call.1} parent=1 // pred_check
      _
    $region19: #{tpu_custom_call.1} parent=1 // pred_check_branch
      %21 = sbr.rel (0) target = $region21
    $region20: #{tpu_custom_call.1} parent=1 // pred_region
      _
    $region21: #{tpu_custom_call.1} parent=1 // pred_fallthru
      _
    // Predicated region
    $region22: #{tpu_custom_call.1} parent=1 // pred_check
      _
    $region23: #{tpu_custom_call.1} parent=1 // pred_check_branch
      %23 = sbr.rel (0) target = $region25
    $region24: #{tpu_custom_call.1} parent=1 // pred_region
      _
    $region25: #{tpu_custom_call.1} parent=1 // pred_fallthru
      _
    %v25 = vld [vmem:[%s5] sm:$0x3f]
    %v26 = vld [vmem:[%s0] sm:$0xf]
    %v27 = vld [vmem:[%s0 + $0x4] sm:$0xf]
    %v28 = vld [vmem:[%s0 + $0x8] sm:$0xf]
    %v29 = vld [vmem:[%s0 + $0xc] sm:$0xf]
    %v30 = vld [vmem:[%s0 + $0x10] sm:$0xf]
    %v31 = vld [vmem:[%s0 + $0x14] sm:$0xf]
    %v32 = vld [vmem:[%s0 + $0x18] sm:$0xf]
    %v33 = vld [vmem:[%s0 + $0x1c] sm:$0xf]
    %v34 = vld [vmem:[%s0 + $0x20] sm:$0xf]
    %v35 = vld [vmem:[%s0 + $0x24] sm:$0xf]
    %v36 = vld [vmem:[%s0 + $0x28] sm:$0xf]
    %v37 = vld [vmem:[%s0 + $0x2c] sm:$0xf]
    %v38 = vld [vmem:[%s0 + $0x30] sm:$0xf]
    %v39 = vld [vmem:[%s0 + $0x34] sm:$0xf]
    %v40 = vld [vmem:[%s0 + $0x38] sm:$0xf]
    %v41 = vld [vmem:[%s0 + $0x3c] sm:$0xf]
    %v42 = vld [vmem:[%s0 + $0x40] sm:$0xf]
    %v43 = vld [vmem:[%s0 + $0x44] sm:$0xf]
    %v44 = vld [vmem:[%s0 + $0x48] sm:$0xf]
    %v45 = vld [vmem:[%s0 + $0x4c] sm:$0xf]
    %v46 = vld [vmem:[%s0 + $0x50] sm:$0xf]
    %v47 = vld [vmem:[%s0 + $0x54] sm:$0xf]
    %v48 = vld [vmem:[%s0 + $0x58] sm:$0xf]
    %v49 = vld [vmem:[%s0 + $0x5c] sm:$0xf]
    %v50 = vld [vmem:[%s0 + $0x60] sm:$0xf]
    %v51 = vld [vmem:[%s0 + $0x64] sm:$0xf]
    %v52 = vld [vmem:[%s0 + $0x68] sm:$0xf]
    %v53 = vld [vmem:[%s0 + $0x6c] sm:$0xf]
    %v54 = vld [vmem:[%s0 + $0x70] sm:$0xf]
    %v55 = vld [vmem:[%s0 + $0x74] sm:$0xf]
    %v56 = vld [vmem:[%s0 + $0x78] sm:$0xf]
    %v57 = vld [vmem:[%s0 + $0x7c] sm:$0xf]
    %v58 = vld [vmem:[%s0 + $0x80] sm:$0xf]
    %v59 = vld [vmem:[%s0 + $0x84] sm:$0xf]
    %v60 = vld [vmem:[%s0 + $0x88] sm:$0xf]
    %v61 = vld [vmem:[%s0 + $0x8c] sm:$0xf]
    %v62 = vld [vmem:[%s0 + $0x90] sm:$0xf]
    %v63 = vld [vmem:[%s0 + $0x94] sm:$0xf]
    %v64 = vld [vmem:[%s0 + $0x98] sm:$0xf]
    %v65 = vld [vmem:[%s0 + $0x9c] sm:$0xf]
    %v66 = vld [vmem:[%s0 + $0xa0] sm:$0xf]
    %v67 = vld [vmem:[%s0 + $0xa4] sm:$0xf]
    %v68 = vld [vmem:[%s0 + $0xa8] sm:$0xf]
    %v69 = vld [vmem:[%s0 + $0xac] sm:$0xf]
    %v70 = vld [vmem:[%s0 + $0xb0] sm:$0xf]
    %v71 = vld [vmem:[%s0 + $0xb4] sm:$0xf]
    %v72 = vld [vmem:[%s0 + $0xb8] sm:$0xf]
    %v73 = vld [vmem:[%s0 + $0xbc] sm:$0xf]
    %v74 = vld [vmem:[%s0 + $0xc0] sm:$0xf]
    %v75 = vld [vmem:[%s0 + $0xc4] sm:$0xf]
    %v76 = vld [vmem:[%s0 + $0xc8] sm:$0xf]
    %v77 = vld [vmem:[%s0 + $0xcc] sm:$0xf]
    %v78 = vld [vmem:[%s0 + $0xd0] sm:$0xf]
    %v79 = vld [vmem:[%s0 + $0xd4] sm:$0xf]
    %v80 = vld [vmem:[%s0 + $0xd8] sm:$0xf]
    %v81 = vld [vmem:[%s0 + $0xdc] sm:$0xf]
    %v82 = vld [vmem:[%s0 + $0xe0] sm:$0xf]
    %v83 = vld [vmem:[%s0 + $0xe4] sm:$0xf]
    %v84 = vld [vmem:[%s0 + $0xe8] sm:$0xf]
    %v85 = vld [vmem:[%s0 + $0xec] sm:$0xf]
    %v86 = vld [vmem:[%s0 + $0xf0] sm:$0xf]
    %v87 = vld [vmem:[%s0 + $0xf4] sm:$0xf]
    %v88 = vld [vmem:[%s0 + $0xf8] sm:$0xf]
    %v89 = vld [vmem:[%s0 + $0xfc] sm:$0xf]
    %v90 = vld [vmem:[%s1] sm:$0xf]
    %v91 = vld [vmem:[%s1 + $0x4] sm:$0xf]
    %v92 = vld [vmem:[%s1 + $0x8] sm:$0xf]
    %v93 = vld [vmem:[%s1 + $0xc] sm:$0x3]
    %v158 = vunpack.c.l.b16 %v26
    %v159 = vunpack.c.l.b16 %v27
    %v160 = vunpack.c.l.b16 %v28
    %v161 = vunpack.c.l.b16 %v29
    %v162 = vunpack.c.l.b16 %v30
    %v163 = vunpack.c.l.b16 %v31
    %v164 = vunpack.c.l.b16 %v32
    %v165 = vunpack.c.l.b16 %v33
    %v166 = vunpack.c.l.b16 %v34
    %v167 = vunpack.c.l.b16 %v35
    %v168 = vunpack.c.l.b16 %v36
    %v169 = vunpack.c.l.b16 %v37
    %v170 = vunpack.c.l.b16 %v38
    %v171 = vunpack.c.l.b16 %v39
    %v172 = vunpack.c.l.b16 %v40
    %v173 = vunpack.c.l.b16 %v41
    %v174 = vunpack.c.l.b16 %v42
    %v175 = vunpack.c.l.b16 %v43
    %v176 = vunpack.c.l.b16 %v44
    %v177 = vunpack.c.l.b16 %v45
    %v178 = vunpack.c.l.b16 %v46
    %v179 = vunpack.c.l.b16 %v47
    %v180 = vunpack.c.l.b16 %v48
    %v181 = vunpack.c.l.b16 %v49
    %v182 = vunpack.c.l.b16 %v50
    %v183 = vunpack.c.l.b16 %v51
    %v184 = vunpack.c.l.b16 %v52
    %v185 = vunpack.c.l.b16 %v53
    %v186 = vunpack.c.l.b16 %v54
    %v187 = vunpack.c.l.b16 %v55
    %v188 = vunpack.c.l.b16 %v56
    %v189 = vunpack.c.l.b16 %v57
    %v190 = vunpack.c.l.b16 %v58
    %v191 = vunpack.c.l.b16 %v59
    %v192 = vunpack.c.l.b16 %v60
    %v193 = vunpack.c.l.b16 %v61
    %v194 = vunpack.c.l.b16 %v62
    %v195 = vunpack.c.l.b16 %v63
    %v196 = vunpack.c.l.b16 %v64
    %v197 = vunpack.c.l.b16 %v65
    %v198 = vunpack.c.l.b16 %v66
    %v199 = vunpack.c.l.b16 %v67
    %v200 = vunpack.c.l.b16 %v68
    %v201 = vunpack.c.l.b16 %v69
    %v202 = vunpack.c.l.b16 %v70
    %v203 = vunpack.c.l.b16 %v71
    %v204 = vunpack.c.l.b16 %v72
    %v205 = vunpack.c.l.b16 %v73
    %v206 = vunpack.c.l.b16 %v74
    %v207 = vunpack.c.l.b16 %v75
    %v208 = vunpack.c.l.b16 %v76
    %v209 = vunpack.c.l.b16 %v77
    %v210 = vunpack.c.l.b16 %v78
    %v211 = vunpack.c.l.b16 %v79
    %v212 = vunpack.c.l.b16 %v80
    %v213 = vunpack.c.l.b16 %v81
    %v214 = vunpack.c.l.b16 %v82
    %v215 = vunpack.c.l.b16 %v83
    %v216 = vunpack.c.l.b16 %v84
    %v217 = vunpack.c.l.b16 %v85
    %v218 = vunpack.c.l.b16 %v86
    %v219 = vunpack.c.l.b16 %v87
    %v220 = vunpack.c.l.b16 %v88
    %v221 = vunpack.c.l.b16 %v89
    %v222 = vpack.c.b16 %v159, %v158
    %v223 = vpack.c.b16 %v161, %v160
    %v224 = vpack.c.b16 %v163, %v162
    %v225 = vpack.c.b16 %v165, %v164
    %v226 = vpack.c.b16 %v167, %v166
    %v227 = vpack.c.b16 %v169, %v168
    %v228 = vpack.c.b16 %v171, %v170
    %v229 = vpack.c.b16 %v173, %v172
    %v230 = vpack.c.b16 %v175, %v174
    %v231 = vpack.c.b16 %v177, %v176
    %v232 = vpack.c.b16 %v179, %v178
    %v233 = vpack.c.b16 %v181, %v180
    %v234 = vpack.c.b16 %v183, %v182
    %v235 = vpack.c.b16 %v185, %v184
    %v236 = vpack.c.b16 %v187, %v186
    %v237 = vpack.c.b16 %v189, %v188
    %v238 = vpack.c.b16 %v191, %v190
    %v239 = vpack.c.b16 %v193, %v192
    %v240 = vpack.c.b16 %v195, %v194
    %v241 = vpack.c.b16 %v197, %v196
    %v242 = vpack.c.b16 %v199, %v198
    %v243 = vpack.c.b16 %v201, %v200
    %v244 = vpack.c.b16 %v203, %v202
    %v245 = vpack.c.b16 %v205, %v204
    %v246 = vpack.c.b16 %v207, %v206
    %v247 = vpack.c.b16 %v209, %v208
    %v248 = vpack.c.b16 %v211, %v210
    %v249 = vpack.c.b16 %v213, %v212
    %v250 = vpack.c.b16 %v215, %v214
    %v251 = vpack.c.b16 %v217, %v216
    %v252 = vpack.c.b16 %v219, %v218
    %v253 = vpack.c.b16 %v221, %v220
    %v258 = vunpack.c.l.b16 %v90
    %v259 = vunpack.c.l.b16 %v91
    %v260 = vunpack.c.l.b16 %v92
    %v261 = vunpack.c.l.b16 %v93
    %v262 = vpack.c.b16 %v259, %v258
    %v263 = vpack.c.b16 %v261, %v260
    %vm265 = vcmask 220160
    %v267 = vsel %vm265, %v222, 0
    %v270 = vsel %vm265, %v223, 0
    %v273 = vsel %vm265, %v224, 0
    %v276 = vsel %vm265, %v225, 0
    %v279 = vsel %vm265, %v226, 0
    %v282 = vsel %vm265, %v227, 0
    %v285 = vsel %vm265, %v228, 0
    %v288 = vsel %vm265, %v229, 0
    %v291 = vsel %vm265, %v230, 0
    %v294 = vsel %vm265, %v231, 0
    %v297 = vsel %vm265, %v232, 0
    %v300 = vsel %vm265, %v233, 0
    %v303 = vsel %vm265, %v234, 0
    %v306 = vsel %vm265, %v235, 0
    %v309 = vsel %vm265, %v236, 0
    %v312 = vsel %vm265, %v237, 0
    %v315 = vsel %vm265, %v238, 0
    %v318 = vsel %vm265, %v239, 0
    %v321 = vsel %vm265, %v240, 0
    %v324 = vsel %vm265, %v241, 0
    %v327 = vsel %vm265, %v242, 0
    %v330 = vsel %vm265, %v243, 0
    %v333 = vsel %vm265, %v244, 0
    %v336 = vsel %vm265, %v245, 0
    %v339 = vsel %vm265, %v246, 0
    %v342 = vsel %vm265, %v247, 0
    %v345 = vsel %vm265, %v248, 0
    %v348 = vsel %vm265, %v249, 0
    %v351 = vsel %vm265, %v250, 0
    %v354 = vsel %vm265, %v251, 0
    %v357 = vsel %vm265, %v252, 0
    %v360 = vsel %vm265, %v253, 0
    %vm362 = vcmask 1044480
    %vm363 = vcmask 1045504
    %v364 = vsel %vm362, 4294967295, 65535
    %v365 = vsel %vm363, %v364, 0
    %v367 = vand.u32 %v263, %v365
    %369 = vmatpush.bf16.msra.mxu0 0
    %370 = vmatpush.bf16.msra.mxu0 0
    %371 = vmatpush.bf16.msra.mxu0 0
    %372 = vmatpush.bf16.msra.mxu0 0
    %373 = vmatpush.bf16.msra.mxu0 0
    %374 = vmatpush.bf16.msra.mxu0 0
    %375 = vmatpush.bf16.msra.mxu0 %v367
    %376 = vmatpush.bf16.msra.mxu0 %v262
    %377 = vmatmul.bf16.gmra.mxu0 %v267
    %v378 = vpop.f32.mrf.mxu0
    %v379 = vadd.f32 0.0, %v378
    %v380 = vpop.f32.mrf.mxu0
    %v381 = vadd.f32 0.0, %v380
    %382 = vmatmul.bf16.gmra.mxu0 %v270
    %v383 = vpop.f32.mrf.mxu0
    %v384 = vadd.f32 0.0, %v383
    %v385 = vpop.f32.mrf.mxu0
    %v386 = vadd.f32 0.0, %v385
    %387 = vmatmul.bf16.gmra.mxu0 %v273
    %v388 = vpop.f32.mrf.mxu0
    %v389 = vadd.f32 0.0, %v388
    %v390 = vpop.f32.mrf.mxu0
    %v391 = vadd.f32 0.0, %v390
    %392 = vmatmul.bf16.gmra.mxu0 %v276
    %v393 = vpop.f32.mrf.mxu0
    %v394 = vadd.f32 0.0, %v393
    %v395 = vpop.f32.mrf.mxu0
    %v396 = vadd.f32 0.0, %v395
    %397 = vmatmul.bf16.gmra.mxu0 %v279
    %v398 = vpop.f32.mrf.mxu0
    %v399 = vadd.f32 0.0, %v398
    %v400 = vpop.f32.mrf.mxu0
    %v401 = vadd.f32 0.0, %v400
    %402 = vmatmul.bf16.gmra.mxu0 %v282
    %v403 = vpop.f32.mrf.mxu0
    %v404 = vadd.f32 0.0, %v403
    %v405 = vpop.f32.mrf.mxu0
    %v406 = vadd.f32 0.0, %v405
    %407 = vmatmul.bf16.gmra.mxu0 %v285
    %v408 = vpop.f32.mrf.mxu0
    %v409 = vadd.f32 0.0, %v408
    %v410 = vpop.f32.mrf.mxu0
    %v411 = vadd.f32 0.0, %v410
    %412 = vmatmul.bf16.gmra.mxu0 %v288
    %v413 = vpop.f32.mrf.mxu0
    %v414 = vadd.f32 0.0, %v413
    %v415 = vpop.f32.mrf.mxu0
    %v416 = vadd.f32 0.0, %v415
    %417 = vmatmul.bf16.gmra.mxu0 %v291
    %v418 = vpop.f32.mrf.mxu0
    %v419 = vadd.f32 0.0, %v418
    %v420 = vpop.f32.mrf.mxu0
    %v421 = vadd.f32 0.0, %v420
    %422 = vmatmul.bf16.gmra.mxu0 %v294
    %v423 = vpop.f32.mrf.mxu0
    %v424 = vadd.f32 0.0, %v423
    %v425 = vpop.f32.mrf.mxu0
    %v426 = vadd.f32 0.0, %v425
    %427 = vmatmul.bf16.gmra.mxu0 %v297
    %v428 = vpop.f32.mrf.mxu0
    %v429 = vadd.f32 0.0, %v428
    %v430 = vpop.f32.mrf.mxu0
    %v431 = vadd.f32 0.0, %v430
    %432 = vmatmul.bf16.gmra.mxu0 %v300
    %v433 = vpop.f32.mrf.mxu0
    %v434 = vadd.f32 0.0, %v433
    %v435 = vpop.f32.mrf.mxu0
    %v436 = vadd.f32 0.0, %v435
    %437 = vmatmul.bf16.gmra.mxu0 %v303
    %v438 = vpop.f32.mrf.mxu0
    %v439 = vadd.f32 0.0, %v438
    %v440 = vpop.f32.mrf.mxu0
    %v441 = vadd.f32 0.0, %v440
    %442 = vmatmul.bf16.gmra.mxu0 %v306
    %v443 = vpop.f32.mrf.mxu0
    %v444 = vadd.f32 0.0, %v443
    %v445 = vpop.f32.mrf.mxu0
    %v446 = vadd.f32 0.0, %v445
    %447 = vmatmul.bf16.gmra.mxu0 %v309
    %v448 = vpop.f32.mrf.mxu0
    %v449 = vadd.f32 0.0, %v448
    %v450 = vpop.f32.mrf.mxu0
    %v451 = vadd.f32 0.0, %v450
    %452 = vmatmul.bf16.gmra.mxu0 %v312
    %v453 = vpop.f32.mrf.mxu0
    %v454 = vadd.f32 0.0, %v453
    %v455 = vpop.f32.mrf.mxu0
    %v456 = vadd.f32 0.0, %v455
    %457 = vmatmul.bf16.gmra.mxu0 %v315
    %v458 = vpop.f32.mrf.mxu0
    %v459 = vadd.f32 0.0, %v458
    %v460 = vpop.f32.mrf.mxu0
    %v461 = vadd.f32 0.0, %v460
    %462 = vmatmul.bf16.gmra.mxu0 %v318
    %v463 = vpop.f32.mrf.mxu0
    %v464 = vadd.f32 0.0, %v463
    %v465 = vpop.f32.mrf.mxu0
    %v466 = vadd.f32 0.0, %v465
    %467 = vmatmul.bf16.gmra.mxu0 %v321
    %v468 = vpop.f32.mrf.mxu0
    %v469 = vadd.f32 0.0, %v468
    %v470 = vpop.f32.mrf.mxu0
    %v471 = vadd.f32 0.0, %v470
    %472 = vmatmul.bf16.gmra.mxu0 %v324
    %v473 = vpop.f32.mrf.mxu0
    %v474 = vadd.f32 0.0, %v473
    %v475 = vpop.f32.mrf.mxu0
    %v476 = vadd.f32 0.0, %v475
    %477 = vmatmul.bf16.gmra.mxu0 %v327
    %v478 = vpop.f32.mrf.mxu0
    %v479 = vadd.f32 0.0, %v478
    %v480 = vpop.f32.mrf.mxu0
    %v481 = vadd.f32 0.0, %v480
    %482 = vmatmul.bf16.gmra.mxu0 %v330
    %v483 = vpop.f32.mrf.mxu0
    %v484 = vadd.f32 0.0, %v483
    %v485 = vpop.f32.mrf.mxu0
    %v486 = vadd.f32 0.0, %v485
    %487 = vmatmul.bf16.gmra.mxu0 %v333
    %v488 = vpop.f32.mrf.mxu0
    %v489 = vadd.f32 0.0, %v488
    %v490 = vpop.f32.mrf.mxu0
    %v491 = vadd.f32 0.0, %v490
    %492 = vmatmul.bf16.gmra.mxu0 %v336
    %v493 = vpop.f32.mrf.mxu0
    %v494 = vadd.f32 0.0, %v493
    %v495 = vpop.f32.mrf.mxu0
    %v496 = vadd.f32 0.0, %v495
    %497 = vmatmul.bf16.gmra.mxu0 %v339
    %v498 = vpop.f32.mrf.mxu0
    %v499 = vadd.f32 0.0, %v498
    %v500 = vpop.f32.mrf.mxu0
    %v501 = vadd.f32 0.0, %v500
    %502 = vmatmul.bf16.gmra.mxu0 %v342
    %v503 = vpop.f32.mrf.mxu0
    %v504 = vadd.f32 0.0, %v503
    %v505 = vpop.f32.mrf.mxu0
    %v506 = vadd.f32 0.0, %v505
    %507 = vmatmul.bf16.gmra.mxu0 %v345
    %v508 = vpop.f32.mrf.mxu0
    %v509 = vadd.f32 0.0, %v508
    %v510 = vpop.f32.mrf.mxu0
    %v511 = vadd.f32 0.0, %v510
    %512 = vmatmul.bf16.gmra.mxu0 %v348
    %v513 = vpop.f32.mrf.mxu0
    %v514 = vadd.f32 0.0, %v513
    %v515 = vpop.f32.mrf.mxu0
    %v516 = vadd.f32 0.0, %v515
    %517 = vmatmul.bf16.gmra.mxu0 %v351
    %v518 = vpop.f32.mrf.mxu0
    %v519 = vadd.f32 0.0, %v518
    %v520 = vpop.f32.mrf.mxu0
    %v521 = vadd.f32 0.0, %v520
    %522 = vmatmul.bf16.gmra.mxu0 %v354
    %v523 = vpop.f32.mrf.mxu0
    %v524 = vadd.f32 0.0, %v523
    %v525 = vpop.f32.mrf.mxu0
    %v526 = vadd.f32 0.0, %v525
    %527 = vmatmul.bf16.gmra.mxu0 %v357
    %v528 = vpop.f32.mrf.mxu0
    %v529 = vadd.f32 0.0, %v528
    %v530 = vpop.f32.mrf.mxu0
    %v531 = vadd.f32 0.0, %v530
    %532 = vmatmul.bf16.gmra.mxu0 %v360
    %v533 = vpop.f32.mrf.mxu0
    %v534 = vadd.f32 0.0, %v533
    %v535 = vpop.f32.mrf.mxu0
    %v536 = vadd.f32 0.0, %v535
    %537 = vdwg.mxu0
    %vm538 = vcmask 261120
    %v539 = vsel %vm538, %v379, 0.0
    %v540 = vsel %vm538, %v381, 0.0
    %v541 = vadd.f32 %v539, %v540
    %v542 = vsel %vm538, %v384, 0.0
    %v543 = vadd.f32 %v541, %v542
    %v544 = vsel %vm538, %v386, 0.0
    %v545 = vadd.f32 %v543, %v544
    %v546 = vsel %vm538, %v389, 0.0
    %v547 = vadd.f32 %v545, %v546
    %v548 = vsel %vm538, %v391, 0.0
    %v549 = vadd.f32 %v547, %v548
    %v550 = vsel %vm538, %v394, 0.0
    %v551 = vadd.f32 %v549, %v550
    %v552 = vsel %vm538, %v396, 0.0
    %v553 = vadd.f32 %v551, %v552
    %v554 = vsel %vm538, %v399, 0.0
    %v555 = vadd.f32 %v553, %v554
    %v556 = vsel %vm538, %v401, 0.0
    %v557 = vadd.f32 %v555, %v556
    %v558 = vsel %vm538, %v404, 0.0
    %v559 = vadd.f32 %v557, %v558
    %v560 = vsel %vm538, %v406, 0.0
    %v561 = vadd.f32 %v559, %v560
    %v562 = vsel %vm538, %v409, 0.0
    %v563 = vadd.f32 %v561, %v562
    %v564 = vsel %vm538, %v411, 0.0
    %v565 = vadd.f32 %v563, %v564
    %v566 = vsel %vm538, %v414, 0.0
    %v567 = vadd.f32 %v565, %v566
    %v568 = vsel %vm538, %v416, 0.0
    %v569 = vadd.f32 %v567, %v568
    %v570 = vsel %vm538, %v419, 0.0
    %v571 = vadd.f32 %v569, %v570
    %v572 = vsel %vm538, %v421, 0.0
    %v573 = vadd.f32 %v571, %v572
    %v574 = vsel %vm538, %v424, 0.0
    %v575 = vadd.f32 %v573, %v574
    %v576 = vsel %vm538, %v426, 0.0
    %v577 = vadd.f32 %v575, %v576
    %v578 = vsel %vm538, %v429, 0.0
    %v579 = vadd.f32 %v577, %v578
    %v580 = vsel %vm538, %v431, 0.0
    %v581 = vadd.f32 %v579, %v580
    %v582 = vsel %vm538, %v434, 0.0
    %v583 = vadd.f32 %v581, %v582
    %v584 = vsel %vm538, %v436, 0.0
    %v585 = vadd.f32 %v583, %v584
    %v586 = vsel %vm538, %v439, 0.0
    %v587 = vadd.f32 %v585, %v586
    %v588 = vsel %vm538, %v441, 0.0
    %v589 = vadd.f32 %v587, %v588
    %v590 = vsel %vm538, %v444, 0.0
    %v591 = vadd.f32 %v589, %v590
    %v592 = vsel %vm538, %v446, 0.0
    %v593 = vadd.f32 %v591, %v592
    %v594 = vsel %vm538, %v449, 0.0
    %v595 = vadd.f32 %v593, %v594
    %v596 = vsel %vm538, %v451, 0.0
    %v597 = vadd.f32 %v595, %v596
    %v598 = vsel %vm538, %v454, 0.0
    %v599 = vadd.f32 %v597, %v598
    %v600 = vsel %vm538, %v456, 0.0
    %v601 = vadd.f32 %v599, %v600
    %v602 = vsel %vm538, %v459, 0.0
    %v603 = vadd.f32 %v601, %v602
    %v604 = vsel %vm538, %v461, 0.0
    %v605 = vadd.f32 %v603, %v604
    %v606 = vsel %vm538, %v464, 0.0
    %v607 = vadd.f32 %v605, %v606
    %v608 = vsel %vm538, %v466, 0.0
    %v609 = vadd.f32 %v607, %v608
    %v610 = vsel %vm538, %v469, 0.0
    %v611 = vadd.f32 %v609, %v610
    %v612 = vsel %vm538, %v471, 0.0
    %v613 = vadd.f32 %v611, %v612
    %v614 = vsel %vm538, %v474, 0.0
    %v615 = vadd.f32 %v613, %v614
    %v616 = vsel %vm538, %v476, 0.0
    %v617 = vadd.f32 %v615, %v616
    %v618 = vsel %vm538, %v479, 0.0
    %v619 = vadd.f32 %v617, %v618
    %v620 = vsel %vm538, %v481, 0.0
    %v621 = vadd.f32 %v619, %v620
    %v622 = vsel %vm538, %v484, 0.0
    %v623 = vadd.f32 %v621, %v622
    %v624 = vsel %vm538, %v486, 0.0
    %v625 = vadd.f32 %v623, %v624
    %v626 = vsel %vm538, %v489, 0.0
    %v627 = vadd.f32 %v625, %v626
    %v628 = vsel %vm538, %v491, 0.0
    %v629 = vadd.f32 %v627, %v628
    %v630 = vsel %vm538, %v494, 0.0
    %v631 = vadd.f32 %v629, %v630
    %v632 = vsel %vm538, %v496, 0.0
    %v633 = vadd.f32 %v631, %v632
    %v634 = vsel %vm538, %v499, 0.0
    %v635 = vadd.f32 %v633, %v634
    %v636 = vsel %vm538, %v501, 0.0
    %v637 = vadd.f32 %v635, %v636
    %v638 = vsel %vm538, %v504, 0.0
    %v639 = vadd.f32 %v637, %v638
    %v640 = vsel %vm538, %v506, 0.0
    %v641 = vadd.f32 %v639, %v640
    %v642 = vsel %vm538, %v509, 0.0
    %v643 = vadd.f32 %v641, %v642
    %v644 = vsel %vm538, %v511, 0.0
    %v645 = vadd.f32 %v643, %v644
    %v646 = vsel %vm538, %v514, 0.0
    %v647 = vadd.f32 %v645, %v646
    %v648 = vsel %vm538, %v516, 0.0
    %v649 = vadd.f32 %v647, %v648
    %v650 = vsel %vm538, %v519, 0.0
    %v651 = vadd.f32 %v649, %v650
    %v652 = vsel %vm538, %v521, 0.0
    %v653 = vadd.f32 %v651, %v652
    %v654 = vsel %vm538, %v524, 0.0
    %v655 = vadd.f32 %v653, %v654
    %v656 = vsel %vm538, %v526, 0.0
    %v657 = vadd.f32 %v655, %v656
    %v658 = vsel %vm538, %v529, 0.0
    %v659 = vadd.f32 %v657, %v658
    %v660 = vsel %vm538, %v531, 0.0
    %v661 = vadd.f32 %v659, %v660
    %v662 = vsel %vm538, %v534, 0.0
    %v663 = vadd.f32 %v661, %v662
    %v664 = vsel %vm538, %v536, 0.0
    %v665 = vadd.f32 %v663, %v664
    %v666 = vrot.slane %v665, 4
    %v667 = vadd.f32 %v665, %v666
    %v668 = vrot.slane %v667, 2
    %v669 = vadd.f32 %v667, %v668
    %v670 = vrot.slane %v669, 1
    %v671 = vadd.f32 %v669, %v670
    %v672 = vmul.f32 %v379, %v379
    %v673 = vmul.f32 %v381, %v381
    %v674 = vmul.f32 %v384, %v384
    %v675 = vmul.f32 %v386, %v386
    %v676 = vmul.f32 %v389, %v389
    %v677 = vmul.f32 %v391, %v391
    %v678 = vmul.f32 %v394, %v394
    %v679 = vmul.f32 %v396, %v396
    %v680 = vmul.f32 %v399, %v399
    %v681 = vmul.f32 %v401, %v401
    %v682 = vmul.f32 %v404, %v404
    %v683 = vmul.f32 %v406, %v406
    %v684 = vmul.f32 %v409, %v409
    %v685 = vmul.f32 %v411, %v411
    %v686 = vmul.f32 %v414, %v414
    %v687 = vmul.f32 %v416, %v416
    %v688 = vmul.f32 %v419, %v419
    %v689 = vmul.f32 %v421, %v421
    %v690 = vmul.f32 %v424, %v424
    %v691 = vmul.f32 %v426, %v426
    %v692 = vmul.f32 %v429, %v429
    %v693 = vmul.f32 %v431, %v431
    %v694 = vmul.f32 %v434, %v434
    %v695 = vmul.f32 %v436, %v436
    %v696 = vmul.f32 %v439, %v439
    %v697 = vmul.f32 %v441, %v441
    %v698 = vmul.f32 %v444, %v444
    %v699 = vmul.f32 %v446, %v446
    %v700 = vmul.f32 %v449, %v449
    %v701 = vmul.f32 %v451, %v451
    %v702 = vmul.f32 %v454, %v454
    %v703 = vmul.f32 %v456, %v456
    %v704 = vmul.f32 %v459, %v459
    %v705 = vmul.f32 %v461, %v461
    %v706 = vmul.f32 %v464, %v464
    %v707 = vmul.f32 %v466, %v466
    %v708 = vmul.f32 %v469, %v469
    %v709 = vmul.f32 %v471, %v471
    %v710 = vmul.f32 %v474, %v474
    %v711 = vmul.f32 %v476, %v476
    %v712 = vmul.f32 %v479, %v479
    %v713 = vmul.f32 %v481, %v481
    %v714 = vmul.f32 %v484, %v484
    %v715 = vmul.f32 %v486, %v486
    %v716 = vmul.f32 %v489, %v489
    %v717 = vmul.f32 %v491, %v491
    %v718 = vmul.f32 %v494, %v494
    %v719 = vmul.f32 %v496, %v496
    %v720 = vmul.f32 %v499, %v499
    %v721 = vmul.f32 %v501, %v501
    %v722 = vmul.f32 %v504, %v504
    %v723 = vmul.f32 %v506, %v506
    %v724 = vmul.f32 %v509, %v509
    %v725 = vmul.f32 %v511, %v511
    %v726 = vmul.f32 %v514, %v514
    %v727 = vmul.f32 %v516, %v516
    %v728 = vmul.f32 %v519, %v519
    %v729 = vmul.f32 %v521, %v521
    %v730 = vmul.f32 %v524, %v524
    %v731 = vmul.f32 %v526, %v526
    %v732 = vmul.f32 %v529, %v529
    %v733 = vmul.f32 %v531, %v531
    %v734 = vmul.f32 %v534, %v534
    %v735 = vmul.f32 %v536, %v536
    %v736 = vsel %vm538, %v672, 0.0
    %v737 = vsel %vm538, %v673, 0.0
    %v738 = vadd.f32 %v736, %v737
    %v739 = vsel %vm538, %v674, 0.0
    %v740 = vadd.f32 %v738, %v739
    %v741 = vsel %vm538, %v675, 0.0
    %v742 = vadd.f32 %v740, %v741
    %v743 = vsel %vm538, %v676, 0.0
    %v744 = vadd.f32 %v742, %v743
    %v745 = vsel %vm538, %v677, 0.0
    %v746 = vadd.f32 %v744, %v745
    %v747 = vsel %vm538, %v678, 0.0
    %v748 = vadd.f32 %v746, %v747
    %v749 = vsel %vm538, %v679, 0.0
    %v750 = vadd.f32 %v748, %v749
    %v751 = vsel %vm538, %v680, 0.0
    %v752 = vadd.f32 %v750, %v751
    %v753 = vsel %vm538, %v681, 0.0
    %v754 = vadd.f32 %v752, %v753
    %v755 = vsel %vm538, %v682, 0.0
    %v756 = vadd.f32 %v754, %v755
    %v757 = vsel %vm538, %v683, 0.0
    %v758 = vadd.f32 %v756, %v757
    %v759 = vsel %vm538, %v684, 0.0
    %v760 = vadd.f32 %v758, %v759
    %v761 = vsel %vm538, %v685, 0.0
    %v762 = vadd.f32 %v760, %v761
    %v763 = vsel %vm538, %v686, 0.0
    %v764 = vadd.f32 %v762, %v763
    %v765 = vsel %vm538, %v687, 0.0
    %v766 = vadd.f32 %v764, %v765
    %v767 = vsel %vm538, %v688, 0.0
    %v768 = vadd.f32 %v766, %v767
    %v769 = vsel %vm538, %v689, 0.0
    %v770 = vadd.f32 %v768, %v769
    %v771 = vsel %vm538, %v690, 0.0
    %v772 = vadd.f32 %v770, %v771
    %v773 = vsel %vm538, %v691, 0.0
    %v774 = vadd.f32 %v772, %v773
    %v775 = vsel %vm538, %v692, 0.0
    %v776 = vadd.f32 %v774, %v775
    %v777 = vsel %vm538, %v693, 0.0
    %v778 = vadd.f32 %v776, %v777
    %v779 = vsel %vm538, %v694, 0.0
    %v780 = vadd.f32 %v778, %v779
    %v781 = vsel %vm538, %v695, 0.0
    %v782 = vadd.f32 %v780, %v781
    %v783 = vsel %vm538, %v696, 0.0
    %v784 = vadd.f32 %v782, %v783
    %v785 = vsel %vm538, %v697, 0.0
    %v786 = vadd.f32 %v784, %v785
    %v787 = vsel %vm538, %v698, 0.0
    %v788 = vadd.f32 %v786, %v787
    %v789 = vsel %vm538, %v699, 0.0
    %v790 = vadd.f32 %v788, %v789
    %v791 = vsel %vm538, %v700, 0.0
    %v792 = vadd.f32 %v790, %v791
    %v793 = vsel %vm538, %v701, 0.0
    %v794 = vadd.f32 %v792, %v793
    %v795 = vsel %vm538, %v702, 0.0
    %v796 = vadd.f32 %v794, %v795
    %v797 = vsel %vm538, %v703, 0.0
    %v798 = vadd.f32 %v796, %v797
    %v799 = vsel %vm538, %v704, 0.0
    %v800 = vadd.f32 %v798, %v799
    %v801 = vsel %vm538, %v705, 0.0
    %v802 = vadd.f32 %v800, %v801
    %v803 = vsel %vm538, %v706, 0.0
    %v804 = vadd.f32 %v802, %v803
    %v805 = vsel %vm538, %v707, 0.0
    %v806 = vadd.f32 %v804, %v805
    %v807 = vsel %vm538, %v708, 0.0
    %v808 = vadd.f32 %v806, %v807
    %v809 = vsel %vm538, %v709, 0.0
    %v810 = vadd.f32 %v808, %v809
    %v811 = vsel %vm538, %v710, 0.0
    %v812 = vadd.f32 %v810, %v811
    %v813 = vsel %vm538, %v711, 0.0
    %v814 = vadd.f32 %v812, %v813
    %v815 = vsel %vm538, %v712, 0.0
    %v816 = vadd.f32 %v814, %v815
    %v817 = vsel %vm538, %v713, 0.0
    %v818 = vadd.f32 %v816, %v817
    %v819 = vsel %vm538, %v714, 0.0
    %v820 = vadd.f32 %v818, %v819
    %v821 = vsel %vm538, %v715, 0.0
    %v822 = vadd.f32 %v820, %v821
    %v823 = vsel %vm538, %v716, 0.0
    %v824 = vadd.f32 %v822, %v823
    %v825 = vsel %vm538, %v717, 0.0
    %v826 = vadd.f32 %v824, %v825
    %v827 = vsel %vm538, %v718, 0.0
    %v828 = vadd.f32 %v826, %v827
    %v829 = vsel %vm538, %v719, 0.0
    %v830 = vadd.f32 %v828, %v829
    %v831 = vsel %vm538, %v720, 0.0
    %v832 = vadd.f32 %v830, %v831
    %v833 = vsel %vm538, %v721, 0.0
    %v834 = vadd.f32 %v832, %v833
    %v835 = vsel %vm538, %v722, 0.0
    %v836 = vadd.f32 %v834, %v835
    %v837 = vsel %vm538, %v723, 0.0
    %v838 = vadd.f32 %v836, %v837
    %v839 = vsel %vm538, %v724, 0.0
    %v840 = vadd.f32 %v838, %v839
    %v841 = vsel %vm538, %v725, 0.0
    %v842 = vadd.f32 %v840, %v841
    %v843 = vsel %vm538, %v726, 0.0
    %v844 = vadd.f32 %v842, %v843
    %v845 = vsel %vm538, %v727, 0.0
    %v846 = vadd.f32 %v844, %v845
    %v847 = vsel %vm538, %v728, 0.0
    %v848 = vadd.f32 %v846, %v847
    %v849 = vsel %vm538, %v729, 0.0
    %v850 = vadd.f32 %v848, %v849
    %v851 = vsel %vm538, %v730, 0.0
    %v852 = vadd.f32 %v850, %v851
    %v853 = vsel %vm538, %v731, 0.0
    %v854 = vadd.f32 %v852, %v853
    %v855 = vsel %vm538, %v732, 0.0
    %v856 = vadd.f32 %v854, %v855
    %v857 = vsel %vm538, %v733, 0.0
    %v858 = vadd.f32 %v856, %v857
    %v859 = vsel %vm538, %v734, 0.0
    %v860 = vadd.f32 %v858, %v859
    %v861 = vsel %vm538, %v735, 0.0
    %v862 = vadd.f32 %v860, %v861
    %v863 = vrot.slane %v862, 4
    %v864 = vadd.f32 %v862, %v863
    %v865 = vrot.slane %v864, 2
    %v866 = vadd.f32 %v864, %v865
    %v867 = vrot.slane %v866, 1
    %v868 = vadd.f32 %v866, %v867
    %v869 = vmul.f32 %v671, 0.001953125
    %v870 = vmul.f32 %v868, 0.001953125
    %v871 = vmul.f32 %v869, %v869
    %v872 = vsub.f32 %v870, %v871
    %v873 = vadd.f32 %v872, 1e-05
    %v874 = vrsqrt.pop %v873
    %v875 = vmul.f32 %v874, %v873
    %v876 = vmul.f32 %v875, %v874
    %v877 = vmul.f32 0.5, %v876
    %v878 = vsub.f32 1.5, %v877
    %v879 = vmul.f32 %v874, %v878
    %vm880 = vweird.f32 %v873
    %vm881 = vweird.f32 %v874
    %vm882 = vmor %vm880, %vm881
    %v883 = vsel %vm882, %v874, %v879
    %v884 = vmul.f32 %v25, %v883
    %v885 = vsub.f32 %v379, %v869
    %v886 = vsub.f32 %v381, %v869
    %v887 = vsub.f32 %v384, %v869
    %v888 = vsub.f32 %v386, %v869
    %v889 = vsub.f32 %v389, %v869
    %v890 = vsub.f32 %v391, %v869
    %v891 = vsub.f32 %v394, %v869
    %v892 = vsub.f32 %v396, %v869
    %v893 = vsub.f32 %v399, %v869
    %v894 = vsub.f32 %v401, %v869
    %v895 = vsub.f32 %v404, %v869
    %v896 = vsub.f32 %v406, %v869
    %v897 = vsub.f32 %v409, %v869
    %v898 = vsub.f32 %v411, %v869
    %v899 = vsub.f32 %v414, %v869
    %v900 = vsub.f32 %v416, %v869
    %v901 = vsub.f32 %v419, %v869
    %v902 = vsub.f32 %v421, %v869
    %v903 = vsub.f32 %v424, %v869
    %v904 = vsub.f32 %v426, %v869
    %v905 = vsub.f32 %v429, %v869
    %v906 = vsub.f32 %v431, %v869
    %v907 = vsub.f32 %v434, %v869
    %v908 = vsub.f32 %v436, %v869
    %v909 = vsub.f32 %v439, %v869
    %v910 = vsub.f32 %v441, %v869
    %v911 = vsub.f32 %v444, %v869
    %v912 = vsub.f32 %v446, %v869
    %v913 = vsub.f32 %v449, %v869
    %v914 = vsub.f32 %v451, %v869
    %v915 = vsub.f32 %v454, %v869
    %v916 = vsub.f32 %v456, %v869
    %v917 = vsub.f32 %v459, %v869
    %v918 = vsub.f32 %v461, %v869
    %v919 = vsub.f32 %v464, %v869
    %v920 = vsub.f32 %v466, %v869
    %v921 = vsub.f32 %v469, %v869
    %v922 = vsub.f32 %v471, %v869
    %v923 = vsub.f32 %v474, %v869
    %v924 = vsub.f32 %v476, %v869
    %v925 = vsub.f32 %v479, %v869
    %v926 = vsub.f32 %v481, %v869
    %v927 = vsub.f32 %v484, %v869
    %v928 = vsub.f32 %v486, %v869
    %v929 = vsub.f32 %v489, %v869
    %v930 = vsub.f32 %v491, %v869
    %v931 = vsub.f32 %v494, %v869
    %v932 = vsub.f32 %v496, %v869
    %v933 = vsub.f32 %v499, %v869
    %v934 = vsub.f32 %v501, %v869
    %v935 = vsub.f32 %v504, %v869
    %v936 = vsub.f32 %v506, %v869
    %v937 = vsub.f32 %v509, %v869
    %v938 = vsub.f32 %v511, %v869
    %v939 = vsub.f32 %v514, %v869
    %v940 = vsub.f32 %v516, %v869
    %v941 = vsub.f32 %v519, %v869
    %v942 = vsub.f32 %v521, %v869
    %v943 = vsub.f32 %v524, %v869
    %v944 = vsub.f32 %v526, %v869
    %v945 = vsub.f32 %v529, %v869
    %v946 = vsub.f32 %v531, %v869
    %v947 = vsub.f32 %v534, %v869
    %v948 = vsub.f32 %v536, %v869
    %v949 = vperm.slane %v884, 0
    %v950 = vmul.f32 %v885, %v949
    %v951 = vmul.f32 %v886, %v949
    %v952 = vmul.f32 %v887, %v949
    %v953 = vmul.f32 %v888, %v949
    %v954 = vmul.f32 %v889, %v949
    %v955 = vmul.f32 %v890, %v949
    %v956 = vmul.f32 %v891, %v949
    %v957 = vmul.f32 %v892, %v949
    %v958 = vmul.f32 %v893, %v949
    %v959 = vmul.f32 %v894, %v949
    %v960 = vmul.f32 %v895, %v949
    %v961 = vmul.f32 %v896, %v949
    %v962 = vmul.f32 %v897, %v949
    %v963 = vmul.f32 %v898, %v949
    %v964 = vmul.f32 %v899, %v949
    %v965 = vmul.f32 %v900, %v949
    %v966 = vmul.f32 %v901, %v949
    %v967 = vmul.f32 %v902, %v949
    %v968 = vmul.f32 %v903, %v949
    %v969 = vmul.f32 %v904, %v949
    %v970 = vmul.f32 %v905, %v949
    %v971 = vmul.f32 %v906, %v949
    %v972 = vmul.f32 %v907, %v949
    %v973 = vmul.f32 %v908, %v949
    %v974 = vmul.f32 %v909, %v949
    %v975 = vmul.f32 %v910, %v949
    %v976 = vmul.f32 %v911, %v949
    %v977 = vmul.f32 %v912, %v949
    %v978 = vmul.f32 %v913, %v949
    %v979 = vmul.f32 %v914, %v949
    %v980 = vmul.f32 %v915, %v949
    %v981 = vmul.f32 %v916, %v949
    %v982 = vmul.f32 %v917, %v949
    %v983 = vmul.f32 %v918, %v949
    %v984 = vmul.f32 %v919, %v949
    %v985 = vmul.f32 %v920, %v949
    %v986 = vmul.f32 %v921, %v949
    %v987 = vmul.f32 %v922, %v949
    %v988 = vmul.f32 %v923, %v949
    %v989 = vmul.f32 %v924, %v949
    %v990 = vmul.f32 %v925, %v949
    %v991 = vmul.f32 %v926, %v949
    %v992 = vmul.f32 %v927, %v949
    %v993 = vmul.f32 %v928, %v949
    %v994 = vmul.f32 %v929, %v949
    %v995 = vmul.f32 %v930, %v949
    %v996 = vmul.f32 %v931, %v949
    %v997 = vmul.f32 %v932, %v949
    %v998 = vmul.f32 %v933, %v949
    %v999 = vmul.f32 %v934, %v949
    %v1000 = vmul.f32 %v935, %v949
    %v1001 = vmul.f32 %v936, %v949
    %v1002 = vmul.f32 %v937, %v949
    %v1003 = vmul.f32 %v938, %v949
    %v1004 = vmul.f32 %v939, %v949
    %v1005 = vmul.f32 %v940, %v949
    %v1006 = vmul.f32 %v941, %v949
    %v1007 = vmul.f32 %v942, %v949
    %v1008 = vmul.f32 %v943, %v949
    %v1009 = vmul.f32 %v944, %v949
    %v1010 = vmul.f32 %v945, %v949
    %v1011 = vmul.f32 %v946, %v949
    %v1012 = vmul.f32 %v947, %v949
    %v1013 = vmul.f32 %v948, %v949
    %v1014 = vperm.slane %v25, 1
    %v1015 = vadd.f32 %v950, %v1014
    %v1016 = vadd.f32 %v951, %v1014
    %v1017 = vadd.f32 %v952, %v1014
    %v1018 = vadd.f32 %v953, %v1014
    %v1019 = vadd.f32 %v954, %v1014
    %v1020 = vadd.f32 %v955, %v1014
    %v1021 = vadd.f32 %v956, %v1014
    %v1022 = vadd.f32 %v957, %v1014
    %v1023 = vadd.f32 %v958, %v1014
    %v1024 = vadd.f32 %v959, %v1014
    %v1025 = vadd.f32 %v960, %v1014
    %v1026 = vadd.f32 %v961, %v1014
    %v1027 = vadd.f32 %v962, %v1014
    %v1028 = vadd.f32 %v963, %v1014
    %v1029 = vadd.f32 %v964, %v1014
    %v1030 = vadd.f32 %v965, %v1014
    %v1031 = vadd.f32 %v966, %v1014
    %v1032 = vadd.f32 %v967, %v1014
    %v1033 = vadd.f32 %v968, %v1014
    %v1034 = vadd.f32 %v969, %v1014
    %v1035 = vadd.f32 %v970, %v1014
    %v1036 = vadd.f32 %v971, %v1014
    %v1037 = vadd.f32 %v972, %v1014
    %v1038 = vadd.f32 %v973, %v1014
    %v1039 = vadd.f32 %v974, %v1014
    %v1040 = vadd.f32 %v975, %v1014
    %v1041 = vadd.f32 %v976, %v1014
    %v1042 = vadd.f32 %v977, %v1014
    %v1043 = vadd.f32 %v978, %v1014
    %v1044 = vadd.f32 %v979, %v1014
    %v1045 = vadd.f32 %v980, %v1014
    %v1046 = vadd.f32 %v981, %v1014
    %v1047 = vadd.f32 %v982, %v1014
    %v1048 = vadd.f32 %v983, %v1014
    %v1049 = vadd.f32 %v984, %v1014
    %v1050 = vadd.f32 %v985, %v1014
    %v1051 = vadd.f32 %v986, %v1014
    %v1052 = vadd.f32 %v987, %v1014
    %v1053 = vadd.f32 %v988, %v1014
    %v1054 = vadd.f32 %v989, %v1014
    %v1055 = vadd.f32 %v990, %v1014
    %v1056 = vadd.f32 %v991, %v1014
    %v1057 = vadd.f32 %v992, %v1014
    %v1058 = vadd.f32 %v993, %v1014
    %v1059 = vadd.f32 %v994, %v1014
    %v1060 = vadd.f32 %v995, %v1014
    %v1061 = vadd.f32 %v996, %v1014
    %v1062 = vadd.f32 %v997, %v1014
    %v1063 = vadd.f32 %v998, %v1014
    %v1064 = vadd.f32 %v999, %v1014
    %v1065 = vadd.f32 %v1000, %v1014
    %v1066 = vadd.f32 %v1001, %v1014
    %v1067 = vadd.f32 %v1002, %v1014
    %v1068 = vadd.f32 %v1003, %v1014
    %v1069 = vadd.f32 %v1004, %v1014
    %v1070 = vadd.f32 %v1005, %v1014
    %v1071 = vadd.f32 %v1006, %v1014
    %v1072 = vadd.f32 %v1007, %v1014
    %v1073 = vadd.f32 %v1008, %v1014
    %v1074 = vadd.f32 %v1009, %v1014
    %v1075 = vadd.f32 %v1010, %v1014
    %v1076 = vadd.f32 %v1011, %v1014
    %v1077 = vadd.f32 %v1012, %v1014
    %v1078 = vadd.f32 %v1013, %v1014
    %v1079 = vmax.f32 %v1015, 0.0
    %v1080 = vmax.f32 %v1016, 0.0
    %v1081 = vmax.f32 %v1017, 0.0
    %v1082 = vmax.f32 %v1018, 0.0
    %v1083 = vmax.f32 %v1019, 0.0
    %v1084 = vmax.f32 %v1020, 0.0
    %v1085 = vmax.f32 %v1021, 0.0
    %v1086 = vmax.f32 %v1022, 0.0
    %v1087 = vmax.f32 %v1023, 0.0
    %v1088 = vmax.f32 %v1024, 0.0
    %v1089 = vmax.f32 %v1025, 0.0
    %v1090 = vmax.f32 %v1026, 0.0
    %v1091 = vmax.f32 %v1027, 0.0
    %v1092 = vmax.f32 %v1028, 0.0
    %v1093 = vmax.f32 %v1029, 0.0
    %v1094 = vmax.f32 %v1030, 0.0
    %v1095 = vmax.f32 %v1031, 0.0
    %v1096 = vmax.f32 %v1032, 0.0
    %v1097 = vmax.f32 %v1033, 0.0
    %v1098 = vmax.f32 %v1034, 0.0
    %v1099 = vmax.f32 %v1035, 0.0
    %v1100 = vmax.f32 %v1036, 0.0
    %v1101 = vmax.f32 %v1037, 0.0
    %v1102 = vmax.f32 %v1038, 0.0
    %v1103 = vmax.f32 %v1039, 0.0
    %v1104 = vmax.f32 %v1040, 0.0
    %v1105 = vmax.f32 %v1041, 0.0
    %v1106 = vmax.f32 %v1042, 0.0
    %v1107 = vmax.f32 %v1043, 0.0
    %v1108 = vmax.f32 %v1044, 0.0
    %v1109 = vmax.f32 %v1045, 0.0
    %v1110 = vmax.f32 %v1046, 0.0
    %v1111 = vmax.f32 %v1047, 0.0
    %v1112 = vmax.f32 %v1048, 0.0
    %v1113 = vmax.f32 %v1049, 0.0
    %v1114 = vmax.f32 %v1050, 0.0
    %v1115 = vmax.f32 %v1051, 0.0
    %v1116 = vmax.f32 %v1052, 0.0
    %v1117 = vmax.f32 %v1053, 0.0
    %v1118 = vmax.f32 %v1054, 0.0
    %v1119 = vmax.f32 %v1055, 0.0
    %v1120 = vmax.f32 %v1056, 0.0
    %v1121 = vmax.f32 %v1057, 0.0
    %v1122 = vmax.f32 %v1058, 0.0
    %v1123 = vmax.f32 %v1059, 0.0
    %v1124 = vmax.f32 %v1060, 0.0
    %v1125 = vmax.f32 %v1061, 0.0
    %v1126 = vmax.f32 %v1062, 0.0
    %v1127 = vmax.f32 %v1063, 0.0
    %v1128 = vmax.f32 %v1064, 0.0
    %v1129 = vmax.f32 %v1065, 0.0
    %v1130 = vmax.f32 %v1066, 0.0
    %v1131 = vmax.f32 %v1067, 0.0
    %v1132 = vmax.f32 %v1068, 0.0
    %v1133 = vmax.f32 %v1069, 0.0
    %v1134 = vmax.f32 %v1070, 0.0
    %v1135 = vmax.f32 %v1071, 0.0
    %v1136 = vmax.f32 %v1072, 0.0
    %v1137 = vmax.f32 %v1073, 0.0
    %v1138 = vmax.f32 %v1074, 0.0
    %v1139 = vmax.f32 %v1075, 0.0
    %v1140 = vmax.f32 %v1076, 0.0
    %v1141 = vmax.f32 %v1077, 0.0
    %v1142 = vmax.f32 %v1078, 0.0
    %v1143 = vadd.f32 %v1079, %v1081
    %v1144 = vadd.f32 %v1080, %v1082
    %v1145 = vadd.f32 %v1083, %v1085
    %v1146 = vadd.f32 %v1084, %v1086
    %v1147 = vadd.f32 %v1087, %v1089
    %v1148 = vadd.f32 %v1088, %v1090
    %v1149 = vadd.f32 %v1091, %v1093
    %v1150 = vadd.f32 %v1092, %v1094
    %v1151 = vadd.f32 %v1095, %v1097
    %v1152 = vadd.f32 %v1096, %v1098
    %v1153 = vadd.f32 %v1099, %v1101
    %v1154 = vadd.f32 %v1100, %v1102
    %v1155 = vadd.f32 %v1103, %v1105
    %v1156 = vadd.f32 %v1104, %v1106
    %v1157 = vadd.f32 %v1107, %v1109
    %v1158 = vadd.f32 %v1108, %v1110
    %v1159 = vadd.f32 %v1111, %v1113
    %v1160 = vadd.f32 %v1112, %v1114
    %v1161 = vadd.f32 %v1115, %v1117
    %v1162 = vadd.f32 %v1116, %v1118
    %v1163 = vadd.f32 %v1119, %v1121
    %v1164 = vadd.f32 %v1120, %v1122
    %v1165 = vadd.f32 %v1123, %v1125
    %v1166 = vadd.f32 %v1124, %v1126
    %v1167 = vadd.f32 %v1127, %v1129
    %v1168 = vadd.f32 %v1128, %v1130
    %v1169 = vadd.f32 %v1131, %v1133
    %v1170 = vadd.f32 %v1132, %v1134
    %v1171 = vadd.f32 %v1135, %v1137
    %v1172 = vadd.f32 %v1136, %v1138
    %v1173 = vadd.f32 %v1139, %v1141
    %v1174 = vadd.f32 %v1140, %v1142
    %v1207 = vrot.slane %v1143, 2
    %v1208 = vrot.slane %v1143, 4
    %v1209 = vrot.slane %v1143, 6
    %v1210 = vrot.slane %v1144, 2
    %v1211 = vrot.slane %v1144, 4
    %v1212 = vrot.slane %v1144, 6
    %v1213 = vrot.slane %v1145, 2
    %v1214 = vrot.slane %v1145, 4
    %v1215 = vrot.slane %v1145, 6
    %v1216 = vrot.slane %v1146, 2
    %v1217 = vrot.slane %v1146, 4
    %v1218 = vrot.slane %v1146, 6
    %v1219 = vrot.slane %v1147, 2
    %v1220 = vrot.slane %v1147, 4
    %v1221 = vrot.slane %v1147, 6
    %v1222 = vrot.slane %v1148, 2
    %v1223 = vrot.slane %v1148, 4
    %v1224 = vrot.slane %v1148, 6
    %v1225 = vrot.slane %v1149, 2
    %v1226 = vrot.slane %v1149, 4
    %v1227 = vrot.slane %v1149, 6
    %v1228 = vrot.slane %v1150, 2
    %v1229 = vrot.slane %v1150, 4
    %v1230 = vrot.slane %v1150, 6
    %v1231 = vrot.slane %v1151, 2
    %v1232 = vrot.slane %v1151, 4
    %v1233 = vrot.slane %v1151, 6
    %v1234 = vrot.slane %v1152, 2
    %v1235 = vrot.slane %v1152, 4
    %v1236 = vrot.slane %v1152, 6
    %v1237 = vrot.slane %v1153, 2
    %v1238 = vrot.slane %v1153, 4
    %v1239 = vrot.slane %v1153, 6
    %v1240 = vrot.slane %v1154, 2
    %v1241 = vrot.slane %v1154, 4
    %v1242 = vrot.slane %v1154, 6
    %v1243 = vrot.slane %v1155, 2
    %v1244 = vrot.slane %v1155, 4
    %v1245 = vrot.slane %v1155, 6
    %v1246 = vrot.slane %v1156, 2
    %v1247 = vrot.slane %v1156, 4
    %v1248 = vrot.slane %v1156, 6
    %v1249 = vrot.slane %v1157, 2
    %v1250 = vrot.slane %v1157, 4
    %v1251 = vrot.slane %v1157, 6
    %v1252 = vrot.slane %v1158, 2
    %v1253 = vrot.slane %v1158, 4
    %v1254 = vrot.slane %v1158, 6
    %v1255 = vrot.slane %v1159, 2
    %v1256 = vrot.slane %v1159, 4
    %v1257 = vrot.slane %v1159, 6
    %v1258 = vrot.slane %v1160, 2
    %v1259 = vrot.slane %v1160, 4
    %v1260 = vrot.slane %v1160, 6
    %v1261 = vrot.slane %v1161, 2
    %v1262 = vrot.slane %v1161, 4
    %v1263 = vrot.slane %v1161, 6
    %v1264 = vrot.slane %v1162, 2
    %v1265 = vrot.slane %v1162, 4
    %v1266 = vrot.slane %v1162, 6
    %v1267 = vrot.slane %v1163, 2
    %v1268 = vrot.slane %v1163, 4
    %v1269 = vrot.slane %v1163, 6
    %v1270 = vrot.slane %v1164, 2
    %v1271 = vrot.slane %v1164, 4
    %v1272 = vrot.slane %v1164, 6
    %v1273 = vrot.slane %v1165, 2
    %v1274 = vrot.slane %v1165, 4
    %v1275 = vrot.slane %v1165, 6
    %v1276 = vrot.slane %v1166, 2
    %v1277 = vrot.slane %v1166, 4
    %v1278 = vrot.slane %v1166, 6
    %v1279 = vrot.slane %v1167, 2
    %v1280 = vrot.slane %v1167, 4
    %v1281 = vrot.slane %v1167, 6
    %v1282 = vrot.slane %v1168, 2
    %v1283 = vrot.slane %v1168, 4
    %v1284 = vrot.slane %v1168, 6
    %v1285 = vrot.slane %v1169, 2
    %v1286 = vrot.slane %v1169, 4
    %v1287 = vrot.slane %v1169, 6
    %v1288 = vrot.slane %v1170, 2
    %v1289 = vrot.slane %v1170, 4
    %v1290 = vrot.slane %v1170, 6
    %v1291 = vrot.slane %v1171, 2
    %v1292 = vrot.slane %v1171, 4
    %v1293 = vrot.slane %v1171, 6
    %v1294 = vrot.slane %v1172, 2
    %v1295 = vrot.slane %v1172, 4
    %v1296 = vrot.slane %v1172, 6
    %v1297 = vrot.slane %v1173, 2
    %v1298 = vrot.slane %v1173, 4
    %v1299 = vrot.slane %v1173, 6
    %v1300 = vrot.slane %v1174, 2
    %v1301 = vrot.slane %v1174, 4
    %v1302 = vrot.slane %v1174, 6
    %v1399 = vrot.slane %v1143, 7
    %v1400 = vrot.slane %v1399, 2
    %v1401 = vrot.slane %v1207, 7
    %v1402 = vrot.slane %v1401, 2
    %v1403 = vrot.slane %v1208, 7
    %v1404 = vrot.slane %v1403, 2
    %v1405 = vrot.slane %v1209, 7
    %v1406 = vrot.slane %v1405, 2
    %v1407 = vrot.slane %v1144, 7
    %v1408 = vrot.slane %v1407, 2
    %v1409 = vrot.slane %v1210, 7
    %v1410 = vrot.slane %v1409, 2
    %v1411 = vrot.slane %v1211, 7
    %v1412 = vrot.slane %v1411, 2
    %v1413 = vrot.slane %v1212, 7
    %v1414 = vrot.slane %v1413, 2
    %v1415 = vrot.slane %v1145, 7
    %v1416 = vrot.slane %v1415, 2
    %v1417 = vrot.slane %v1213, 7
    %v1418 = vrot.slane %v1417, 2
    %v1419 = vrot.slane %v1214, 7
    %v1420 = vrot.slane %v1419, 2
    %v1421 = vrot.slane %v1215, 7
    %v1422 = vrot.slane %v1421, 2
    %v1423 = vrot.slane %v1146, 7
    %v1424 = vrot.slane %v1423, 2
    %v1425 = vrot.slane %v1216, 7
    %v1426 = vrot.slane %v1425, 2
    %v1427 = vrot.slane %v1217, 7
    %v1428 = vrot.slane %v1427, 2
    %v1429 = vrot.slane %v1218, 7
    %v1430 = vrot.slane %v1429, 2
    %v1431 = vrot.slane %v1147, 7
    %v1432 = vrot.slane %v1431, 2
    %v1433 = vrot.slane %v1219, 7
    %v1434 = vrot.slane %v1433, 2
    %v1435 = vrot.slane %v1220, 7
    %v1436 = vrot.slane %v1435, 2
    %v1437 = vrot.slane %v1221, 7
    %v1438 = vrot.slane %v1437, 2
    %v1439 = vrot.slane %v1148, 7
    %v1440 = vrot.slane %v1439, 2
    %v1441 = vrot.slane %v1222, 7
    %v1442 = vrot.slane %v1441, 2
    %v1443 = vrot.slane %v1223, 7
    %v1444 = vrot.slane %v1443, 2
    %v1445 = vrot.slane %v1224, 7
    %v1446 = vrot.slane %v1445, 2
    %v1447 = vrot.slane %v1149, 7
    %v1448 = vrot.slane %v1447, 2
    %v1449 = vrot.slane %v1225, 7
    %v1450 = vrot.slane %v1449, 2
    %v1451 = vrot.slane %v1226, 7
    %v1452 = vrot.slane %v1451, 2
    %v1453 = vrot.slane %v1227, 7
    %v1454 = vrot.slane %v1453, 2
    %v1455 = vrot.slane %v1150, 7
    %v1456 = vrot.slane %v1455, 2
    %v1457 = vrot.slane %v1228, 7
    %v1458 = vrot.slane %v1457, 2
    %v1459 = vrot.slane %v1229, 7
    %v1460 = vrot.slane %v1459, 2
    %v1461 = vrot.slane %v1230, 7
    %v1462 = vrot.slane %v1461, 2
    %v1463 = vrot.slane %v1151, 7
    %v1464 = vrot.slane %v1463, 2
    %v1465 = vrot.slane %v1231, 7
    %v1466 = vrot.slane %v1465, 2
    %v1467 = vrot.slane %v1232, 7
    %v1468 = vrot.slane %v1467, 2
    %v1469 = vrot.slane %v1233, 7
    %v1470 = vrot.slane %v1469, 2
    %v1471 = vrot.slane %v1152, 7
    %v1472 = vrot.slane %v1471, 2
    %v1473 = vrot.slane %v1234, 7
    %v1474 = vrot.slane %v1473, 2
    %v1475 = vrot.slane %v1235, 7
    %v1476 = vrot.slane %v1475, 2
    %v1477 = vrot.slane %v1236, 7
    %v1478 = vrot.slane %v1477, 2
    %v1479 = vrot.slane %v1153, 7
    %v1480 = vrot.slane %v1479, 2
    %v1481 = vrot.slane %v1237, 7
    %v1482 = vrot.slane %v1481, 2
    %v1483 = vrot.slane %v1238, 7
    %v1484 = vrot.slane %v1483, 2
    %v1485 = vrot.slane %v1239, 7
    %v1486 = vrot.slane %v1485, 2
    %v1487 = vrot.slane %v1154, 7
    %v1488 = vrot.slane %v1487, 2
    %v1489 = vrot.slane %v1240, 7
    %v1490 = vrot.slane %v1489, 2
    %v1491 = vrot.slane %v1241, 7
    %v1492 = vrot.slane %v1491, 2
    %v1493 = vrot.slane %v1242, 7
    %v1494 = vrot.slane %v1493, 2
    %v1495 = vrot.slane %v1155, 7
    %v1496 = vrot.slane %v1495, 2
    %v1497 = vrot.slane %v1243, 7
    %v1498 = vrot.slane %v1497, 2
    %v1499 = vrot.slane %v1244, 7
    %v1500 = vrot.slane %v1499, 2
    %v1501 = vrot.slane %v1245, 7
    %v1502 = vrot.slane %v1501, 2
    %v1503 = vrot.slane %v1156, 7
    %v1504 = vrot.slane %v1503, 2
    %v1505 = vrot.slane %v1246, 7
    %v1506 = vrot.slane %v1505, 2
    %v1507 = vrot.slane %v1247, 7
    %v1508 = vrot.slane %v1507, 2
    %v1509 = vrot.slane %v1248, 7
    %v1510 = vrot.slane %v1509, 2
    %v1511 = vrot.slane %v1157, 7
    %v1512 = vrot.slane %v1511, 2
    %v1513 = vrot.slane %v1249, 7
    %v1514 = vrot.slane %v1513, 2
    %v1515 = vrot.slane %v1250, 7
    %v1516 = vrot.slane %v1515, 2
    %v1517 = vrot.slane %v1251, 7
    %v1518 = vrot.slane %v1517, 2
    %v1519 = vrot.slane %v1158, 7
    %v1520 = vrot.slane %v1519, 2
    %v1521 = vrot.slane %v1252, 7
    %v1522 = vrot.slane %v1521, 2
    %v1523 = vrot.slane %v1253, 7
    %v1524 = vrot.slane %v1523, 2
    %v1525 = vrot.slane %v1254, 7
    %v1526 = vrot.slane %v1525, 2
    %v1527 = vrot.slane %v1159, 7
    %v1528 = vrot.slane %v1527, 2
    %v1529 = vrot.slane %v1255, 7
    %v1530 = vrot.slane %v1529, 2
    %v1531 = vrot.slane %v1256, 7
    %v1532 = vrot.slane %v1531, 2
    %v1533 = vrot.slane %v1257, 7
    %v1534 = vrot.slane %v1533, 2
    %v1535 = vrot.slane %v1160, 7
    %v1536 = vrot.slane %v1535, 2
    %v1537 = vrot.slane %v1258, 7
    %v1538 = vrot.slane %v1537, 2
    %v1539 = vrot.slane %v1259, 7
    %v1540 = vrot.slane %v1539, 2
    %v1541 = vrot.slane %v1260, 7
    %v1542 = vrot.slane %v1541, 2
    %v1543 = vrot.slane %v1161, 7
    %v1544 = vrot.slane %v1543, 2
    %v1545 = vrot.slane %v1261, 7
    %v1546 = vrot.slane %v1545, 2
    %v1547 = vrot.slane %v1262, 7
    %v1548 = vrot.slane %v1547, 2
    %v1549 = vrot.slane %v1263, 7
    %v1550 = vrot.slane %v1549, 2
    %v1551 = vrot.slane %v1162, 7
    %v1552 = vrot.slane %v1551, 2
    %v1553 = vrot.slane %v1264, 7
    %v1554 = vrot.slane %v1553, 2
    %v1555 = vrot.slane %v1265, 7
    %v1556 = vrot.slane %v1555, 2
    %v1557 = vrot.slane %v1266, 7
    %v1558 = vrot.slane %v1557, 2
    %v1559 = vrot.slane %v1163, 7
    %v1560 = vrot.slane %v1559, 2
    %v1561 = vrot.slane %v1267, 7
    %v1562 = vrot.slane %v1561, 2
    %v1563 = vrot.slane %v1268, 7
    %v1564 = vrot.slane %v1563, 2
    %v1565 = vrot.slane %v1269, 7
    %v1566 = vrot.slane %v1565, 2
    %v1567 = vrot.slane %v1164, 7
    %v1568 = vrot.slane %v1567, 2
    %v1569 = vrot.slane %v1270, 7
    %v1570 = vrot.slane %v1569, 2
    %v1571 = vrot.slane %v1271, 7
    %v1572 = vrot.slane %v1571, 2
    %v1573 = vrot.slane %v1272, 7
    %v1574 = vrot.slane %v1573, 2
    %v1575 = vrot.slane %v1165, 7
    %v1576 = vrot.slane %v1575, 2
    %v1577 = vrot.slane %v1273, 7
    %v1578 = vrot.slane %v1577, 2
    %v1579 = vrot.slane %v1274, 7
    %v1580 = vrot.slane %v1579, 2
    %v1581 = vrot.slane %v1275, 7
    %v1582 = vrot.slane %v1581, 2
    %v1583 = vrot.slane %v1166, 7
    %v1584 = vrot.slane %v1583, 2
    %v1585 = vrot.slane %v1276, 7
    %v1586 = vrot.slane %v1585, 2
    %v1587 = vrot.slane %v1277, 7
    %v1588 = vrot.slane %v1587, 2
    %v1589 = vrot.slane %v1278, 7
    %v1590 = vrot.slane %v1589, 2
    %v1591 = vrot.slane %v1167, 7
    %v1592 = vrot.slane %v1591, 2
    %v1593 = vrot.slane %v1279, 7
    %v1594 = vrot.slane %v1593, 2
    %v1595 = vrot.slane %v1280, 7
    %v1596 = vrot.slane %v1595, 2
    %v1597 = vrot.slane %v1281, 7
    %v1598 = vrot.slane %v1597, 2
    %v1599 = vrot.slane %v1168, 7
    %v1600 = vrot.slane %v1599, 2
    %v1601 = vrot.slane %v1282, 7
    %v1602 = vrot.slane %v1601, 2
    %v1603 = vrot.slane %v1283, 7
    %v1604 = vrot.slane %v1603, 2
    %v1605 = vrot.slane %v1284, 7
    %v1606 = vrot.slane %v1605, 2
    %v1607 = vrot.slane %v1169, 7
    %v1608 = vrot.slane %v1607, 2
    %v1609 = vrot.slane %v1285, 7
    %v1610 = vrot.slane %v1609, 2
    %v1611 = vrot.slane %v1286, 7
    %v1612 = vrot.slane %v1611, 2
    %v1613 = vrot.slane %v1287, 7
    %v1614 = vrot.slane %v1613, 2
    %v1615 = vrot.slane %v1170, 7
    %v1616 = vrot.slane %v1615, 2
    %v1617 = vrot.slane %v1288, 7
    %v1618 = vrot.slane %v1617, 2
    %v1619 = vrot.slane %v1289, 7
    %v1620 = vrot.slane %v1619, 2
    %v1621 = vrot.slane %v1290, 7
    %v1622 = vrot.slane %v1621, 2
    %v1623 = vrot.slane %v1171, 7
    %v1624 = vrot.slane %v1623, 2
    %v1625 = vrot.slane %v1291, 7
    %v1626 = vrot.slane %v1625, 2
    %v1627 = vrot.slane %v1292, 7
    %v1628 = vrot.slane %v1627, 2
    %v1629 = vrot.slane %v1293, 7
    %v1630 = vrot.slane %v1629, 2
    %v1631 = vrot.slane %v1172, 7
    %v1632 = vrot.slane %v1631, 2
    %v1633 = vrot.slane %v1294, 7
    %v1634 = vrot.slane %v1633, 2
    %v1635 = vrot.slane %v1295, 7
    %v1636 = vrot.slane %v1635, 2
    %v1637 = vrot.slane %v1296, 7
    %v1638 = vrot.slane %v1637, 2
    %v1639 = vrot.slane %v1173, 7
    %v1640 = vrot.slane %v1639, 2
    %v1641 = vrot.slane %v1297, 7
    %v1642 = vrot.slane %v1641, 2
    %v1643 = vrot.slane %v1298, 7
    %v1644 = vrot.slane %v1643, 2
    %v1645 = vrot.slane %v1299, 7
    %v1646 = vrot.slane %v1645, 2
    %v1647 = vrot.slane %v1174, 7
    %v1648 = vrot.slane %v1647, 2
    %v1649 = vrot.slane %v1300, 7
    %v1650 = vrot.slane %v1649, 2
    %v1651 = vrot.slane %v1301, 7
    %v1652 = vrot.slane %v1651, 2
    %v1653 = vrot.slane %v1302, 7
    %v1654 = vrot.slane %v1653, 2
    %v1783 = vadd.f32 %v1143, %v1400
    %v1784 = vadd.f32 %v1207, %v1402
    %v1785 = vadd.f32 %v1208, %v1404
    %v1786 = vadd.f32 %v1209, %v1406
    %v1787 = vadd.f32 %v1144, %v1408
    %v1788 = vadd.f32 %v1210, %v1410
    %v1789 = vadd.f32 %v1211, %v1412
    %v1790 = vadd.f32 %v1212, %v1414
    %v1791 = vadd.f32 %v1145, %v1416
    %v1792 = vadd.f32 %v1213, %v1418
    %v1793 = vadd.f32 %v1214, %v1420
    %v1794 = vadd.f32 %v1215, %v1422
    %v1795 = vadd.f32 %v1146, %v1424
    %v1796 = vadd.f32 %v1216, %v1426
    %v1797 = vadd.f32 %v1217, %v1428
    %v1798 = vadd.f32 %v1218, %v1430
    %v1799 = vadd.f32 %v1147, %v1432
    %v1800 = vadd.f32 %v1219, %v1434
    %v1801 = vadd.f32 %v1220, %v1436
    %v1802 = vadd.f32 %v1221, %v1438
    %v1803 = vadd.f32 %v1148, %v1440
    %v1804 = vadd.f32 %v1222, %v1442
    %v1805 = vadd.f32 %v1223, %v1444
    %v1806 = vadd.f32 %v1224, %v1446
    %v1807 = vadd.f32 %v1149, %v1448
    %v1808 = vadd.f32 %v1225, %v1450
    %v1809 = vadd.f32 %v1226, %v1452
    %v1810 = vadd.f32 %v1227, %v1454
    %v1811 = vadd.f32 %v1150, %v1456
    %v1812 = vadd.f32 %v1228, %v1458
    %v1813 = vadd.f32 %v1229, %v1460
    %v1814 = vadd.f32 %v1230, %v1462
    %v1815 = vadd.f32 %v1151, %v1464
    %v1816 = vadd.f32 %v1231, %v1466
    %v1817 = vadd.f32 %v1232, %v1468
    %v1818 = vadd.f32 %v1233, %v1470
    %v1819 = vadd.f32 %v1152, %v1472
    %v1820 = vadd.f32 %v1234, %v1474
    %v1821 = vadd.f32 %v1235, %v1476
    %v1822 = vadd.f32 %v1236, %v1478
    %v1823 = vadd.f32 %v1153, %v1480
    %v1824 = vadd.f32 %v1237, %v1482
    %v1825 = vadd.f32 %v1238, %v1484
    %v1826 = vadd.f32 %v1239, %v1486
    %v1827 = vadd.f32 %v1154, %v1488
    %v1828 = vadd.f32 %v1240, %v1490
    %v1829 = vadd.f32 %v1241, %v1492
    %v1830 = vadd.f32 %v1242, %v1494
    %v1831 = vadd.f32 %v1155, %v1496
    %v1832 = vadd.f32 %v1243, %v1498
    %v1833 = vadd.f32 %v1244, %v1500
    %v1834 = vadd.f32 %v1245, %v1502
    %v1835 = vadd.f32 %v1156, %v1504
    %v1836 = vadd.f32 %v1246, %v1506
    %v1837 = vadd.f32 %v1247, %v1508
    %v1838 = vadd.f32 %v1248, %v1510
    %v1839 = vadd.f32 %v1157, %v1512
    %v1840 = vadd.f32 %v1249, %v1514
    %v1841 = vadd.f32 %v1250, %v1516
    %v1842 = vadd.f32 %v1251, %v1518
    %v1843 = vadd.f32 %v1158, %v1520
    %v1844 = vadd.f32 %v1252, %v1522
    %v1845 = vadd.f32 %v1253, %v1524
    %v1846 = vadd.f32 %v1254, %v1526
    %v1847 = vadd.f32 %v1159, %v1528
    %v1848 = vadd.f32 %v1255, %v1530
    %v1849 = vadd.f32 %v1256, %v1532
    %v1850 = vadd.f32 %v1257, %v1534
    %v1851 = vadd.f32 %v1160, %v1536
    %v1852 = vadd.f32 %v1258, %v1538
    %v1853 = vadd.f32 %v1259, %v1540
    %v1854 = vadd.f32 %v1260, %v1542
    %v1855 = vadd.f32 %v1161, %v1544
    %v1856 = vadd.f32 %v1261, %v1546
    %v1857 = vadd.f32 %v1262, %v1548
    %v1858 = vadd.f32 %v1263, %v1550
    %v1859 = vadd.f32 %v1162, %v1552
    %v1860 = vadd.f32 %v1264, %v1554
    %v1861 = vadd.f32 %v1265, %v1556
    %v1862 = vadd.f32 %v1266, %v1558
    %v1863 = vadd.f32 %v1163, %v1560
    %v1864 = vadd.f32 %v1267, %v1562
    %v1865 = vadd.f32 %v1268, %v1564
    %v1866 = vadd.f32 %v1269, %v1566
    %v1867 = vadd.f32 %v1164, %v1568
    %v1868 = vadd.f32 %v1270, %v1570
    %v1869 = vadd.f32 %v1271, %v1572
    %v1870 = vadd.f32 %v1272, %v1574
    %v1871 = vadd.f32 %v1165, %v1576
    %v1872 = vadd.f32 %v1273, %v1578
    %v1873 = vadd.f32 %v1274, %v1580
    %v1874 = vadd.f32 %v1275, %v1582
    %v1875 = vadd.f32 %v1166, %v1584
    %v1876 = vadd.f32 %v1276, %v1586
    %v1877 = vadd.f32 %v1277, %v1588
    %v1878 = vadd.f32 %v1278, %v1590
    %v1879 = vadd.f32 %v1167, %v1592
    %v1880 = vadd.f32 %v1279, %v1594
    %v1881 = vadd.f32 %v1280, %v1596
    %v1882 = vadd.f32 %v1281, %v1598
    %v1883 = vadd.f32 %v1168, %v1600
    %v1884 = vadd.f32 %v1282, %v1602
    %v1885 = vadd.f32 %v1283, %v1604
    %v1886 = vadd.f32 %v1284, %v1606
    %v1887 = vadd.f32 %v1169, %v1608
    %v1888 = vadd.f32 %v1285, %v1610
    %v1889 = vadd.f32 %v1286, %v1612
    %v1890 = vadd.f32 %v1287, %v1614
    %v1891 = vadd.f32 %v1170, %v1616
    %v1892 = vadd.f32 %v1288, %v1618
    %v1893 = vadd.f32 %v1289, %v1620
    %v1894 = vadd.f32 %v1290, %v1622
    %v1895 = vadd.f32 %v1171, %v1624
    %v1896 = vadd.f32 %v1291, %v1626
    %v1897 = vadd.f32 %v1292, %v1628
    %v1898 = vadd.f32 %v1293, %v1630
    %v1899 = vadd.f32 %v1172, %v1632
    %v1900 = vadd.f32 %v1294, %v1634
    %v1901 = vadd.f32 %v1295, %v1636
    %v1902 = vadd.f32 %v1296, %v1638
    %v1903 = vadd.f32 %v1173, %v1640
    %v1904 = vadd.f32 %v1297, %v1642
    %v1905 = vadd.f32 %v1298, %v1644
    %v1906 = vadd.f32 %v1299, %v1646
    %v1907 = vadd.f32 %v1174, %v1648
    %v1908 = vadd.f32 %v1300, %v1650
    %v1909 = vadd.f32 %v1301, %v1652
    %v1910 = vadd.f32 %v1302, %v1654
    %v1911 = vmul.f32 %v1783, 0.25
    %v1912 = vmul.f32 %v1784, 0.25
    %v1913 = vmul.f32 %v1785, 0.25
    %v1914 = vmul.f32 %v1786, 0.25
    %v1915 = vmul.f32 %v1787, 0.25
    %v1916 = vmul.f32 %v1788, 0.25
    %v1917 = vmul.f32 %v1789, 0.25
    %v1918 = vmul.f32 %v1790, 0.25
    %v1919 = vmul.f32 %v1791, 0.25
    %v1920 = vmul.f32 %v1792, 0.25
    %v1921 = vmul.f32 %v1793, 0.25
    %v1922 = vmul.f32 %v1794, 0.25
    %v1923 = vmul.f32 %v1795, 0.25
    %v1924 = vmul.f32 %v1796, 0.25
    %v1925 = vmul.f32 %v1797, 0.25
    %v1926 = vmul.f32 %v1798, 0.25
    %v1927 = vmul.f32 %v1799, 0.25
    %v1928 = vmul.f32 %v1800, 0.25
    %v1929 = vmul.f32 %v1801, 0.25
    %v1930 = vmul.f32 %v1802, 0.25
    %v1931 = vmul.f32 %v1803, 0.25
    %v1932 = vmul.f32 %v1804, 0.25
    %v1933 = vmul.f32 %v1805, 0.25
    %v1934 = vmul.f32 %v1806, 0.25
    %v1935 = vmul.f32 %v1807, 0.25
    %v1936 = vmul.f32 %v1808, 0.25
    %v1937 = vmul.f32 %v1809, 0.25
    %v1938 = vmul.f32 %v1810, 0.25
    %v1939 = vmul.f32 %v1811, 0.25
    %v1940 = vmul.f32 %v1812, 0.25
    %v1941 = vmul.f32 %v1813, 0.25
    %v1942 = vmul.f32 %v1814, 0.25
    %v1943 = vmul.f32 %v1815, 0.25
    %v1944 = vmul.f32 %v1816, 0.25
    %v1945 = vmul.f32 %v1817, 0.25
    %v1946 = vmul.f32 %v1818, 0.25
    %v1947 = vmul.f32 %v1819, 0.25
    %v1948 = vmul.f32 %v1820, 0.25
    %v1949 = vmul.f32 %v1821, 0.25
    %v1950 = vmul.f32 %v1822, 0.25
    %v1951 = vmul.f32 %v1823, 0.25
    %v1952 = vmul.f32 %v1824, 0.25
    %v1953 = vmul.f32 %v1825, 0.25
    %v1954 = vmul.f32 %v1826, 0.25
    %v1955 = vmul.f32 %v1827, 0.25
    %v1956 = vmul.f32 %v1828, 0.25
    %v1957 = vmul.f32 %v1829, 0.25
    %v1958 = vmul.f32 %v1830, 0.25
    %v1959 = vmul.f32 %v1831, 0.25
    %v1960 = vmul.f32 %v1832, 0.25
    %v1961 = vmul.f32 %v1833, 0.25
    %v1962 = vmul.f32 %v1834, 0.25
    %v1963 = vmul.f32 %v1835, 0.25
    %v1964 = vmul.f32 %v1836, 0.25
    %v1965 = vmul.f32 %v1837, 0.25
    %v1966 = vmul.f32 %v1838, 0.25
    %v1967 = vmul.f32 %v1839, 0.25
    %v1968 = vmul.f32 %v1840, 0.25
    %v1969 = vmul.f32 %v1841, 0.25
    %v1970 = vmul.f32 %v1842, 0.25
    %v1971 = vmul.f32 %v1843, 0.25
    %v1972 = vmul.f32 %v1844, 0.25
    %v1973 = vmul.f32 %v1845, 0.25
    %v1974 = vmul.f32 %v1846, 0.25
    %v1975 = vmul.f32 %v1847, 0.25
    %v1976 = vmul.f32 %v1848, 0.25
    %v1977 = vmul.f32 %v1849, 0.25
    %v1978 = vmul.f32 %v1850, 0.25
    %v1979 = vmul.f32 %v1851, 0.25
    %v1980 = vmul.f32 %v1852, 0.25
    %v1981 = vmul.f32 %v1853, 0.25
    %v1982 = vmul.f32 %v1854, 0.25
    %v1983 = vmul.f32 %v1855, 0.25
    %v1984 = vmul.f32 %v1856, 0.25
    %v1985 = vmul.f32 %v1857, 0.25
    %v1986 = vmul.f32 %v1858, 0.25
    %v1987 = vmul.f32 %v1859, 0.25
    %v1988 = vmul.f32 %v1860, 0.25
    %v1989 = vmul.f32 %v1861, 0.25
    %v1990 = vmul.f32 %v1862, 0.25
    %v1991 = vmul.f32 %v1863, 0.25
    %v1992 = vmul.f32 %v1864, 0.25
    %v1993 = vmul.f32 %v1865, 0.25
    %v1994 = vmul.f32 %v1866, 0.25
    %v1995 = vmul.f32 %v1867, 0.25
    %v1996 = vmul.f32 %v1868, 0.25
    %v1997 = vmul.f32 %v1869, 0.25
    %v1998 = vmul.f32 %v1870, 0.25
    %v1999 = vmul.f32 %v1871, 0.25
    %v2000 = vmul.f32 %v1872, 0.25
    %v2001 = vmul.f32 %v1873, 0.25
    %v2002 = vmul.f32 %v1874, 0.25
    %v2003 = vmul.f32 %v1875, 0.25
    %v2004 = vmul.f32 %v1876, 0.25
    %v2005 = vmul.f32 %v1877, 0.25
    %v2006 = vmul.f32 %v1878, 0.25
    %v2007 = vmul.f32 %v1879, 0.25
    %v2008 = vmul.f32 %v1880, 0.25
    %v2009 = vmul.f32 %v1881, 0.25
    %v2010 = vmul.f32 %v1882, 0.25
    %v2011 = vmul.f32 %v1883, 0.25
    %v2012 = vmul.f32 %v1884, 0.25
    %v2013 = vmul.f32 %v1885, 0.25
    %v2014 = vmul.f32 %v1886, 0.25
    %v2015 = vmul.f32 %v1887, 0.25
    %v2016 = vmul.f32 %v1888, 0.25
    %v2017 = vmul.f32 %v1889, 0.25
    %v2018 = vmul.f32 %v1890, 0.25
    %v2019 = vmul.f32 %v1891, 0.25
    %v2020 = vmul.f32 %v1892, 0.25
    %v2021 = vmul.f32 %v1893, 0.25
    %v2022 = vmul.f32 %v1894, 0.25
    %v2023 = vmul.f32 %v1895, 0.25
    %v2024 = vmul.f32 %v1896, 0.25
    %v2025 = vmul.f32 %v1897, 0.25
    %v2026 = vmul.f32 %v1898, 0.25
    %v2027 = vmul.f32 %v1899, 0.25
    %v2028 = vmul.f32 %v1900, 0.25
    %v2029 = vmul.f32 %v1901, 0.25
    %v2030 = vmul.f32 %v1902, 0.25
    %v2031 = vmul.f32 %v1903, 0.25
    %v2032 = vmul.f32 %v1904, 0.25
    %v2033 = vmul.f32 %v1905, 0.25
    %v2034 = vmul.f32 %v1906, 0.25
    %v2035 = vmul.f32 %v1907, 0.25
    %v2036 = vmul.f32 %v1908, 0.25
    %v2037 = vmul.f32 %v1909, 0.25
    %v2038 = vmul.f32 %v1910, 0.25
    %2039 = vst.msk [vmem:[#allocation2] sm:$0xff] %vm538, 0.0
    %vm2040 = vcmask 254976
    %2041 = vst.msk [vmem:[#allocation2 + $0x8] sm:$0x3] %vm2040, 0.0
    %2042 = vst.msk [vmem:[#allocation2 + $0xa0] sm:$0xff] %vm538, 0.0
    %2043 = vst.msk [vmem:[#allocation2 + $0xa8] sm:$0x3] %vm2040, 0.0
    %s2044 = scalar_lea.vmem [#allocation2], 144
    %2045 = vst.msk [vmem:[%s2044] sm:$0xff] %vm538, 0.0
    %2046 = vst.msk [vmem:[%s2044 + $0x8] sm:$0x3] %vm2040, 0.0
    %2047 = vst.msk [vmem:[%s2044 + $0xa0] sm:$0xff] %vm538, 0.0
    %2048 = vst.msk [vmem:[%s2044 + $0xa8] sm:$0x3] %vm2040, 0.0
    %s2049 = scalar_lea.vmem [#allocation2], 16
    %vm2050 = vcmask 253952
    %2051 = vst.msk [vmem:[%s2049] sm:$0x1] %vm2050, 0.0
    %2052 = vst.msk [vmem:[%s2049 + $0x10] sm:$0x1] %vm2050, 0.0
    %2053 = vst.msk [vmem:[%s2049 + $0x20] sm:$0x1] %vm2050, 0.0
    %2054 = vst.msk [vmem:[%s2049 + $0x30] sm:$0x1] %vm2050, 0.0
    %2055 = vst.msk [vmem:[%s2049 + $0x40] sm:$0x1] %vm2050, 0.0
    %2056 = vst.msk [vmem:[%s2049 + $0x50] sm:$0x1] %vm2050, 0.0
    %2057 = vst.msk [vmem:[%s2049 + $0x60] sm:$0x1] %vm2050, 0.0
    %2058 = vst.msk [vmem:[%s2049 + $0x70] sm:$0x1] %vm2050, 0.0
    %2059 = vst.msk [vmem:[%s2049 + $0xa0] sm:$0x1] %vm2050, 0.0
    %2060 = vst.msk [vmem:[%s2049 + $0xb0] sm:$0x1] %vm2050, 0.0
    %2061 = vst.msk [vmem:[%s2049 + $0xc0] sm:$0x1] %vm2050, 0.0
    %2062 = vst.msk [vmem:[%s2049 + $0xd0] sm:$0x1] %vm2050, 0.0
    %2063 = vst.msk [vmem:[%s2049 + $0xe0] sm:$0x1] %vm2050, 0.0
    %2064 = vst.msk [vmem:[%s2049 + $0xf0] sm:$0x1] %vm2050, 0.0
    %2065 = vst.msk [vmem:[%s2049 + $0x100] sm:$0x1] %vm2050, 0.0
    %2066 = vst.msk [vmem:[%s2049 + $0x110] sm:$0x1] %vm2050, 0.0
    %2067 = vst.msk [vmem:[%s2049 + $0x9] sm:$0x1] %vm2050, 0.0
    %2068 = vst.msk [vmem:[%s2049 + $0x19] sm:$0x1] %vm2050, 0.0
    %2069 = vst.msk [vmem:[%s2049 + $0x29] sm:$0x1] %vm2050, 0.0
    %2070 = vst.msk [vmem:[%s2049 + $0x39] sm:$0x1] %vm2050, 0.0
    %2071 = vst.msk [vmem:[%s2049 + $0x49] sm:$0x1] %vm2050, 0.0
    %2072 = vst.msk [vmem:[%s2049 + $0x59] sm:$0x1] %vm2050, 0.0
    %2073 = vst.msk [vmem:[%s2049 + $0x69] sm:$0x1] %vm2050, 0.0
    %2074 = vst.msk [vmem:[%s2049 + $0x79] sm:$0x1] %vm2050, 0.0
    %2075 = vst.msk [vmem:[%s2049 + $0xa9] sm:$0x1] %vm2050, 0.0
    %2076 = vst.msk [vmem:[%s2049 + $0xb9] sm:$0x1] %vm2050, 0.0
    %2077 = vst.msk [vmem:[%s2049 + $0xc9] sm:$0x1] %vm2050, 0.0
    %2078 = vst.msk [vmem:[%s2049 + $0xd9] sm:$0x1] %vm2050, 0.0
    %2079 = vst.msk [vmem:[%s2049 + $0xe9] sm:$0x1] %vm2050, 0.0
    %2080 = vst.msk [vmem:[%s2049 + $0xf9] sm:$0x1] %vm2050, 0.0
    %2081 = vst.msk [vmem:[%s2049 + $0x109] sm:$0x1] %vm2050, 0.0
    %2082 = vst.msk [vmem:[%s2049 + $0x119] sm:$0x1] %vm2050, 0.0
    %v2211 = vperm.slane %v1911, 0
    %v2212 = vperm.slane %v1912, 0
    %v2213 = vperm.slane %v1913, 0
    %v2214 = vperm.slane %v1914, 0
    %v2215 = vperm.slane %v1915, 0
    %v2216 = vperm.slane %v1916, 0
    %v2217 = vperm.slane %v1917, 0
    %v2218 = vperm.slane %v1918, 0
    %v2219 = vperm.slane %v1919, 0
    %v2220 = vperm.slane %v1920, 0
    %v2221 = vperm.slane %v1921, 0
    %v2222 = vperm.slane %v1922, 0
    %v2223 = vperm.slane %v1923, 0
    %v2224 = vperm.slane %v1924, 0
    %v2225 = vperm.slane %v1925, 0
    %v2226 = vperm.slane %v1926, 0
    %v2227 = vperm.slane %v1927, 0
    %v2228 = vperm.slane %v1928, 0
    %v2229 = vperm.slane %v1929, 0
    %v2230 = vperm.slane %v1930, 0
    %v2231 = vperm.slane %v1931, 0
    %v2232 = vperm.slane %v1932, 0
    %v2233 = vperm.slane %v1933, 0
    %v2234 = vperm.slane %v1934, 0
    %v2235 = vperm.slane %v1935, 0
    %v2236 = vperm.slane %v1936, 0
    %v2237 = vperm.slane %v1937, 0
    %v2238 = vperm.slane %v1938, 0
    %v2239 = vperm.slane %v1939, 0
    %v2240 = vperm.slane %v1940, 0
    %v2241 = vperm.slane %v1941, 0
    %v2242 = vperm.slane %v1942, 0
    %v2243 = vperm.slane %v1943, 0
    %v2244 = vperm.slane %v1944, 0
    %v2245 = vperm.slane %v1945, 0
    %v2246 = vperm.slane %v1946, 0
    %v2247 = vperm.slane %v1947, 0
    %v2248 = vperm.slane %v1948, 0
    %v2249 = vperm.slane %v1949, 0
    %v2250 = vperm.slane %v1950, 0
    %v2251 = vperm.slane %v1951, 0
    %v2252 = vperm.slane %v1952, 0
    %v2253 = vperm.slane %v1953, 0
    %v2254 = vperm.slane %v1954, 0
    %v2255 = vperm.slane %v1955, 0
    %v2256 = vperm.slane %v1956, 0
    %v2257 = vperm.slane %v1957, 0
    %v2258 = vperm.slane %v1958, 0
    %v2259 = vperm.slane %v1959, 0
    %v2260 = vperm.slane %v1960, 0
    %v2261 = vperm.slane %v1961, 0
    %v2262 = vperm.slane %v1962, 0
    %v2263 = vperm.slane %v1963, 0
    %v2264 = vperm.slane %v1964, 0
    %v2265 = vperm.slane %v1965, 0
    %v2266 = vperm.slane %v1966, 0
    %v2267 = vperm.slane %v1967, 0
    %v2268 = vperm.slane %v1968, 0
    %v2269 = vperm.slane %v1969, 0
    %v2270 = vperm.slane %v1970, 0
    %v2271 = vperm.slane %v1971, 0
    %v2272 = vperm.slane %v1972, 0
    %v2273 = vperm.slane %v1973, 0
    %v2274 = vperm.slane %v1974, 0
    %v2275 = vperm.slane %v1975, 0
    %v2276 = vperm.slane %v1976, 0
    %v2277 = vperm.slane %v1977, 0
    %v2278 = vperm.slane %v1978, 0
    %v2279 = vperm.slane %v1979, 0
    %v2280 = vperm.slane %v1980, 0
    %v2281 = vperm.slane %v1981, 0
    %v2282 = vperm.slane %v1982, 0
    %v2283 = vperm.slane %v1983, 0
    %v2284 = vperm.slane %v1984, 0
    %v2285 = vperm.slane %v1985, 0
    %v2286 = vperm.slane %v1986, 0
    %v2287 = vperm.slane %v1987, 0
    %v2288 = vperm.slane %v1988, 0
    %v2289 = vperm.slane %v1989, 0
    %v2290 = vperm.slane %v1990, 0
    %v2291 = vperm.slane %v1991, 0
    %v2292 = vperm.slane %v1992, 0
    %v2293 = vperm.slane %v1993, 0
    %v2294 = vperm.slane %v1994, 0
    %v2295 = vperm.slane %v1995, 0
    %v2296 = vperm.slane %v1996, 0
    %v2297 = vperm.slane %v1997, 0
    %v2298 = vperm.slane %v1998, 0
    %v2299 = vperm.slane %v1999, 0
    %v2300 = vperm.slane %v2000, 0
    %v2301 = vperm.slane %v2001, 0
    %v2302 = vperm.slane %v2002, 0
    %v2303 = vperm.slane %v2003, 0
    %v2304 = vperm.slane %v2004, 0
    %v2305 = vperm.slane %v2005, 0
    %v2306 = vperm.slane %v2006, 0
    %v2307 = vperm.slane %v2007, 0
    %v2308 = vperm.slane %v2008, 0
    %v2309 = vperm.slane %v2009, 0
    %v2310 = vperm.slane %v2010, 0
    %v2311 = vperm.slane %v2011, 0
    %v2312 = vperm.slane %v2012, 0
    %v2313 = vperm.slane %v2013, 0
    %v2314 = vperm.slane %v2014, 0
    %v2315 = vperm.slane %v2015, 0
    %v2316 = vperm.slane %v2016, 0
    %v2317 = vperm.slane %v2017, 0
    %v2318 = vperm.slane %v2018, 0
    %v2319 = vperm.slane %v2019, 0
    %v2320 = vperm.slane %v2020, 0
    %v2321 = vperm.slane %v2021, 0
    %v2322 = vperm.slane %v2022, 0
    %v2323 = vperm.slane %v2023, 0
    %v2324 = vperm.slane %v2024, 0
    %v2325 = vperm.slane %v2025, 0
    %v2326 = vperm.slane %v2026, 0
    %v2327 = vperm.slane %v2027, 0
    %v2328 = vperm.slane %v2028, 0
    %v2329 = vperm.slane %v2029, 0
    %v2330 = vperm.slane %v2030, 0
    %v2331 = vperm.slane %v2031, 0
    %v2332 = vperm.slane %v2032, 0
    %v2333 = vperm.slane %v2033, 0
    %v2334 = vperm.slane %v2034, 0
    %v2335 = vperm.slane %v2035, 0
    %v2336 = vperm.slane %v2036, 0
    %v2337 = vperm.slane %v2037, 0
    %v2338 = vperm.slane %v2038, 0
    %vm2339 = vcmask 1041409
    %v2340 = vsel %vm2339, %v2212, %v2211
    %vm2341 = vcmask 1042434
    %v2342 = vsel %vm2341, %v2213, %v2340
    %vm2343 = vcmask 1043459
    %v2344 = vsel %vm2343, %v2214, %v2342
    %vm2345 = vcmask 1044484
    %v2346 = vsel %vm2345, %v2215, %v2344
    %vm2347 = vcmask 1045509
    %v2348 = vsel %vm2347, %v2216, %v2346
    %vm2349 = vcmask 1046534
    %v2350 = vsel %vm2349, %v2217, %v2348
    %vm2351 = vcmask 1047559
    %v2352 = vsel %vm2351, %v2218, %v2350
    %v2353 = vsel %vm2339, %v2220, %v2219
    %v2354 = vsel %vm2341, %v2221, %v2353
    %v2355 = vsel %vm2343, %v2222, %v2354
    %v2356 = vsel %vm2345, %v2223, %v2355
    %v2357 = vsel %vm2347, %v2224, %v2356
    %v2358 = vsel %vm2349, %v2225, %v2357
    %v2359 = vsel %vm2351, %v2226, %v2358
    %v2360 = vsel %vm2339, %v2228, %v2227
    %v2361 = vsel %vm2341, %v2229, %v2360
    %v2362 = vsel %vm2343, %v2230, %v2361
    %v2363 = vsel %vm2345, %v2231, %v2362
    %v2364 = vsel %vm2347, %v2232, %v2363
    %v2365 = vsel %vm2349, %v2233, %v2364
    %v2366 = vsel %vm2351, %v2234, %v2365
    %v2367 = vsel %vm2339, %v2236, %v2235
    %v2368 = vsel %vm2341, %v2237, %v2367
    %v2369 = vsel %vm2343, %v2238, %v2368
    %v2370 = vsel %vm2345, %v2239, %v2369
    %v2371 = vsel %vm2347, %v2240, %v2370
    %v2372 = vsel %vm2349, %v2241, %v2371
    %v2373 = vsel %vm2351, %v2242, %v2372
    %v2374 = vsel %vm2339, %v2244, %v2243
    %v2375 = vsel %vm2341, %v2245, %v2374
    %v2376 = vsel %vm2343, %v2246, %v2375
    %v2377 = vsel %vm2345, %v2247, %v2376
    %v2378 = vsel %vm2347, %v2248, %v2377
    %v2379 = vsel %vm2349, %v2249, %v2378
    %v2380 = vsel %vm2351, %v2250, %v2379
    %v2381 = vsel %vm2339, %v2252, %v2251
    %v2382 = vsel %vm2341, %v2253, %v2381
    %v2383 = vsel %vm2343, %v2254, %v2382
    %v2384 = vsel %vm2345, %v2255, %v2383
    %v2385 = vsel %vm2347, %v2256, %v2384
    %v2386 = vsel %vm2349, %v2257, %v2385
    %v2387 = vsel %vm2351, %v2258, %v2386
    %v2388 = vsel %vm2339, %v2260, %v2259
    %v2389 = vsel %vm2341, %v2261, %v2388
    %v2390 = vsel %vm2343, %v2262, %v2389
    %v2391 = vsel %vm2345, %v2263, %v2390
    %v2392 = vsel %vm2347, %v2264, %v2391
    %v2393 = vsel %vm2349, %v2265, %v2392
    %v2394 = vsel %vm2351, %v2266, %v2393
    %v2395 = vsel %vm2339, %v2268, %v2267
    %v2396 = vsel %vm2341, %v2269, %v2395
    %v2397 = vsel %vm2343, %v2270, %v2396
    %v2398 = vsel %vm2345, %v2271, %v2397
    %v2399 = vsel %vm2347, %v2272, %v2398
    %v2400 = vsel %vm2349, %v2273, %v2399
    %v2401 = vsel %vm2351, %v2274, %v2400
    %v2402 = vsel %vm2339, %v2276, %v2275
    %v2403 = vsel %vm2341, %v2277, %v2402
    %v2404 = vsel %vm2343, %v2278, %v2403
    %v2405 = vsel %vm2345, %v2279, %v2404
    %v2406 = vsel %vm2347, %v2280, %v2405
    %v2407 = vsel %vm2349, %v2281, %v2406
    %v2408 = vsel %vm2351, %v2282, %v2407
    %v2409 = vsel %vm2339, %v2284, %v2283
    %v2410 = vsel %vm2341, %v2285, %v2409
    %v2411 = vsel %vm2343, %v2286, %v2410
    %v2412 = vsel %vm2345, %v2287, %v2411
    %v2413 = vsel %vm2347, %v2288, %v2412
    %v2414 = vsel %vm2349, %v2289, %v2413
    %v2415 = vsel %vm2351, %v2290, %v2414
    %v2416 = vsel %vm2339, %v2292, %v2291
    %v2417 = vsel %vm2341, %v2293, %v2416
    %v2418 = vsel %vm2343, %v2294, %v2417
    %v2419 = vsel %vm2345, %v2295, %v2418
    %v2420 = vsel %vm2347, %v2296, %v2419
    %v2421 = vsel %vm2349, %v2297, %v2420
    %v2422 = vsel %vm2351, %v2298, %v2421
    %v2423 = vsel %vm2339, %v2300, %v2299
    %v2424 = vsel %vm2341, %v2301, %v2423
    %v2425 = vsel %vm2343, %v2302, %v2424
    %v2426 = vsel %vm2345, %v2303, %v2425
    %v2427 = vsel %vm2347, %v2304, %v2426
    %v2428 = vsel %vm2349, %v2305, %v2427
    %v2429 = vsel %vm2351, %v2306, %v2428
    %v2430 = vsel %vm2339, %v2308, %v2307
    %v2431 = vsel %vm2341, %v2309, %v2430
    %v2432 = vsel %vm2343, %v2310, %v2431
    %v2433 = vsel %vm2345, %v2311, %v2432
    %v2434 = vsel %vm2347, %v2312, %v2433
    %v2435 = vsel %vm2349, %v2313, %v2434
    %v2436 = vsel %vm2351, %v2314, %v2435
    %v2437 = vsel %vm2339, %v2316, %v2315
    %v2438 = vsel %vm2341, %v2317, %v2437
    %v2439 = vsel %vm2343, %v2318, %v2438
    %v2440 = vsel %vm2345, %v2319, %v2439
    %v2441 = vsel %vm2347, %v2320, %v2440
    %v2442 = vsel %vm2349, %v2321, %v2441
    %v2443 = vsel %vm2351, %v2322, %v2442
    %v2444 = vsel %vm2339, %v2324, %v2323
    %v2445 = vsel %vm2341, %v2325, %v2444
    %v2446 = vsel %vm2343, %v2326, %v2445
    %v2447 = vsel %vm2345, %v2327, %v2446
    %v2448 = vsel %vm2347, %v2328, %v2447
    %v2449 = vsel %vm2349, %v2329, %v2448
    %v2450 = vsel %vm2351, %v2330, %v2449
    %v2451 = vsel %vm2339, %v2332, %v2331
    %v2452 = vsel %vm2341, %v2333, %v2451
    %v2453 = vsel %vm2343, %v2334, %v2452
    %v2454 = vsel %vm2345, %v2335, %v2453
    %v2455 = vsel %vm2347, %v2336, %v2454
    %v2456 = vsel %vm2349, %v2337, %v2455
    %v2457 = vsel %vm2351, %v2338, %v2456
    %2474 = vst.msk [vmem:[%s2049 + $0x1] sm:$0xff] %vm538, %v2352
    %2475 = vst.msk [vmem:[%s2049 + $0x11] sm:$0xff] %vm538, %v2359
    %2476 = vst.msk [vmem:[%s2049 + $0x21] sm:$0xff] %vm538, %v2366
    %2477 = vst.msk [vmem:[%s2049 + $0x31] sm:$0xff] %vm538, %v2373
    %2478 = vst.msk [vmem:[%s2049 + $0x41] sm:$0xff] %vm538, %v2380
    %2479 = vst.msk [vmem:[%s2049 + $0x51] sm:$0xff] %vm538, %v2387
    %2480 = vst.msk [vmem:[%s2049 + $0x61] sm:$0xff] %vm538, %v2394
    %2481 = vst.msk [vmem:[%s2049 + $0x71] sm:$0xff] %vm538, %v2401
    %2482 = vst.msk [vmem:[%s2049 + $0xa1] sm:$0xff] %vm538, %v2408
    %2483 = vst.msk [vmem:[%s2049 + $0xb1] sm:$0xff] %vm538, %v2415
    %2484 = vst.msk [vmem:[%s2049 + $0xc1] sm:$0xff] %vm538, %v2422
    %2485 = vst.msk [vmem:[%s2049 + $0xd1] sm:$0xff] %vm538, %v2429
    %2486 = vst.msk [vmem:[%s2049 + $0xe1] sm:$0xff] %vm538, %v2436
    %2487 = vst.msk [vmem:[%s2049 + $0xf1] sm:$0xff] %vm538, %v2443
    %2488 = vst.msk [vmem:[%s2049 + $0x101] sm:$0xff] %vm538, %v2450
    %2489 = vst.msk [vmem:[%s2049 + $0x111] sm:$0xff] %vm538, %v2457
    %v2490 = vld [vmem:[#allocation2] sm:$0xff]
    %v2491 = vld [vmem:[#allocation2 + $0x8] sm:$0x3]
    %v2492 = vld [vmem:[#allocation2 + $0x10] sm:$0xff]
    %v2493 = vld [vmem:[#allocation2 + $0x18] sm:$0x3]
    %v2494 = vld [vmem:[#allocation2 + $0x20] sm:$0xff]
    %v2495 = vld [vmem:[#allocation2 + $0x28] sm:$0x3]
    %v2496 = vld [vmem:[#allocation2 + $0x30] sm:$0xff]
    %v2497 = vld [vmem:[#allocation2 + $0x38] sm:$0x3]
    %v2498 = vld [vmem:[#allocation2 + $0x40] sm:$0xff]
    %v2499 = vld [vmem:[#allocation2 + $0x48] sm:$0x3]
    %v2500 = vld [vmem:[#allocation2 + $0x50] sm:$0xff]
    %v2501 = vld [vmem:[#allocation2 + $0x58] sm:$0x3]
    %v2502 = vld [vmem:[#allocation2 + $0x60] sm:$0xff]
    %v2503 = vld [vmem:[#allocation2 + $0x68] sm:$0x3]
    %v2504 = vld [vmem:[#allocation2 + $0x70] sm:$0xff]
    %v2505 = vld [vmem:[#allocation2 + $0x78] sm:$0x3]
    %v2506 = vld [vmem:[#allocation2 + $0x80] sm:$0xff]
    %v2507 = vld [vmem:[#allocation2 + $0x88] sm:$0x3]
    %v2508 = vld [vmem:[#allocation2 + $0x90] sm:$0xff]
    %v2509 = vld [vmem:[#allocation2 + $0x98] sm:$0x3]
    %v2510 = vld [vmem:[#allocation2 + $0xa0] sm:$0xff]
    %v2511 = vld [vmem:[#allocation2 + $0xa8] sm:$0x3]
    %v2512 = vld [vmem:[#allocation2 + $0xb0] sm:$0xff]
    %v2513 = vld [vmem:[#allocation2 + $0xb8] sm:$0x3]
    %v2514 = vld [vmem:[#allocation2 + $0xc0] sm:$0xff]
    %v2515 = vld [vmem:[#allocation2 + $0xc8] sm:$0x3]
    %v2516 = vld [vmem:[#allocation2 + $0xd0] sm:$0xff]
    %v2517 = vld [vmem:[#allocation2 + $0xd8] sm:$0x3]
    %v2518 = vld [vmem:[#allocation2 + $0xe0] sm:$0xff]
    %v2519 = vld [vmem:[#allocation2 + $0xe8] sm:$0x3]
    %v2520 = vld [vmem:[#allocation2 + $0xf0] sm:$0xff]
    %v2521 = vld [vmem:[#allocation2 + $0xf8] sm:$0x3]
    %v2522 = vld [vmem:[#allocation2 + $0x100] sm:$0xff]
    %v2523 = vld [vmem:[#allocation2 + $0x108] sm:$0x3]
    %v2524 = vld [vmem:[#allocation2 + $0x110] sm:$0xff]
    %v2525 = vld [vmem:[#allocation2 + $0x118] sm:$0x3]
    %v2526 = vld [vmem:[#allocation2 + $0x120] sm:$0xff]
    %v2527 = vld [vmem:[#allocation2 + $0x128] sm:$0x3]
    %v2528 = vld [vmem:[#allocation2 + $0x130] sm:$0xff]
    %v2529 = vld [vmem:[#allocation2 + $0x138] sm:$0x3]
    %v2530 = vld [vmem:[%s2] sm:$0xf]
    %v2531 = vld [vmem:[%s2 + $0x4] sm:$0xf]
    %v2532 = vld [vmem:[%s2 + $0x8] sm:$0xf]
    %v2533 = vld [vmem:[%s2 + $0xc] sm:$0xf]
    %v2534 = vld [vmem:[%s2 + $0x10] sm:$0xf]
    %v2535 = vld [vmem:[%s2 + $0x14] sm:$0xf]
    %v2536 = vld [vmem:[%s2 + $0x18] sm:$0xf]
    %v2537 = vld [vmem:[%s2 + $0x1c] sm:$0xf]
    %v2538 = vld [vmem:[%s2 + $0x20] sm:$0xf]
    %v2539 = vld [vmem:[%s2 + $0x24] sm:$0xf]
    %v2540 = vld [vmem:[%s2 + $0x28] sm:$0xf]
    %v2541 = vld [vmem:[%s2 + $0x2c] sm:$0xf]
    %v2542 = vld [vmem:[%s2 + $0x30] sm:$0xf]
    %v2543 = vld [vmem:[%s2 + $0x34] sm:$0xf]
    %v2544 = vld [vmem:[%s2 + $0x38] sm:$0xf]
    %v2545 = vld [vmem:[%s2 + $0x3c] sm:$0xf]
    %v2546 = vld [vmem:[%s2 + $0x40] sm:$0xf]
    %v2547 = vld [vmem:[%s2 + $0x44] sm:$0xf]
    %v2548 = vld [vmem:[%s2 + $0x48] sm:$0xf]
    %v2549 = vld [vmem:[%s2 + $0x4c] sm:$0xf]
    %v2550 = vld [vmem:[%s2 + $0x50] sm:$0xf]
    %v2551 = vld [vmem:[%s2 + $0x54] sm:$0xf]
    %v2552 = vld [vmem:[%s2 + $0x58] sm:$0xf]
    %v2553 = vld [vmem:[%s2 + $0x5c] sm:$0xf]
    %v2554 = vld [vmem:[%s2 + $0x60] sm:$0xf]
    %v2555 = vld [vmem:[%s2 + $0x64] sm:$0xf]
    %v2556 = vld [vmem:[%s2 + $0x68] sm:$0xf]
    %v2557 = vld [vmem:[%s2 + $0x6c] sm:$0xf]
    %v2558 = vld [vmem:[%s2 + $0x70] sm:$0xf]
    %v2559 = vld [vmem:[%s2 + $0x74] sm:$0xf]
    %v2560 = vld [vmem:[%s2 + $0x78] sm:$0xf]
    %v2561 = vld [vmem:[%s2 + $0x7c] sm:$0xf]
    %v2562 = vld [vmem:[%s2 + $0x80] sm:$0xf]
    %v2563 = vld [vmem:[%s2 + $0x84] sm:$0xf]
    %v2564 = vld [vmem:[%s2 + $0x88] sm:$0xf]
    %v2565 = vld [vmem:[%s2 + $0x8c] sm:$0xf]
    %v2566 = vpack.c.bf16 %v2492, %v2490
    %v2567 = vpack.c.bf16 %v2496, %v2494
    %v2568 = vpack.c.bf16 %v2500, %v2498
    %v2569 = vpack.c.bf16 %v2504, %v2502
    %v2570 = vpack.c.bf16 %v2512, %v2510
    %v2571 = vpack.c.bf16 %v2516, %v2514
    %v2572 = vpack.c.bf16 %v2520, %v2518
    %v2573 = vpack.c.bf16 %v2524, %v2522
    %vm2606 = vcmask 1046528
    %v2607 = vrot.slane %v2490, 1
    %v2608 = vrot.slane %v2491, 1
    %v2609 = vsel %vm2606, %v2607, %v2608
    %v2610 = vrot.slane %v2492, 1
    %v2611 = vrot.slane %v2493, 1
    %v2612 = vsel %vm2606, %v2610, %v2611
    %v2613 = vrot.slane %v2494, 1
    %v2614 = vrot.slane %v2495, 1
    %v2615 = vsel %vm2606, %v2613, %v2614
    %v2616 = vrot.slane %v2496, 1
    %v2617 = vrot.slane %v2497, 1
    %v2618 = vsel %vm2606, %v2616, %v2617
    %v2619 = vrot.slane %v2498, 1
    %v2620 = vrot.slane %v2499, 1
    %v2621 = vsel %vm2606, %v2619, %v2620
    %v2622 = vrot.slane %v2500, 1
    %v2623 = vrot.slane %v2501, 1
    %v2624 = vsel %vm2606, %v2622, %v2623
    %v2625 = vrot.slane %v2502, 1
    %v2626 = vrot.slane %v2503, 1
    %v2627 = vsel %vm2606, %v2625, %v2626
    %v2628 = vrot.slane %v2504, 1
    %v2629 = vrot.slane %v2505, 1
    %v2630 = vsel %vm2606, %v2628, %v2629
    %v2631 = vrot.slane %v2510, 1
    %v2632 = vrot.slane %v2511, 1
    %v2633 = vsel %vm2606, %v2631, %v2632
    %v2634 = vrot.slane %v2512, 1
    %v2635 = vrot.slane %v2513, 1
    %v2636 = vsel %vm2606, %v2634, %v2635
    %v2637 = vrot.slane %v2514, 1
    %v2638 = vrot.slane %v2515, 1
    %v2639 = vsel %vm2606, %v2637, %v2638
    %v2640 = vrot.slane %v2516, 1
    %v2641 = vrot.slane %v2517, 1
    %v2642 = vsel %vm2606, %v2640, %v2641
    %v2643 = vrot.slane %v2518, 1
    %v2644 = vrot.slane %v2519, 1
    %v2645 = vsel %vm2606, %v2643, %v2644
    %v2646 = vrot.slane %v2520, 1
    %v2647 = vrot.slane %v2521, 1
    %v2648 = vsel %vm2606, %v2646, %v2647
    %v2649 = vrot.slane %v2522, 1
    %v2650 = vrot.slane %v2523, 1
    %v2651 = vsel %vm2606, %v2649, %v2650
    %v2652 = vrot.slane %v2524, 1
    %v2653 = vrot.slane %v2525, 1
    %v2654 = vsel %vm2606, %v2652, %v2653
    %v2671 = vpack.c.bf16 %v2612, %v2609
    %v2672 = vpack.c.bf16 %v2618, %v2615
    %v2673 = vpack.c.bf16 %v2624, %v2621
    %v2674 = vpack.c.bf16 %v2630, %v2627
    %v2675 = vpack.c.bf16 %v2636, %v2633
    %v2676 = vpack.c.bf16 %v2642, %v2639
    %v2677 = vpack.c.bf16 %v2648, %v2645
    %v2678 = vpack.c.bf16 %v2654, %v2651
    %v2683 = vunpack.c.l.b16 %v2534
    %v2684 = vunpack.c.l.b16 %v2535
    %v2685 = vunpack.c.l.b16 %v2536
    %v2686 = vunpack.c.l.b16 %v2537
    %v2687 = vpack.c.b16 %v2684, %v2683
    %v2688 = vpack.c.b16 %v2686, %v2685
    %v2692 = vsel %vm538, %v2671, 0
    %v2695 = vsel %vm538, %v2672, 0
    %v2698 = vsel %vm538, %v2673, 0
    %v2701 = vsel %vm538, %v2674, 0
    %v2704 = vsel %vm538, %v2675, 0
    %v2707 = vsel %vm538, %v2676, 0
    %v2710 = vsel %vm538, %v2677, 0
    %v2713 = vsel %vm538, %v2678, 0
    %2715 = vmatpush.bf16.msra.mxu0 0
    %2716 = vmatpush.bf16.msra.mxu0 0
    %2717 = vmatpush.bf16.msra.mxu0 0
    %2718 = vmatpush.bf16.msra.mxu0 0
    %2719 = vmatpush.bf16.msra.mxu0 0
    %2720 = vmatpush.bf16.msra.mxu0 0
    %2721 = vmatpush.bf16.msra.mxu0 %v2688
    %2722 = vmatpush.bf16.msra.mxu0 %v2687
    %2723 = vmatmul.bf16.gmra.mxu0 %v2692
    %v2724 = vpop.f32.mrf.mxu0
    %v2725 = vadd.f32 0.0, %v2724
    %v2726 = vpop.f32.mrf.mxu0
    %v2727 = vadd.f32 0.0, %v2726
    %2728 = vmatmul.bf16.gmra.mxu0 %v2695
    %v2729 = vpop.f32.mrf.mxu0
    %v2730 = vadd.f32 0.0, %v2729
    %v2731 = vpop.f32.mrf.mxu0
    %v2732 = vadd.f32 0.0, %v2731
    %2733 = vmatmul.bf16.gmra.mxu0 %v2698
    %v2734 = vpop.f32.mrf.mxu0
    %v2735 = vadd.f32 0.0, %v2734
    %v2736 = vpop.f32.mrf.mxu0
    %v2737 = vadd.f32 0.0, %v2736
    %2738 = vmatmul.bf16.gmra.mxu0 %v2701
    %v2739 = vpop.f32.mrf.mxu0
    %v2740 = vadd.f32 0.0, %v2739
    %v2741 = vpop.f32.mrf.mxu0
    %v2742 = vadd.f32 0.0, %v2741
    %2743 = vmatmul.bf16.gmra.mxu0 %v2704
    %v2744 = vpop.f32.mrf.mxu0
    %v2745 = vadd.f32 0.0, %v2744
    %v2746 = vpop.f32.mrf.mxu0
    %v2747 = vadd.f32 0.0, %v2746
    %2748 = vmatmul.bf16.gmra.mxu0 %v2707
    %v2749 = vpop.f32.mrf.mxu0
    %v2750 = vadd.f32 0.0, %v2749
    %v2751 = vpop.f32.mrf.mxu0
    %v2752 = vadd.f32 0.0, %v2751
    %2753 = vmatmul.bf16.gmra.mxu0 %v2710
    %v2754 = vpop.f32.mrf.mxu0
    %v2755 = vadd.f32 0.0, %v2754
    %v2756 = vpop.f32.mrf.mxu0
    %v2757 = vadd.f32 0.0, %v2756
    %2758 = vmatmul.bf16.gmra.mxu0 %v2713
    %v2759 = vpop.f32.mrf.mxu0
    %v2760 = vadd.f32 0.0, %v2759
    %v2761 = vpop.f32.mrf.mxu0
    %v2762 = vadd.f32 0.0, %v2761
    %2763 = vdwg.mxu0
    %v2768 = vunpack.c.l.b16 %v2530
    %v2769 = vunpack.c.l.b16 %v2531
    %v2770 = vunpack.c.l.b16 %v2532
    %v2771 = vunpack.c.l.b16 %v2533
    %v2772 = vpack.c.b16 %v2769, %v2768
    %v2773 = vpack.c.b16 %v2771, %v2770
    %v2777 = vsel %vm538, %v2566, 0
    %v2780 = vsel %vm538, %v2567, 0
    %v2783 = vsel %vm538, %v2568, 0
    %v2786 = vsel %vm538, %v2569, 0
    %v2789 = vsel %vm538, %v2570, 0
    %v2792 = vsel %vm538, %v2571, 0
    %v2795 = vsel %vm538, %v2572, 0
    %v2798 = vsel %vm538, %v2573, 0
    %2800 = vmatpush.bf16.msra.mxu0 0
    %2801 = vmatpush.bf16.msra.mxu0 0
    %2802 = vmatpush.bf16.msra.mxu0 0
    %2803 = vmatpush.bf16.msra.mxu0 0
    %2804 = vmatpush.bf16.msra.mxu0 0
    %2805 = vmatpush.bf16.msra.mxu0 0
    %2806 = vmatpush.bf16.msra.mxu0 %v2773
    %2807 = vmatpush.bf16.msra.mxu0 %v2772
    %2808 = vmatmul.bf16.gmra.mxu0 %v2777
    %v2809 = vpop.f32.mrf.mxu0
    %v2810 = vadd.f32 %v2725, %v2809
    %v2811 = vpop.f32.mrf.mxu0
    %v2812 = vadd.f32 %v2727, %v2811
    %2813 = vmatmul.bf16.gmra.mxu0 %v2780
    %v2814 = vpop.f32.mrf.mxu0
    %v2815 = vadd.f32 %v2730, %v2814
    %v2816 = vpop.f32.mrf.mxu0
    %v2817 = vadd.f32 %v2732, %v2816
    %2818 = vmatmul.bf16.gmra.mxu0 %v2783
    %v2819 = vpop.f32.mrf.mxu0
    %v2820 = vadd.f32 %v2735, %v2819
    %v2821 = vpop.f32.mrf.mxu0
    %v2822 = vadd.f32 %v2737, %v2821
    %2823 = vmatmul.bf16.gmra.mxu0 %v2786
    %v2824 = vpop.f32.mrf.mxu0
    %v2825 = vadd.f32 %v2740, %v2824
    %v2826 = vpop.f32.mrf.mxu0
    %v2827 = vadd.f32 %v2742, %v2826
    %2828 = vmatmul.bf16.gmra.mxu0 %v2789
    %v2829 = vpop.f32.mrf.mxu0
    %v2830 = vadd.f32 %v2745, %v2829
    %v2831 = vpop.f32.mrf.mxu0
    %v2832 = vadd.f32 %v2747, %v2831
    %2833 = vmatmul.bf16.gmra.mxu0 %v2792
    %v2834 = vpop.f32.mrf.mxu0
    %v2835 = vadd.f32 %v2750, %v2834
    %v2836 = vpop.f32.mrf.mxu0
    %v2837 = vadd.f32 %v2752, %v2836
    %2838 = vmatmul.bf16.gmra.mxu0 %v2795
    %v2839 = vpop.f32.mrf.mxu0
    %v2840 = vadd.f32 %v2755, %v2839
    %v2841 = vpop.f32.mrf.mxu0
    %v2842 = vadd.f32 %v2757, %v2841
    %2843 = vmatmul.bf16.gmra.mxu0 %v2798
    %v2844 = vpop.f32.mrf.mxu0
    %v2845 = vadd.f32 %v2760, %v2844
    %v2846 = vpop.f32.mrf.mxu0
    %v2847 = vadd.f32 %v2762, %v2846
    %2848 = vdwg.mxu0
    %v2849 = vrot.slane %v2490, 2
    %v2850 = vrot.slane %v2491, 2
    %v2851 = vsel %vm363, %v2849, %v2850
    %v2852 = vrot.slane %v2492, 2
    %v2853 = vrot.slane %v2493, 2
    %v2854 = vsel %vm363, %v2852, %v2853
    %v2855 = vrot.slane %v2494, 2
    %v2856 = vrot.slane %v2495, 2
    %v2857 = vsel %vm363, %v2855, %v2856
    %v2858 = vrot.slane %v2496, 2
    %v2859 = vrot.slane %v2497, 2
    %v2860 = vsel %vm363, %v2858, %v2859
    %v2861 = vrot.slane %v2498, 2
    %v2862 = vrot.slane %v2499, 2
    %v2863 = vsel %vm363, %v2861, %v2862
    %v2864 = vrot.slane %v2500, 2
    %v2865 = vrot.slane %v2501, 2
    %v2866 = vsel %vm363, %v2864, %v2865
    %v2867 = vrot.slane %v2502, 2
    %v2868 = vrot.slane %v2503, 2
    %v2869 = vsel %vm363, %v2867, %v2868
    %v2870 = vrot.slane %v2504, 2
    %v2871 = vrot.slane %v2505, 2
    %v2872 = vsel %vm363, %v2870, %v2871
    %v2873 = vrot.slane %v2510, 2
    %v2874 = vrot.slane %v2511, 2
    %v2875 = vsel %vm363, %v2873, %v2874
    %v2876 = vrot.slane %v2512, 2
    %v2877 = vrot.slane %v2513, 2
    %v2878 = vsel %vm363, %v2876, %v2877
    %v2879 = vrot.slane %v2514, 2
    %v2880 = vrot.slane %v2515, 2
    %v2881 = vsel %vm363, %v2879, %v2880
    %v2882 = vrot.slane %v2516, 2
    %v2883 = vrot.slane %v2517, 2
    %v2884 = vsel %vm363, %v2882, %v2883
    %v2885 = vrot.slane %v2518, 2
    %v2886 = vrot.slane %v2519, 2
    %v2887 = vsel %vm363, %v2885, %v2886
    %v2888 = vrot.slane %v2520, 2
    %v2889 = vrot.slane %v2521, 2
    %v2890 = vsel %vm363, %v2888, %v2889
    %v2891 = vrot.slane %v2522, 2
    %v2892 = vrot.slane %v2523, 2
    %v2893 = vsel %vm363, %v2891, %v2892
    %v2894 = vrot.slane %v2524, 2
    %v2895 = vrot.slane %v2525, 2
    %v2896 = vsel %vm363, %v2894, %v2895
    %v2913 = vpack.c.bf16 %v2854, %v2851
    %v2914 = vpack.c.bf16 %v2860, %v2857
    %v2915 = vpack.c.bf16 %v2866, %v2863
    %v2916 = vpack.c.bf16 %v2872, %v2869
    %v2917 = vpack.c.bf16 %v2878, %v2875
    %v2918 = vpack.c.bf16 %v2884, %v2881
    %v2919 = vpack.c.bf16 %v2890, %v2887
    %v2920 = vpack.c.bf16 %v2896, %v2893
    %v2925 = vunpack.c.l.b16 %v2538
    %v2926 = vunpack.c.l.b16 %v2539
    %v2927 = vunpack.c.l.b16 %v2540
    %v2928 = vunpack.c.l.b16 %v2541
    %v2929 = vpack.c.b16 %v2926, %v2925
    %v2930 = vpack.c.b16 %v2928, %v2927
    %v2934 = vsel %vm538, %v2913, 0
    %v2937 = vsel %vm538, %v2914, 0
    %v2940 = vsel %vm538, %v2915, 0
    %v2943 = vsel %vm538, %v2916, 0
    %v2946 = vsel %vm538, %v2917, 0
    %v2949 = vsel %vm538, %v2918, 0
    %v2952 = vsel %vm538, %v2919, 0
    %v2955 = vsel %vm538, %v2920, 0
    %2957 = vmatpush.bf16.msra.mxu0 0
    %2958 = vmatpush.bf16.msra.mxu0 0
    %2959 = vmatpush.bf16.msra.mxu0 0
    %2960 = vmatpush.bf16.msra.mxu0 0
    %2961 = vmatpush.bf16.msra.mxu0 0
    %2962 = vmatpush.bf16.msra.mxu0 0
    %2963 = vmatpush.bf16.msra.mxu0 %v2930
    %2964 = vmatpush.bf16.msra.mxu0 %v2929
    %2965 = vmatmul.bf16.gmra.mxu0 %v2934
    %v2966 = vpop.f32.mrf.mxu0
    %v2967 = vadd.f32 0.0, %v2966
    %v2968 = vpop.f32.mrf.mxu0
    %v2969 = vadd.f32 0.0, %v2968
    %2970 = vmatmul.bf16.gmra.mxu0 %v2937
    %v2971 = vpop.f32.mrf.mxu0
    %v2972 = vadd.f32 0.0, %v2971
    %v2973 = vpop.f32.mrf.mxu0
    %v2974 = vadd.f32 0.0, %v2973
    %2975 = vmatmul.bf16.gmra.mxu0 %v2940
    %v2976 = vpop.f32.mrf.mxu0
    %v2977 = vadd.f32 0.0, %v2976
    %v2978 = vpop.f32.mrf.mxu0
    %v2979 = vadd.f32 0.0, %v2978
    %2980 = vmatmul.bf16.gmra.mxu0 %v2943
    %v2981 = vpop.f32.mrf.mxu0
    %v2982 = vadd.f32 0.0, %v2981
    %v2983 = vpop.f32.mrf.mxu0
    %v2984 = vadd.f32 0.0, %v2983
    %2985 = vmatmul.bf16.gmra.mxu0 %v2946
    %v2986 = vpop.f32.mrf.mxu0
    %v2987 = vadd.f32 0.0, %v2986
    %v2988 = vpop.f32.mrf.mxu0
    %v2989 = vadd.f32 0.0, %v2988
    %2990 = vmatmul.bf16.gmra.mxu0 %v2949
    %v2991 = vpop.f32.mrf.mxu0
    %v2992 = vadd.f32 0.0, %v2991
    %v2993 = vpop.f32.mrf.mxu0
    %v2994 = vadd.f32 0.0, %v2993
    %2995 = vmatmul.bf16.gmra.mxu0 %v2952
    %v2996 = vpop.f32.mrf.mxu0
    %v2997 = vadd.f32 0.0, %v2996
    %v2998 = vpop.f32.mrf.mxu0
    %v2999 = vadd.f32 0.0, %v2998
    %3000 = vmatmul.bf16.gmra.mxu0 %v2955
    %v3001 = vpop.f32.mrf.mxu0
    %v3002 = vadd.f32 0.0, %v3001
    %v3003 = vpop.f32.mrf.mxu0
    %v3004 = vadd.f32 0.0, %v3003
    %3005 = vdwg.mxu0
    %v3006 = vadd.f32 %v2810, %v2967
    %v3007 = vadd.f32 %v2812, %v2969
    %v3008 = vadd.f32 %v2815, %v2972
    %v3009 = vadd.f32 %v2817, %v2974
    %v3010 = vadd.f32 %v2820, %v2977
    %v3011 = vadd.f32 %v2822, %v2979
    %v3012 = vadd.f32 %v2825, %v2982
    %v3013 = vadd.f32 %v2827, %v2984
    %v3014 = vadd.f32 %v2830, %v2987
    %v3015 = vadd.f32 %v2832, %v2989
    %v3016 = vadd.f32 %v2835, %v2992
    %v3017 = vadd.f32 %v2837, %v2994
    %v3018 = vadd.f32 %v2840, %v2997
    %v3019 = vadd.f32 %v2842, %v2999
    %v3020 = vadd.f32 %v2845, %v3002
    %v3021 = vadd.f32 %v2847, %v3004
    %v3022 = vpack.c.bf16 %v2494, %v2492
    %v3023 = vpack.c.bf16 %v2498, %v2496
    %v3024 = vpack.c.bf16 %v2502, %v2500
    %v3025 = vpack.c.bf16 %v2506, %v2504
    %v3026 = vpack.c.bf16 %v2514, %v2512
    %v3027 = vpack.c.bf16 %v2518, %v2516
    %v3028 = vpack.c.bf16 %v2522, %v2520
    %v3029 = vpack.c.bf16 %v2526, %v2524
    %v3034 = vunpack.c.l.b16 %v2542
    %v3035 = vunpack.c.l.b16 %v2543
    %v3036 = vunpack.c.l.b16 %v2544
    %v3037 = vunpack.c.l.b16 %v2545
    %v3038 = vpack.c.b16 %v3035, %v3034
    %v3039 = vpack.c.b16 %v3037, %v3036
    %v3043 = vsel %vm538, %v3022, 0
    %v3046 = vsel %vm538, %v3023, 0
    %v3049 = vsel %vm538, %v3024, 0
    %v3052 = vsel %vm538, %v3025, 0
    %v3055 = vsel %vm538, %v3026, 0
    %v3058 = vsel %vm538, %v3027, 0
    %v3061 = vsel %vm538, %v3028, 0
    %v3064 = vsel %vm538, %v3029, 0
    %3066 = vmatpush.bf16.msra.mxu0 0
    %3067 = vmatpush.bf16.msra.mxu0 0
    %3068 = vmatpush.bf16.msra.mxu0 0
    %3069 = vmatpush.bf16.msra.mxu0 0
    %3070 = vmatpush.bf16.msra.mxu0 0
    %3071 = vmatpush.bf16.msra.mxu0 0
    %3072 = vmatpush.bf16.msra.mxu0 %v3039
    %3073 = vmatpush.bf16.msra.mxu0 %v3038
    %3074 = vmatmul.bf16.gmra.mxu0 %v3043
    %v3075 = vpop.f32.mrf.mxu0
    %v3076 = vadd.f32 0.0, %v3075
    %v3077 = vpop.f32.mrf.mxu0
    %v3078 = vadd.f32 0.0, %v3077
    %3079 = vmatmul.bf16.gmra.mxu0 %v3046
    %v3080 = vpop.f32.mrf.mxu0
    %v3081 = vadd.f32 0.0, %v3080
    %v3082 = vpop.f32.mrf.mxu0
    %v3083 = vadd.f32 0.0, %v3082
    %3084 = vmatmul.bf16.gmra.mxu0 %v3049
    %v3085 = vpop.f32.mrf.mxu0
    %v3086 = vadd.f32 0.0, %v3085
    %v3087 = vpop.f32.mrf.mxu0
    %v3088 = vadd.f32 0.0, %v3087
    %3089 = vmatmul.bf16.gmra.mxu0 %v3052
    %v3090 = vpop.f32.mrf.mxu0
    %v3091 = vadd.f32 0.0, %v3090
    %v3092 = vpop.f32.mrf.mxu0
    %v3093 = vadd.f32 0.0, %v3092
    %3094 = vmatmul.bf16.gmra.mxu0 %v3055
    %v3095 = vpop.f32.mrf.mxu0
    %v3096 = vadd.f32 0.0, %v3095
    %v3097 = vpop.f32.mrf.mxu0
    %v3098 = vadd.f32 0.0, %v3097
    %3099 = vmatmul.bf16.gmra.mxu0 %v3058
    %v3100 = vpop.f32.mrf.mxu0
    %v3101 = vadd.f32 0.0, %v3100
    %v3102 = vpop.f32.mrf.mxu0
    %v3103 = vadd.f32 0.0, %v3102
    %3104 = vmatmul.bf16.gmra.mxu0 %v3061
    %v3105 = vpop.f32.mrf.mxu0
    %v3106 = vadd.f32 0.0, %v3105
    %v3107 = vpop.f32.mrf.mxu0
    %v3108 = vadd.f32 0.0, %v3107
    %3109 = vmatmul.bf16.gmra.mxu0 %v3064
    %v3110 = vpop.f32.mrf.mxu0
    %v3111 = vadd.f32 0.0, %v3110
    %v3112 = vpop.f32.mrf.mxu0
    %v3113 = vadd.f32 0.0, %v3112
    %3114 = vdwg.mxu0
    %v3115 = vadd.f32 %v3006, %v3076
    %v3116 = vadd.f32 %v3007, %v3078
    %v3117 = vadd.f32 %v3008, %v3081
    %v3118 = vadd.f32 %v3009, %v3083
    %v3119 = vadd.f32 %v3010, %v3086
    %v3120 = vadd.f32 %v3011, %v3088
    %v3121 = vadd.f32 %v3012, %v3091
    %v3122 = vadd.f32 %v3013, %v3093
    %v3123 = vadd.f32 %v3014, %v3096
    %v3124 = vadd.f32 %v3015, %v3098
    %v3125 = vadd.f32 %v3016, %v3101
    %v3126 = vadd.f32 %v3017, %v3103
    %v3127 = vadd.f32 %v3018, %v3106
    %v3128 = vadd.f32 %v3019, %v3108
    %v3129 = vadd.f32 %v3020, %v3111
    %v3130 = vadd.f32 %v3021, %v3113
    %v3135 = vrot.slane %v2506, 1
    %v3136 = vrot.slane %v2507, 1
    %v3137 = vsel %vm2606, %v3135, %v3136
    %v3138 = vrot.slane %v2526, 1
    %v3139 = vrot.slane %v2527, 1
    %v3140 = vsel %vm2606, %v3138, %v3139
    %v3143 = vpack.c.bf16 %v2615, %v2612
    %v3144 = vpack.c.bf16 %v2621, %v2618
    %v3145 = vpack.c.bf16 %v2627, %v2624
    %v3146 = vpack.c.bf16 %v3137, %v2630
    %v3147 = vpack.c.bf16 %v2639, %v2636
    %v3148 = vpack.c.bf16 %v2645, %v2642
    %v3149 = vpack.c.bf16 %v2651, %v2648
    %v3150 = vpack.c.bf16 %v3140, %v2654
    %v3155 = vunpack.c.l.b16 %v2546
    %v3156 = vunpack.c.l.b16 %v2547
    %v3157 = vunpack.c.l.b16 %v2548
    %v3158 = vunpack.c.l.b16 %v2549
    %v3159 = vpack.c.b16 %v3156, %v3155
    %v3160 = vpack.c.b16 %v3158, %v3157
    %v3164 = vsel %vm538, %v3143, 0
    %v3167 = vsel %vm538, %v3144, 0
    %v3170 = vsel %vm538, %v3145, 0
    %v3173 = vsel %vm538, %v3146, 0
    %v3176 = vsel %vm538, %v3147, 0
    %v3179 = vsel %vm538, %v3148, 0
    %v3182 = vsel %vm538, %v3149, 0
    %v3185 = vsel %vm538, %v3150, 0
    %3187 = vmatpush.bf16.msra.mxu0 0
    %3188 = vmatpush.bf16.msra.mxu0 0
    %3189 = vmatpush.bf16.msra.mxu0 0
    %3190 = vmatpush.bf16.msra.mxu0 0
    %3191 = vmatpush.bf16.msra.mxu0 0
    %3192 = vmatpush.bf16.msra.mxu0 0
    %3193 = vmatpush.bf16.msra.mxu0 %v3160
    %3194 = vmatpush.bf16.msra.mxu0 %v3159
    %3195 = vmatmul.bf16.gmra.mxu0 %v3164
    %v3196 = vpop.f32.mrf.mxu0
    %v3197 = vadd.f32 0.0, %v3196
    %v3198 = vpop.f32.mrf.mxu0
    %v3199 = vadd.f32 0.0, %v3198
    %3200 = vmatmul.bf16.gmra.mxu0 %v3167
    %v3201 = vpop.f32.mrf.mxu0
    %v3202 = vadd.f32 0.0, %v3201
    %v3203 = vpop.f32.mrf.mxu0
    %v3204 = vadd.f32 0.0, %v3203
    %3205 = vmatmul.bf16.gmra.mxu0 %v3170
    %v3206 = vpop.f32.mrf.mxu0
    %v3207 = vadd.f32 0.0, %v3206
    %v3208 = vpop.f32.mrf.mxu0
    %v3209 = vadd.f32 0.0, %v3208
    %3210 = vmatmul.bf16.gmra.mxu0 %v3173
    %v3211 = vpop.f32.mrf.mxu0
    %v3212 = vadd.f32 0.0, %v3211
    %v3213 = vpop.f32.mrf.mxu0
    %v3214 = vadd.f32 0.0, %v3213
    %3215 = vmatmul.bf16.gmra.mxu0 %v3176
    %v3216 = vpop.f32.mrf.mxu0
    %v3217 = vadd.f32 0.0, %v3216
    %v3218 = vpop.f32.mrf.mxu0
    %v3219 = vadd.f32 0.0, %v3218
    %3220 = vmatmul.bf16.gmra.mxu0 %v3179
    %v3221 = vpop.f32.mrf.mxu0
    %v3222 = vadd.f32 0.0, %v3221
    %v3223 = vpop.f32.mrf.mxu0
    %v3224 = vadd.f32 0.0, %v3223
    %3225 = vmatmul.bf16.gmra.mxu0 %v3182
    %v3226 = vpop.f32.mrf.mxu0
    %v3227 = vadd.f32 0.0, %v3226
    %v3228 = vpop.f32.mrf.mxu0
    %v3229 = vadd.f32 0.0, %v3228
    %3230 = vmatmul.bf16.gmra.mxu0 %v3185
    %v3231 = vpop.f32.mrf.mxu0
    %v3232 = vadd.f32 0.0, %v3231
    %v3233 = vpop.f32.mrf.mxu0
    %v3234 = vadd.f32 0.0, %v3233
    %3235 = vdwg.mxu0
    %v3236 = vadd.f32 %v3115, %v3197
    %v3237 = vadd.f32 %v3116, %v3199
    %v3238 = vadd.f32 %v3117, %v3202
    %v3239 = vadd.f32 %v3118, %v3204
    %v3240 = vadd.f32 %v3119, %v3207
    %v3241 = vadd.f32 %v3120, %v3209
    %v3242 = vadd.f32 %v3121, %v3212
    %v3243 = vadd.f32 %v3122, %v3214
    %v3244 = vadd.f32 %v3123, %v3217
    %v3245 = vadd.f32 %v3124, %v3219
    %v3246 = vadd.f32 %v3125, %v3222
    %v3247 = vadd.f32 %v3126, %v3224
    %v3248 = vadd.f32 %v3127, %v3227
    %v3249 = vadd.f32 %v3128, %v3229
    %v3250 = vadd.f32 %v3129, %v3232
    %v3251 = vadd.f32 %v3130, %v3234
    %v3252 = vrot.slane %v2506, 2
    %v3253 = vrot.slane %v2507, 2
    %v3254 = vsel %vm363, %v3252, %v3253
    %v3255 = vrot.slane %v2526, 2
    %v3256 = vrot.slane %v2527, 2
    %v3257 = vsel %vm363, %v3255, %v3256
    %v3260 = vpack.c.bf16 %v2857, %v2854
    %v3261 = vpack.c.bf16 %v2863, %v2860
    %v3262 = vpack.c.bf16 %v2869, %v2866
    %v3263 = vpack.c.bf16 %v3254, %v2872
    %v3264 = vpack.c.bf16 %v2881, %v2878
    %v3265 = vpack.c.bf16 %v2887, %v2884
    %v3266 = vpack.c.bf16 %v2893, %v2890
    %v3267 = vpack.c.bf16 %v3257, %v2896
    %v3272 = vunpack.c.l.b16 %v2550
    %v3273 = vunpack.c.l.b16 %v2551
    %v3274 = vunpack.c.l.b16 %v2552
    %v3275 = vunpack.c.l.b16 %v2553
    %v3276 = vpack.c.b16 %v3273, %v3272
    %v3277 = vpack.c.b16 %v3275, %v3274
    %v3281 = vsel %vm538, %v3260, 0
    %v3284 = vsel %vm538, %v3261, 0
    %v3287 = vsel %vm538, %v3262, 0
    %v3290 = vsel %vm538, %v3263, 0
    %v3293 = vsel %vm538, %v3264, 0
    %v3296 = vsel %vm538, %v3265, 0
    %v3299 = vsel %vm538, %v3266, 0
    %v3302 = vsel %vm538, %v3267, 0
    %3304 = vmatpush.bf16.msra.mxu0 0
    %3305 = vmatpush.bf16.msra.mxu0 0
    %3306 = vmatpush.bf16.msra.mxu0 0
    %3307 = vmatpush.bf16.msra.mxu0 0
    %3308 = vmatpush.bf16.msra.mxu0 0
    %3309 = vmatpush.bf16.msra.mxu0 0
    %3310 = vmatpush.bf16.msra.mxu0 %v3277
    %3311 = vmatpush.bf16.msra.mxu0 %v3276
    %3312 = vmatmul.bf16.gmra.mxu0 %v3281
    %v3313 = vpop.f32.mrf.mxu0
    %v3314 = vadd.f32 0.0, %v3313
    %v3315 = vpop.f32.mrf.mxu0
    %v3316 = vadd.f32 0.0, %v3315
    %3317 = vmatmul.bf16.gmra.mxu0 %v3284
    %v3318 = vpop.f32.mrf.mxu0
    %v3319 = vadd.f32 0.0, %v3318
    %v3320 = vpop.f32.mrf.mxu0
    %v3321 = vadd.f32 0.0, %v3320
    %3322 = vmatmul.bf16.gmra.mxu0 %v3287
    %v3323 = vpop.f32.mrf.mxu0
    %v3324 = vadd.f32 0.0, %v3323
    %v3325 = vpop.f32.mrf.mxu0
    %v3326 = vadd.f32 0.0, %v3325
    %3327 = vmatmul.bf16.gmra.mxu0 %v3290
    %v3328 = vpop.f32.mrf.mxu0
    %v3329 = vadd.f32 0.0, %v3328
    %v3330 = vpop.f32.mrf.mxu0
    %v3331 = vadd.f32 0.0, %v3330
    %3332 = vmatmul.bf16.gmra.mxu0 %v3293
    %v3333 = vpop.f32.mrf.mxu0
    %v3334 = vadd.f32 0.0, %v3333
    %v3335 = vpop.f32.mrf.mxu0
    %v3336 = vadd.f32 0.0, %v3335
    %3337 = vmatmul.bf16.gmra.mxu0 %v3296
    %v3338 = vpop.f32.mrf.mxu0
    %v3339 = vadd.f32 0.0, %v3338
    %v3340 = vpop.f32.mrf.mxu0
    %v3341 = vadd.f32 0.0, %v3340
    %3342 = vmatmul.bf16.gmra.mxu0 %v3299
    %v3343 = vpop.f32.mrf.mxu0
    %v3344 = vadd.f32 0.0, %v3343
    %v3345 = vpop.f32.mrf.mxu0
    %v3346 = vadd.f32 0.0, %v3345
    %3347 = vmatmul.bf16.gmra.mxu0 %v3302
    %v3348 = vpop.f32.mrf.mxu0
    %v3349 = vadd.f32 0.0, %v3348
    %v3350 = vpop.f32.mrf.mxu0
    %v3351 = vadd.f32 0.0, %v3350
    %3352 = vdwg.mxu0
    %v3353 = vadd.f32 %v3236, %v3314
    %v3354 = vadd.f32 %v3237, %v3316
    %v3355 = vadd.f32 %v3238, %v3319
    %v3356 = vadd.f32 %v3239, %v3321
    %v3357 = vadd.f32 %v3240, %v3324
    %v3358 = vadd.f32 %v3241, %v3326
    %v3359 = vadd.f32 %v3242, %v3329
    %v3360 = vadd.f32 %v3243, %v3331
    %v3361 = vadd.f32 %v3244, %v3334
    %v3362 = vadd.f32 %v3245, %v3336
    %v3363 = vadd.f32 %v3246, %v3339
    %v3364 = vadd.f32 %v3247, %v3341
    %v3365 = vadd.f32 %v3248, %v3344
    %v3366 = vadd.f32 %v3249, %v3346
    %v3367 = vadd.f32 %v3250, %v3349
    %v3368 = vadd.f32 %v3251, %v3351
    %v3369 = vpack.c.bf16 %v2508, %v2506
    %v3370 = vpack.c.bf16 %v2528, %v2526
    %v3375 = vunpack.c.l.b16 %v2554
    %v3376 = vunpack.c.l.b16 %v2555
    %v3377 = vunpack.c.l.b16 %v2556
    %v3378 = vunpack.c.l.b16 %v2557
    %v3379 = vpack.c.b16 %v3376, %v3375
    %v3380 = vpack.c.b16 %v3378, %v3377
    %v3384 = vsel %vm538, %v3369, 0
    %v3387 = vsel %vm538, %v3370, 0
    %3389 = vmatpush.bf16.msra.mxu0 0
    %3390 = vmatpush.bf16.msra.mxu0 0
    %3391 = vmatpush.bf16.msra.mxu0 0
    %3392 = vmatpush.bf16.msra.mxu0 0
    %3393 = vmatpush.bf16.msra.mxu0 0
    %3394 = vmatpush.bf16.msra.mxu0 0
    %3395 = vmatpush.bf16.msra.mxu0 %v3380
    %3396 = vmatpush.bf16.msra.mxu0 %v3379
    %3397 = vmatmul.bf16.gmra.mxu0 %v2780
    %v3398 = vpop.f32.mrf.mxu0
    %v3399 = vadd.f32 0.0, %v3398
    %v3400 = vpop.f32.mrf.mxu0
    %v3401 = vadd.f32 0.0, %v3400
    %3402 = vmatmul.bf16.gmra.mxu0 %v2783
    %v3403 = vpop.f32.mrf.mxu0
    %v3404 = vadd.f32 0.0, %v3403
    %v3405 = vpop.f32.mrf.mxu0
    %v3406 = vadd.f32 0.0, %v3405
    %3407 = vmatmul.bf16.gmra.mxu0 %v2786
    %v3408 = vpop.f32.mrf.mxu0
    %v3409 = vadd.f32 0.0, %v3408
    %v3410 = vpop.f32.mrf.mxu0
    %v3411 = vadd.f32 0.0, %v3410
    %3412 = vmatmul.bf16.gmra.mxu0 %v3384
    %v3413 = vpop.f32.mrf.mxu0
    %v3414 = vadd.f32 0.0, %v3413
    %v3415 = vpop.f32.mrf.mxu0
    %v3416 = vadd.f32 0.0, %v3415
    %3417 = vmatmul.bf16.gmra.mxu0 %v2792
    %v3418 = vpop.f32.mrf.mxu0
    %v3419 = vadd.f32 0.0, %v3418
    %v3420 = vpop.f32.mrf.mxu0
    %v3421 = vadd.f32 0.0, %v3420
    %3422 = vmatmul.bf16.gmra.mxu0 %v2795
    %v3423 = vpop.f32.mrf.mxu0
    %v3424 = vadd.f32 0.0, %v3423
    %v3425 = vpop.f32.mrf.mxu0
    %v3426 = vadd.f32 0.0, %v3425
    %3427 = vmatmul.bf16.gmra.mxu0 %v2798
    %v3428 = vpop.f32.mrf.mxu0
    %v3429 = vadd.f32 0.0, %v3428
    %v3430 = vpop.f32.mrf.mxu0
    %v3431 = vadd.f32 0.0, %v3430
    %3432 = vmatmul.bf16.gmra.mxu0 %v3387
    %v3433 = vpop.f32.mrf.mxu0
    %v3434 = vadd.f32 0.0, %v3433
    %v3435 = vpop.f32.mrf.mxu0
    %v3436 = vadd.f32 0.0, %v3435
    %3437 = vdwg.mxu0
    %v3438 = vadd.f32 %v3353, %v3399
    %v3439 = vadd.f32 %v3354, %v3401
    %v3440 = vadd.f32 %v3355, %v3404
    %v3441 = vadd.f32 %v3356, %v3406
    %v3442 = vadd.f32 %v3357, %v3409
    %v3443 = vadd.f32 %v3358, %v3411
    %v3444 = vadd.f32 %v3359, %v3414
    %v3445 = vadd.f32 %v3360, %v3416
    %v3446 = vadd.f32 %v3361, %v3419
    %v3447 = vadd.f32 %v3362, %v3421
    %v3448 = vadd.f32 %v3363, %v3424
    %v3449 = vadd.f32 %v3364, %v3426
    %v3450 = vadd.f32 %v3365, %v3429
    %v3451 = vadd.f32 %v3366, %v3431
    %v3452 = vadd.f32 %v3367, %v3434
    %v3453 = vadd.f32 %v3368, %v3436
    %v3458 = vrot.slane %v2508, 1
    %v3459 = vrot.slane %v2509, 1
    %v3460 = vsel %vm2606, %v3458, %v3459
    %v3461 = vrot.slane %v2528, 1
    %v3462 = vrot.slane %v2529, 1
    %v3463 = vsel %vm2606, %v3461, %v3462
    %v3466 = vpack.c.bf16 %v3460, %v3137
    %v3467 = vpack.c.bf16 %v3463, %v3140
    %v3472 = vunpack.c.l.b16 %v2558
    %v3473 = vunpack.c.l.b16 %v2559
    %v3474 = vunpack.c.l.b16 %v2560
    %v3475 = vunpack.c.l.b16 %v2561
    %v3476 = vpack.c.b16 %v3473, %v3472
    %v3477 = vpack.c.b16 %v3475, %v3474
    %v3481 = vsel %vm538, %v3466, 0
    %v3484 = vsel %vm538, %v3467, 0
    %3486 = vmatpush.bf16.msra.mxu0 0
    %3487 = vmatpush.bf16.msra.mxu0 0
    %3488 = vmatpush.bf16.msra.mxu0 0
    %3489 = vmatpush.bf16.msra.mxu0 0
    %3490 = vmatpush.bf16.msra.mxu0 0
    %3491 = vmatpush.bf16.msra.mxu0 0
    %3492 = vmatpush.bf16.msra.mxu0 %v3477
    %3493 = vmatpush.bf16.msra.mxu0 %v3476
    %3494 = vmatmul.bf16.gmra.mxu0 %v2695
    %v3495 = vpop.f32.mrf.mxu0
    %v3496 = vadd.f32 0.0, %v3495
    %v3497 = vpop.f32.mrf.mxu0
    %v3498 = vadd.f32 0.0, %v3497
    %3499 = vmatmul.bf16.gmra.mxu0 %v2698
    %v3500 = vpop.f32.mrf.mxu0
    %v3501 = vadd.f32 0.0, %v3500
    %v3502 = vpop.f32.mrf.mxu0
    %v3503 = vadd.f32 0.0, %v3502
    %3504 = vmatmul.bf16.gmra.mxu0 %v2701
    %v3505 = vpop.f32.mrf.mxu0
    %v3506 = vadd.f32 0.0, %v3505
    %v3507 = vpop.f32.mrf.mxu0
    %v3508 = vadd.f32 0.0, %v3507
    %3509 = vmatmul.bf16.gmra.mxu0 %v3481
    %v3510 = vpop.f32.mrf.mxu0
    %v3511 = vadd.f32 0.0, %v3510
    %v3512 = vpop.f32.mrf.mxu0
    %v3513 = vadd.f32 0.0, %v3512
    %3514 = vmatmul.bf16.gmra.mxu0 %v2707
    %v3515 = vpop.f32.mrf.mxu0
    %v3516 = vadd.f32 0.0, %v3515
    %v3517 = vpop.f32.mrf.mxu0
    %v3518 = vadd.f32 0.0, %v3517
    %3519 = vmatmul.bf16.gmra.mxu0 %v2710
    %v3520 = vpop.f32.mrf.mxu0
    %v3521 = vadd.f32 0.0, %v3520
    %v3522 = vpop.f32.mrf.mxu0
    %v3523 = vadd.f32 0.0, %v3522
    %3524 = vmatmul.bf16.gmra.mxu0 %v2713
    %v3525 = vpop.f32.mrf.mxu0
    %v3526 = vadd.f32 0.0, %v3525
    %v3527 = vpop.f32.mrf.mxu0
    %v3528 = vadd.f32 0.0, %v3527
    %3529 = vmatmul.bf16.gmra.mxu0 %v3484
    %v3530 = vpop.f32.mrf.mxu0
    %v3531 = vadd.f32 0.0, %v3530
    %v3532 = vpop.f32.mrf.mxu0
    %v3533 = vadd.f32 0.0, %v3532
    %3534 = vdwg.mxu0
    %v3535 = vadd.f32 %v3438, %v3496
    %v3536 = vadd.f32 %v3439, %v3498
    %v3537 = vadd.f32 %v3440, %v3501
    %v3538 = vadd.f32 %v3441, %v3503
    %v3539 = vadd.f32 %v3442, %v3506
    %v3540 = vadd.f32 %v3443, %v3508
    %v3541 = vadd.f32 %v3444, %v3511
    %v3542 = vadd.f32 %v3445, %v3513
    %v3543 = vadd.f32 %v3446, %v3516
    %v3544 = vadd.f32 %v3447, %v3518
    %v3545 = vadd.f32 %v3448, %v3521
    %v3546 = vadd.f32 %v3449, %v3523
    %v3547 = vadd.f32 %v3450, %v3526
    %v3548 = vadd.f32 %v3451, %v3528
    %v3549 = vadd.f32 %v3452, %v3531
    %v3550 = vadd.f32 %v3453, %v3533
    %v3551 = vrot.slane %v2508, 2
    %v3552 = vrot.slane %v2509, 2
    %v3553 = vsel %vm363, %v3551, %v3552
    %v3554 = vrot.slane %v2528, 2
    %v3555 = vrot.slane %v2529, 2
    %v3556 = vsel %vm363, %v3554, %v3555
    %v3559 = vpack.c.bf16 %v3553, %v3254
    %v3560 = vpack.c.bf16 %v3556, %v3257
    %v3565 = vunpack.c.l.b16 %v2562
    %v3566 = vunpack.c.l.b16 %v2563
    %v3567 = vunpack.c.l.b16 %v2564
    %v3568 = vunpack.c.l.b16 %v2565
    %v3569 = vpack.c.b16 %v3566, %v3565
    %v3570 = vpack.c.b16 %v3568, %v3567
    %v3574 = vsel %vm538, %v3559, 0
    %v3577 = vsel %vm538, %v3560, 0
    %3579 = vmatpush.bf16.msra.mxu0 0
    %3580 = vmatpush.bf16.msra.mxu0 0
    %3581 = vmatpush.bf16.msra.mxu0 0
    %3582 = vmatpush.bf16.msra.mxu0 0
    %3583 = vmatpush.bf16.msra.mxu0 0
    %3584 = vmatpush.bf16.msra.mxu0 0
    %3585 = vmatpush.bf16.msra.mxu0 %v3570
    %3586 = vmatpush.bf16.msra.mxu0 %v3569
    %3587 = vmatmul.bf16.gmra.mxu0 %v2937
    %v3588 = vpop.f32.mrf.mxu0
    %v3589 = vadd.f32 0.0, %v3588
    %v3590 = vpop.f32.mrf.mxu0
    %v3591 = vadd.f32 0.0, %v3590
    %3592 = vmatmul.bf16.gmra.mxu0 %v2940
    %v3593 = vpop.f32.mrf.mxu0
    %v3594 = vadd.f32 0.0, %v3593
    %v3595 = vpop.f32.mrf.mxu0
    %v3596 = vadd.f32 0.0, %v3595
    %3597 = vmatmul.bf16.gmra.mxu0 %v2943
    %v3598 = vpop.f32.mrf.mxu0
    %v3599 = vadd.f32 0.0, %v3598
    %v3600 = vpop.f32.mrf.mxu0
    %v3601 = vadd.f32 0.0, %v3600
    %3602 = vmatmul.bf16.gmra.mxu0 %v3574
    %v3603 = vpop.f32.mrf.mxu0
    %v3604 = vadd.f32 0.0, %v3603
    %v3605 = vpop.f32.mrf.mxu0
    %v3606 = vadd.f32 0.0, %v3605
    %3607 = vmatmul.bf16.gmra.mxu0 %v2949
    %v3608 = vpop.f32.mrf.mxu0
    %v3609 = vadd.f32 0.0, %v3608
    %v3610 = vpop.f32.mrf.mxu0
    %v3611 = vadd.f32 0.0, %v3610
    %3612 = vmatmul.bf16.gmra.mxu0 %v2952
    %v3613 = vpop.f32.mrf.mxu0
    %v3614 = vadd.f32 0.0, %v3613
    %v3615 = vpop.f32.mrf.mxu0
    %v3616 = vadd.f32 0.0, %v3615
    %3617 = vmatmul.bf16.gmra.mxu0 %v2955
    %v3618 = vpop.f32.mrf.mxu0
    %v3619 = vadd.f32 0.0, %v3618
    %v3620 = vpop.f32.mrf.mxu0
    %v3621 = vadd.f32 0.0, %v3620
    %3622 = vmatmul.bf16.gmra.mxu0 %v3577
    %v3623 = vpop.f32.mrf.mxu0
    %v3624 = vadd.f32 0.0, %v3623
    %v3625 = vpop.f32.mrf.mxu0
    %v3626 = vadd.f32 0.0, %v3625
    %3627 = vdwg.mxu0
    %v3628 = vadd.f32 %v3535, %v3589
    %v3629 = vadd.f32 %v3536, %v3591
    %v3630 = vadd.f32 %v3537, %v3594
    %v3631 = vadd.f32 %v3538, %v3596
    %v3632 = vadd.f32 %v3539, %v3599
    %v3633 = vadd.f32 %v3540, %v3601
    %v3634 = vadd.f32 %v3541, %v3604
    %v3635 = vadd.f32 %v3542, %v3606
    %v3636 = vadd.f32 %v3543, %v3609
    %v3637 = vadd.f32 %v3544, %v3611
    %v3638 = vadd.f32 %v3545, %v3614
    %v3639 = vadd.f32 %v3546, %v3616
    %v3640 = vadd.f32 %v3547, %v3619
    %v3641 = vadd.f32 %v3548, %v3621
    %v3642 = vadd.f32 %v3549, %v3624
    %v3643 = vadd.f32 %v3550, %v3626
    %vm3644 = vcmask 523264
    %v3645 = vsel %vm3644, %v3628, 0.0
    %v3646 = vsel %vm3644, %v3629, 0.0
    %v3647 = vadd.f32 %v3645, %v3646
    %v3648 = vsel %vm3644, %v3630, 0.0
    %v3649 = vadd.f32 %v3647, %v3648
    %v3650 = vsel %vm3644, %v3631, 0.0
    %v3651 = vadd.f32 %v3649, %v3650
    %v3652 = vsel %vm3644, %v3632, 0.0
    %v3653 = vadd.f32 %v3651, %v3652
    %v3654 = vsel %vm3644, %v3633, 0.0
    %v3655 = vadd.f32 %v3653, %v3654
    %v3656 = vsel %vm3644, %v3634, 0.0
    %v3657 = vadd.f32 %v3655, %v3656
    %v3658 = vsel %vm3644, %v3635, 0.0
    %v3659 = vadd.f32 %v3657, %v3658
    %v3660 = vsel %vm3644, %v3636, 0.0
    %v3661 = vadd.f32 %v3659, %v3660
    %v3662 = vsel %vm3644, %v3637, 0.0
    %v3663 = vadd.f32 %v3661, %v3662
    %v3664 = vsel %vm3644, %v3638, 0.0
    %v3665 = vadd.f32 %v3663, %v3664
    %v3666 = vsel %vm3644, %v3639, 0.0
    %v3667 = vadd.f32 %v3665, %v3666
    %v3668 = vsel %vm3644, %v3640, 0.0
    %v3669 = vadd.f32 %v3667, %v3668
    %v3670 = vsel %vm3644, %v3641, 0.0
    %v3671 = vadd.f32 %v3669, %v3670
    %v3672 = vsel %vm3644, %v3642, 0.0
    %v3673 = vadd.f32 %v3671, %v3672
    %v3674 = vsel %vm3644, %v3643, 0.0
    %v3675 = vadd.f32 %v3673, %v3674
    %v3676 = vrot.slane %v3675, 4
    %v3677 = vadd.f32 %v3675, %v3676
    %v3678 = vrot.slane %v3677, 2
    %v3679 = vadd.f32 %v3677, %v3678
    %v3680 = vrot.slane %v3679, 1
    %v3681 = vadd.f32 %v3679, %v3680
    %v3682 = vmul.f32 %v3628, %v3628
    %v3683 = vmul.f32 %v3629, %v3629
    %v3684 = vmul.f32 %v3630, %v3630
    %v3685 = vmul.f32 %v3631, %v3631
    %v3686 = vmul.f32 %v3632, %v3632
    %v3687 = vmul.f32 %v3633, %v3633
    %v3688 = vmul.f32 %v3634, %v3634
    %v3689 = vmul.f32 %v3635, %v3635
    %v3690 = vmul.f32 %v3636, %v3636
    %v3691 = vmul.f32 %v3637, %v3637
    %v3692 = vmul.f32 %v3638, %v3638
    %v3693 = vmul.f32 %v3639, %v3639
    %v3694 = vmul.f32 %v3640, %v3640
    %v3695 = vmul.f32 %v3641, %v3641
    %v3696 = vmul.f32 %v3642, %v3642
    %v3697 = vmul.f32 %v3643, %v3643
    %v3698 = vsel %vm3644, %v3682, 0.0
    %v3699 = vsel %vm3644, %v3683, 0.0
    %v3700 = vadd.f32 %v3698, %v3699
    %v3701 = vsel %vm3644, %v3684, 0.0
    %v3702 = vadd.f32 %v3700, %v3701
    %v3703 = vsel %vm3644, %v3685, 0.0
    %v3704 = vadd.f32 %v3702, %v3703
    %v3705 = vsel %vm3644, %v3686, 0.0
    %v3706 = vadd.f32 %v3704, %v3705
    %v3707 = vsel %vm3644, %v3687, 0.0
    %v3708 = vadd.f32 %v3706, %v3707
    %v3709 = vsel %vm3644, %v3688, 0.0
    %v3710 = vadd.f32 %v3708, %v3709
    %v3711 = vsel %vm3644, %v3689, 0.0
    %v3712 = vadd.f32 %v3710, %v3711
    %v3713 = vsel %vm3644, %v3690, 0.0
    %v3714 = vadd.f32 %v3712, %v3713
    %v3715 = vsel %vm3644, %v3691, 0.0
    %v3716 = vadd.f32 %v3714, %v3715
    %v3717 = vsel %vm3644, %v3692, 0.0
    %v3718 = vadd.f32 %v3716, %v3717
    %v3719 = vsel %vm3644, %v3693, 0.0
    %v3720 = vadd.f32 %v3718, %v3719
    %v3721 = vsel %vm3644, %v3694, 0.0
    %v3722 = vadd.f32 %v3720, %v3721
    %v3723 = vsel %vm3644, %v3695, 0.0
    %v3724 = vadd.f32 %v3722, %v3723
    %v3725 = vsel %vm3644, %v3696, 0.0
    %v3726 = vadd.f32 %v3724, %v3725
    %v3727 = vsel %vm3644, %v3697, 0.0
    %v3728 = vadd.f32 %v3726, %v3727
    %v3729 = vrot.slane %v3728, 4
    %v3730 = vadd.f32 %v3728, %v3729
    %v3731 = vrot.slane %v3730, 2
    %v3732 = vadd.f32 %v3730, %v3731
    %v3733 = vrot.slane %v3732, 1
    %v3734 = vadd.f32 %v3732, %v3733
    %v3735 = vmul.f32 %v3681, 0.0078125
    %v3736 = vmul.f32 %v3734, 0.0078125
    %v3737 = vmul.f32 %v3735, %v3735
    %v3738 = vsub.f32 %v3736, %v3737
    %v3739 = vadd.f32 %v3738, 1e-05
    %v3740 = vrsqrt.pop %v3739
    %v3741 = vmul.f32 %v3740, %v3739
    %v3742 = vmul.f32 %v3741, %v3740
    %v3743 = vmul.f32 0.5, %v3742
    %v3744 = vsub.f32 1.5, %v3743
    %v3745 = vmul.f32 %v3740, %v3744
    %vm3746 = vweird.f32 %v3739
    %vm3747 = vweird.f32 %v3740
    %vm3748 = vmor %vm3746, %vm3747
    %v3749 = vsel %vm3748, %v3740, %v3745
    %v3750 = vmul.f32 %v25, %v3749
    %v3751 = vsub.f32 %v3628, %v3735
    %v3752 = vsub.f32 %v3629, %v3735
    %v3753 = vsub.f32 %v3630, %v3735
    %v3754 = vsub.f32 %v3631, %v3735
    %v3755 = vsub.f32 %v3632, %v3735
    %v3756 = vsub.f32 %v3633, %v3735
    %v3757 = vsub.f32 %v3634, %v3735
    %v3758 = vsub.f32 %v3635, %v3735
    %v3759 = vsub.f32 %v3636, %v3735
    %v3760 = vsub.f32 %v3637, %v3735
    %v3761 = vsub.f32 %v3638, %v3735
    %v3762 = vsub.f32 %v3639, %v3735
    %v3763 = vsub.f32 %v3640, %v3735
    %v3764 = vsub.f32 %v3641, %v3735
    %v3765 = vsub.f32 %v3642, %v3735
    %v3766 = vsub.f32 %v3643, %v3735
    %v3767 = vperm.slane %v3750, 2
    %v3768 = vmul.f32 %v3751, %v3767
    %v3769 = vmul.f32 %v3752, %v3767
    %v3770 = vmul.f32 %v3753, %v3767
    %v3771 = vmul.f32 %v3754, %v3767
    %v3772 = vmul.f32 %v3755, %v3767
    %v3773 = vmul.f32 %v3756, %v3767
    %v3774 = vmul.f32 %v3757, %v3767
    %v3775 = vmul.f32 %v3758, %v3767
    %v3776 = vmul.f32 %v3759, %v3767
    %v3777 = vmul.f32 %v3760, %v3767
    %v3778 = vmul.f32 %v3761, %v3767
    %v3779 = vmul.f32 %v3762, %v3767
    %v3780 = vmul.f32 %v3763, %v3767
    %v3781 = vmul.f32 %v3764, %v3767
    %v3782 = vmul.f32 %v3765, %v3767
    %v3783 = vmul.f32 %v3766, %v3767
    %v3784 = vperm.slane %v25, 3
    %v3785 = vadd.f32 %v3768, %v3784
    %v3786 = vadd.f32 %v3769, %v3784
    %v3787 = vadd.f32 %v3770, %v3784
    %v3788 = vadd.f32 %v3771, %v3784
    %v3789 = vadd.f32 %v3772, %v3784
    %v3790 = vadd.f32 %v3773, %v3784
    %v3791 = vadd.f32 %v3774, %v3784
    %v3792 = vadd.f32 %v3775, %v3784
    %v3793 = vadd.f32 %v3776, %v3784
    %v3794 = vadd.f32 %v3777, %v3784
    %v3795 = vadd.f32 %v3778, %v3784
    %v3796 = vadd.f32 %v3779, %v3784
    %v3797 = vadd.f32 %v3780, %v3784
    %v3798 = vadd.f32 %v3781, %v3784
    %v3799 = vadd.f32 %v3782, %v3784
    %v3800 = vadd.f32 %v3783, %v3784
    %v3801 = vmax.f32 %v3785, 0.0
    %v3802 = vmax.f32 %v3786, 0.0
    %v3803 = vmax.f32 %v3787, 0.0
    %v3804 = vmax.f32 %v3788, 0.0
    %v3805 = vmax.f32 %v3789, 0.0
    %v3806 = vmax.f32 %v3790, 0.0
    %v3807 = vmax.f32 %v3791, 0.0
    %v3808 = vmax.f32 %v3792, 0.0
    %v3809 = vmax.f32 %v3793, 0.0
    %v3810 = vmax.f32 %v3794, 0.0
    %v3811 = vmax.f32 %v3795, 0.0
    %v3812 = vmax.f32 %v3796, 0.0
    %v3813 = vmax.f32 %v3797, 0.0
    %v3814 = vmax.f32 %v3798, 0.0
    %v3815 = vmax.f32 %v3799, 0.0
    %v3816 = vmax.f32 %v3800, 0.0
    %v3817 = vsel %vm3644, %v3801, -inf
    %v3818 = vsel %vm3644, %v3802, -inf
    %v3819 = vsel %vm3644, %v3803, -inf
    %v3820 = vmax.f32 %v3817, %v3819
    %v3821 = vsel %vm3644, %v3804, -inf
    %v3822 = vmax.f32 %v3818, %v3821
    %v3823 = vsel %vm3644, %v3805, -inf
    %v3824 = vmax.f32 %v3820, %v3823
    %v3825 = vsel %vm3644, %v3806, -inf
    %v3826 = vmax.f32 %v3822, %v3825
    %v3827 = vsel %vm3644, %v3807, -inf
    %v3828 = vmax.f32 %v3824, %v3827
    %v3829 = vsel %vm3644, %v3808, -inf
    %v3830 = vmax.f32 %v3826, %v3829
    %v3831 = vmax.f32 %v3828, %v3830
    %v3832 = vrot.slane %v3831, 4
    %v3833 = vmax.f32 %v3831, %v3832
    %v3834 = vrot.slane %v3833, 2
    %v3835 = vmax.f32 %v3833, %v3834
    %v3836 = vrot.slane %v3835, 1
    %v3837 = vmax.f32 %v3835, %v3836
    %v3838 = vsel %vm3644, %v3809, -inf
    %v3839 = vsel %vm3644, %v3810, -inf
    %v3840 = vsel %vm3644, %v3811, -inf
    %v3841 = vmax.f32 %v3838, %v3840
    %v3842 = vsel %vm3644, %v3812, -inf
    %v3843 = vmax.f32 %v3839, %v3842
    %v3844 = vsel %vm3644, %v3813, -inf
    %v3845 = vmax.f32 %v3841, %v3844
    %v3846 = vsel %vm3644, %v3814, -inf
    %v3847 = vmax.f32 %v3843, %v3846
    %v3848 = vsel %vm3644, %v3815, -inf
    %v3849 = vmax.f32 %v3845, %v3848
    %v3850 = vsel %vm3644, %v3816, -inf
    %v3851 = vmax.f32 %v3847, %v3850
    %v3852 = vmax.f32 %v3849, %v3851
    %v3853 = vrot.slane %v3852, 4
    %v3854 = vmax.f32 %v3852, %v3853
    %v3855 = vrot.slane %v3854, 2
    %v3856 = vmax.f32 %v3854, %v3855
    %v3857 = vrot.slane %v3856, 1
    %v3858 = vmax.f32 %v3856, %v3857
    %v3859 = vpack.c.bf16 %v3837, %v3837
    %v3860 = vpack.c.bf16 %v3858, %v3858
    %v3861 = vld [vmem:[%s3] sm:$0xf]
    %v3862 = vld [vmem:[%s3 + $0x4] sm:$0xf]
    %v3863 = vld [vmem:[%s3 + $0x8] sm:$0xf]
    %v3864 = vld [vmem:[%s3 + $0xc] sm:$0xf]
    %v3865 = vld [vmem:[%s3 + $0x10] sm:$0xf]
    %v3866 = vld [vmem:[%s3 + $0x14] sm:$0xf]
    %v3867 = vld [vmem:[%s3 + $0x18] sm:$0xf]
    %v3868 = vld [vmem:[%s3 + $0x1c] sm:$0xf]
    %v3869 = vperm.slane %v25, 4
    %v3872 = vunpack.c.l.b16 %v3859
    %v3873 = vunpack.c.l.b16 %v3860
    %v3874 = vsel %vm2339, %v3873, %v3872
    %v3875 = vpack.c.b16 %v3874, %v3874
    %v3884 = vunpack.c.l.b16 %v3861
    %v3885 = vunpack.c.l.b16 %v3862
    %v3886 = vunpack.c.l.b16 %v3863
    %v3887 = vunpack.c.l.b16 %v3864
    %v3888 = vunpack.c.l.b16 %v3865
    %v3889 = vunpack.c.l.b16 %v3866
    %v3890 = vunpack.c.l.b16 %v3867
    %v3891 = vunpack.c.l.b16 %v3868
    %v3892 = vpack.c.b16 %v3885, %v3884
    %v3893 = vpack.c.b16 %v3887, %v3886
    %v3894 = vpack.c.b16 %v3889, %v3888
    %v3895 = vpack.c.b16 %v3891, %v3890
    %v3901 = vsel %vm3644, %v3875, 0
    %3903 = vmatpush.bf16.msra.mxu0 0
    %3904 = vmatpush.bf16.msra.mxu0 0
    %3905 = vmatpush.bf16.msra.mxu0 0
    %3906 = vmatpush.bf16.msra.mxu0 0
    %3907 = vmatpush.bf16.msra.mxu0 %v3895
    %3908 = vmatpush.bf16.msra.mxu0 %v3894
    %3909 = vmatpush.bf16.msra.mxu0 %v3893
    %3910 = vmatpush.bf16.msra.mxu0 %v3892
    %3911 = vmatmul.bf16.gmra.mxu0 %v3901
    %v3912 = vpop.f32.mrf.mxu0
    %v3913 = vadd.f32 %v3869, %v3912
    %v3914 = vpop.f32.mrf.mxu0
    %3915 = vdwg.mxu0
    %v3916 = vmax.f32 %v3913, 0.0
    %v3917 = vpack.c.bf16 %v3916, %v3916
    %v3918 = vld [vmem:[%s4] sm:$0xf]
    %v3919 = vld [vmem:[%s4 + $0x4] sm:$0xf]
    %v3920 = vld [vmem:[%s4 + $0x8] sm:$0xf]
    %v3921 = vld [vmem:[%s4 + $0xc] sm:$0xf]
    %v3922 = vperm.slane %v25, 5
    %v3927 = vunpack.c.l.b16 %v3918
    %v3928 = vunpack.c.l.b16 %v3919
    %v3929 = vunpack.c.l.b16 %v3920
    %v3930 = vunpack.c.l.b16 %v3921
    %v3931 = vpack.c.b16 %v3928, %v3927
    %v3932 = vpack.c.b16 %v3930, %v3929
    %v3936 = vsel %vm538, %v3917, 0
    %3938 = vmatpush.bf16.msra.mxu0 0
    %3939 = vmatpush.bf16.msra.mxu0 0
    %3940 = vmatpush.bf16.msra.mxu0 0
    %3941 = vmatpush.bf16.msra.mxu0 0
    %3942 = vmatpush.bf16.msra.mxu0 0
    %3943 = vmatpush.bf16.msra.mxu0 0
    %3944 = vmatpush.bf16.msra.mxu0 %v3932
    %3945 = vmatpush.bf16.msra.mxu0 %v3931
    %3946 = vmatmul.bf16.gmra.mxu0 %v3936
    %v3947 = vpop.f32.mrf.mxu0
    %v3948 = vadd.f32 %v3922, %v3947
    %v3949 = vpop.f32.mrf.mxu0
    %3950 = vdwg.mxu0
    %vm3951 = vcmask 17408
    %3952 = vst.msk [vmem:[#allocation3] sm:$0x3] %vm3951, %v3948
    // Predicated region
    $region26: #{tpu_custom_call.1} parent=1 // pred_check
      _
    $region27: #{tpu_custom_call.1} parent=1 // pred_check_branch
      %3954 = sbr.rel (0) target = $region29
    $region28: #{tpu_custom_call.1} parent=1 // pred_region
      %3956 = vsyncadd [#allocation4], 0
      %s3958 = sshll.u32 [#allocation3], 4
      %s3959 = int_to_ptr.vmem [resolvable:$true] %s3958
      %s3960 = sshll.u32 %s6, 4
      %s3961 = int_to_ptr.hbm [resolvable:$true] %s3960
      %3963 = dma.vmem_to_hbm [thread:$0]  %s3959, 32, %s3961, [#allocation4]
    $region29: #{tpu_custom_call.1} parent=1 // pred_fallthru
      _
    // Predicated region
    $region30: #{tpu_custom_call.1} parent=1 // pred_check
      _
    $region31: #{tpu_custom_call.1} parent=1 // pred_check_branch
      %3965 = sbr.rel (0) target = $region33
    $region32: #{tpu_custom_call.1} parent=1 // pred_region
      %3967 = dma.done [#allocation4], 32
    $region33: #{tpu_custom_call.1} parent=1 // pred_fallthru
      _
    %3968 = vsyncpa [#allocation4], 1

</llo_original>
